<compile_context>
chip_gen: v7x
topology: tpu7x:2x2x1
jax: 0.10.0
libtpu: 0.0.40
codegen_flags: <defaults>
</compile_context>

<pallas_src>
from functools import partial

import jax
import jax.numpy as jnp
from jax.experimental import pallas as pl
from jax.experimental.pallas import tpu as pltpu


def _round_up(n, m):
    return ((n + m - 1) // m) * m


def _sigmoid(z):
    # sigmoid(z) == 0.5*tanh(0.5*z) + 0.5 : a single EUP op (tanh) plus cheap
    # VPU mul/add instead of exp + full-precision divide.
    half = jnp.asarray(0.5, z.dtype)
    return half * jnp.tanh(half * z) + half


def _default_act_dtype():
    # v6e / v7x have a bf16 VPU/EUP path: bf16 hidden sigmoids ~double EUP
    # throughput and remove the explicit f32->bf16 cast before the W2 matmul.
    # v5e (and older) have no bf16 EUP, keep the hidden activations in f32.
    try:
        kind = jax.devices()[0].device_kind.lower()
    except Exception:
        return jnp.float32
    return jnp.bfloat16 if ("v6" in kind or "v7" in kind) else jnp.float32


def mlp_kernel(x_ref, w1_ref, b1_ref, w2_ref, b2_ref, w3_ref, b3_ref, o_ref,
               *, act_dtype):
    # x_ref : (BM, F)   f32   natural layout; transpose/cast folded in-kernel
    # w1_ref: (H1, F)   bf16  b1_ref: (H1, 1) f32
    # w2_ref: (H2, H1)  bf16  b2_ref: (H2, 1) f32
    # w3_ref: (H2, 1)   f32   b3_ref: (1,)    f32 (SMEM scalar)
    # o_ref : (1, BM)   f32   batch on the lane axis -> lane-dense store
    xb = x_ref[...].astype(jnp.bfloat16)                              # (BM, F)

    # Layer 1: contract the F axes (RHS-transposed matmul) so the result is
    # (H1, BM) and the batch stays on lanes for the rest of the kernel.
    z1 = jax.lax.dot_general(w1_ref[...], xb, (((1,), (1,)), ((), ())),
                             preferred_element_type=jnp.float32)      # (H1, BM)
    h1 = _sigmoid((z1 + b1_ref[...]).astype(act_dtype)).astype(jnp.bfloat16)

    # Layer 2: standard (M, K) x (K, N) MXU pass with resident W2.
    z2 = jnp.dot(w2_ref[...], h1, preferred_element_type=jnp.float32)  # (H2, BM)
    h2 = _sigmoid((z2 + b2_ref[...]).astype(act_dtype))

    # Layer 3 (H2 -> 1): VPU multiply + sublane (XLU) reduction; avoids an MXU
    # pass whose result would have a single useful row.  f32 via promotion.
    y = jnp.sum(h2 * w3_ref[...], axis=0, keepdims=True)               # (1, BM)
    o_ref[...] = _sigmoid(y + b3_ref[0])


def mlp_forward(x, padded_params, *, block_b=512, act_dtype=None):
    """x: (B, input_layers) f32 -> (B, 1) f32."""
    w1t, b1c, w2t, b2c, w3c, b3s = padded_params
    if act_dtype is None:
        act_dtype = _default_act_dtype()
    B, F = x.shape
    H1, H2 = w1t.shape[0], w2t.shape[0]
    assert w1t.shape[1] == F and w2t.shape[1] == H1

    # Batch tile: lane-multiple, clamped so tiny batches don't over-tile but
    # larger batches amortize the ~0.35us/step overhead.  Sweep for prod.
    block_b = max(128, min(block_b, _round_up(B, 128)))
    assert block_b % 128 == 0
    n_tiles = pl.cdiv(B, block_b)
    Bp = n_tiles * block_b
    if Bp != B:
        x = jnp.pad(x, ((0, Bp - B), (0, 0)))   # cheap batch-only zero pad

    out = pl.pallas_call(
        partial(mlp_kernel, act_dtype=act_dtype),
        out_shape=jax.ShapeDtypeStruct((1, Bp), jnp.float32),
        grid_spec=pltpu.PrefetchScalarGridSpec(
            num_scalar_prefetch=0,
            grid=(n_tiles,),
            in_specs=[
                # x tile is auto-pipelined; all weights/biases use a constant
                # index_map and stay resident in VMEM (fetched once).
                pl.BlockSpec((block_b, F), lambda i: (i, 0)),
                pl.BlockSpec((H1, F), lambda i: (0, 0)),
                pl.BlockSpec((H1, 1), lambda i: (0, 0)),
                pl.BlockSpec((H2, H1), lambda i: (0, 0)),
                pl.BlockSpec((H2, 1), lambda i: (0, 0)),
                pl.BlockSpec((H2, 1), lambda i: (0, 0)),
                pl.BlockSpec(memory_space=pltpu.MemorySpace.SMEM),  # scalar b3
            ],
            out_specs=pl.BlockSpec((1, block_b), lambda i: (0, i)),
        ),
        compiler_params=pltpu.CompilerParams(
            dimension_semantics=("parallel",)),
    )(x, w1t, b1c, w2t, b2c, w3c, b3s)
    return out[:, :B].T   # (B, 1)


def init_params(key, input_layers, hidden_layers, mid_layers, output_size):
    """PyTorch nn.Linear default init: U[-1/sqrt(fan_in), 1/sqrt(fan_in)]."""
    ks = jax.random.split(key, 6)

    def lin(kw, kb, fan_in, fan_out):
        bound = 1.0 / jnp.sqrt(fan_in)
        w = jax.random.uniform(kw, (fan_in, fan_out), jnp.float32, -bound, bound)
        b = jax.random.uniform(kb, (1, fan_out), jnp.float32, -bound, bound)
        return w, b

    w1, b1 = lin(ks[0], ks[1], input_layers, hidden_layers)
    w2, b2 = lin(ks[2], ks[3], hidden_layers, mid_layers)
    w3, b3 = lin(ks[4], ks[5], mid_layers, output_size)
    return (w1, b1, w2, b2, w3, b3)


def prepare_params(params):
    """Transpose, zero-pad hidden dims to 16-multiples, bf16-cast MXU operands."""
    w1, b1, w2, b2, w3, b3 = params
    in_f, h1 = w1.shape
    h2 = w2.shape[1]
    H1 = _round_up(h1, 16)     # 400 -> 400 (bf16 sublane packing)
    H2 = _round_up(h2, 16)     # 300 -> 304

    w1t = jnp.zeros((H1, in_f), jnp.float32).at[:h1, :].set(w1.T)
    w2t = jnp.zeros((H2, H1), jnp.float32).at[:h2, :h1].set(w2.T)
    w3c = jnp.zeros((H2, 1), jnp.float32).at[:h2, :].set(w3)
    b1c = jnp.zeros((H1, 1), jnp.float32).at[:h1, 0].set(b1[0])
    b2c = jnp.zeros((H2, 1), jnp.float32).at[:h2, 0].set(b2[0])
    b3s = b3.reshape(-1)       # (1,) scalar bias -> SMEM
    # Padded H2 rows have zero W2 rows / zero b2 -> activation sigmoid(0)=0.5,
    # but their w3 entries are zero, so nothing leaks into the output.
    return (w1t.astype(jnp.bfloat16), b1c,
            w2t.astype(jnp.bfloat16), b2c, w3c, b3s)


if __name__ == "__main__":
    # Module constants: attribute = 3, time_length = count (undefined upstream);
    # pick time_length = 8 -> input_layers = 24.
    attribute = 3
    time_length = 8
    input_layers = attribute * time_length    # 24
    hidden_layers = 400
    mid_layers = 300
    output_size = 1
    batch = 300   # 2 batch tiles at block_b=256, exercises tail padding too

    key = jax.random.PRNGKey(0)
    kx, kp = jax.random.split(key)
    x = jax.random.normal(kx, (batch, input_layers), jnp.float32)
    params = init_params(kp, input_layers, hidden_layers, mid_layers, output_size)
    padded = prepare_params(params)
    act_dtype = _default_act_dtype()

    fwd = jax.jit(partial(mlp_forward, block_b=256, act_dtype=act_dtype))
    out = fwd(x, padded)
    jax.block_until_ready(out)
    assert out.shape == (batch, output_size)

    # Reference mirroring the kernel's quantization (bf16 MXU operands,
    # act_dtype hidden sigmoids, tanh-form sigmoid).
    w1, b1, w2, b2, w3, b3 = params
    s = lambda z: 0.5 * jnp.tanh(0.5 * z) + 0.5
    xb = x.astype(jnp.bfloat16)
    z1 = jnp.dot(xb, w1.astype(jnp.bfloat16),
                 preferred_element_type=jnp.float32) + b1
    h1 = s(z1.astype(act_dtype)).astype(jnp.bfloat16)
    z2 = jnp.dot(h1, w2.astype(jnp.bfloat16),
                 preferred_element_type=jnp.float32) + b2
    h2 = s(z2.astype(act_dtype)).astype(jnp.float32)
    ref_q = s(h2 @ w3 + b3)
    assert jnp.allclose(out, ref_q, atol=1e-2, rtol=0.0), \
        float(jnp.max(jnp.abs(out - ref_q)))

    # Sanity vs. the exact f32 module (only bf16 quantization error remains).
    h32 = jax.nn.sigmoid(x @ w1 + b1)
    h32 = jax.nn.sigmoid(h32 @ w2 + b2)
    ref32 = jax.nn.sigmoid(h32 @ w3 + b3)
    assert jnp.allclose(out, ref32, atol=3e-2, rtol=0.0), \
        float(jnp.max(jnp.abs(out - ref32)))

    print("KERNEL_OK")
</pallas_src>

<mosaic_0001>
module attributes {stable_mosaic.version = 11 : i64} {
  func.func @mlp_kernel(%arg0: i32, %arg1: memref<256x24xf32, #tpu.memory_space<vmem>>, %arg2: memref<400x24xbf16, #tpu.memory_space<vmem>>, %arg3: memref<400x1xf32, #tpu.memory_space<vmem>>, %arg4: memref<304x400xbf16, #tpu.memory_space<vmem>>, %arg5: memref<304x1xf32, #tpu.memory_space<vmem>>, %arg6: memref<304x1xf32, #tpu.memory_space<vmem>>, %arg7: memref<1xf32, #tpu.memory_space<smem>>, %arg8: memref<1x256xf32, #tpu.memory_space<vmem>>) attributes {dimension_semantics = [#tpu.dimension_semantics<parallel>], iteration_bounds = array<i64: 2>, scalar_prefetch = 0 : i64, scratch_operands = 0 : i64, tpu.core_type = #tpu.core_type<tc>, window_params = [{transform_indices = @transform_0, window_bounds = array<i64: 256, 24>}, {pipeline_mode = #tpu.pipeline_mode<synchronous>, transform_indices = @transform_1, window_bounds = array<i64: 400, 24>}, {pipeline_mode = #tpu.pipeline_mode<synchronous>, transform_indices = @transform_2, window_bounds = array<i64: 400, 1>}, {pipeline_mode = #tpu.pipeline_mode<synchronous>, transform_indices = @transform_3, window_bounds = array<i64: 304, 400>}, {pipeline_mode = #tpu.pipeline_mode<synchronous>, transform_indices = @transform_4, window_bounds = array<i64: 304, 1>}, {pipeline_mode = #tpu.pipeline_mode<synchronous>, transform_indices = @transform_5, window_bounds = array<i64: 304, 1>}, {transform_indices = @transform_6, window_bounds = array<i64: 1>}, {transform_indices = @transform_7, window_bounds = array<i64: 1, 256>}]} {
    %c0 = arith.constant 0 : index
    %c0_0 = arith.constant 0 : index
    %0 = vector.load %arg1[%c0, %c0_0] : memref<256x24xf32, #tpu.memory_space<vmem>>, vector<256x24xf32>
    %1 = arith.truncf %0 : vector<256x24xf32> to vector<256x24xbf16>
    %c0_1 = arith.constant 0 : index
    %c0_2 = arith.constant 0 : index
    %2 = vector.load %arg2[%c0_1, %c0_2] : memref<400x24xbf16, #tpu.memory_space<vmem>>, vector<400x24xbf16>
    %cst = arith.constant dense<0.000000e+00> : vector<400x256xf32>
    %3 = tpu.matmul %2, %1, %cst {dimension_numbers = #tpu.dot_dimension_numbers<[1], [1], [0], [0], [0, 0, 1, 0], [], []>} : vector<400x24xbf16>, vector<256x24xbf16>, vector<400x256xf32> -> vector<400x256xf32>
    %c0_3 = arith.constant 0 : index
    %c0_4 = arith.constant 0 : index
    %4 = vector.load %arg3[%c0_3, %c0_4] : memref<400x1xf32, #tpu.memory_space<vmem>>, vector<400x1xf32>
    %5 = vector.broadcast %4 : vector<400x1xf32> to vector<400x256xf32>
    %6 = arith.addf %3, %5 : vector<400x256xf32>
    %cst_5 = arith.constant 5.000000e-01 : f32
    %7 = vector.broadcast %cst_5 : f32 to vector<400x256xf32>
    %8 = arith.mulf %7, %6 : vector<400x256xf32>
    %9 = math.tanh %8 : vector<400x256xf32>
    %cst_6 = arith.constant 5.000000e-01 : f32
    %10 = vector.broadcast %cst_6 : f32 to vector<400x256xf32>
    %11 = arith.mulf %10, %9 : vector<400x256xf32>
    %cst_7 = arith.constant 5.000000e-01 : f32
    %12 = vector.broadcast %cst_7 : f32 to vector<400x256xf32>
    %13 = arith.addf %11, %12 : vector<400x256xf32>
    %14 = arith.truncf %13 : vector<400x256xf32> to vector<400x256xbf16>
    %c0_8 = arith.constant 0 : index
    %c0_9 = arith.constant 0 : index
    %15 = vector.load %arg4[%c0_8, %c0_9] : memref<304x400xbf16, #tpu.memory_space<vmem>>, vector<304x400xbf16>
    %cst_10 = arith.constant dense<0.000000e+00> : vector<304x256xf32>
    %16 = tpu.matmul %15, %14, %cst_10 {dimension_numbers = #tpu.dot_dimension_numbers<[1], [0], [0], [1], [0, 0, 1, 1], [], []>} : vector<304x400xbf16>, vector<400x256xbf16>, vector<304x256xf32> -> vector<304x256xf32>
    %c0_11 = arith.constant 0 : index
    %c0_12 = arith.constant 0 : index
    %17 = vector.load %arg5[%c0_11, %c0_12] : memref<304x1xf32, #tpu.memory_space<vmem>>, vector<304x1xf32>
    %18 = vector.broadcast %17 : vector<304x1xf32> to vector<304x256xf32>
    %19 = arith.addf %16, %18 : vector<304x256xf32>
    %cst_13 = arith.constant 5.000000e-01 : f32
    %20 = vector.broadcast %cst_13 : f32 to vector<304x256xf32>
    %21 = arith.mulf %20, %19 : vector<304x256xf32>
    %22 = math.tanh %21 : vector<304x256xf32>
    %cst_14 = arith.constant 5.000000e-01 : f32
    %23 = vector.broadcast %cst_14 : f32 to vector<304x256xf32>
    %24 = arith.mulf %23, %22 : vector<304x256xf32>
    %cst_15 = arith.constant 5.000000e-01 : f32
    %25 = vector.broadcast %cst_15 : f32 to vector<304x256xf32>
    %26 = arith.addf %24, %25 : vector<304x256xf32>
    %c0_16 = arith.constant 0 : index
    %c0_17 = arith.constant 0 : index
    %27 = vector.load %arg6[%c0_16, %c0_17] : memref<304x1xf32, #tpu.memory_space<vmem>>, vector<304x1xf32>
    %28 = vector.broadcast %27 : vector<304x1xf32> to vector<304x256xf32>
    %29 = arith.mulf %26, %28 : vector<304x256xf32>
    %cst_18 = arith.constant dense<0.000000e+00> : vector<256xf32>
    %30 = vector.multi_reduction <add>, %29, %cst_18 [0] : vector<304x256xf32> to vector<256xf32>
    %31 = vector.shape_cast %30 : vector<256xf32> to vector<1x256xf32>
    %c0_19 = arith.constant 0 : index
    %32 = memref.load %arg7[%c0_19] : memref<1xf32, #tpu.memory_space<smem>>
    %33 = vector.broadcast %32 : f32 to vector<1x256xf32>
    %34 = arith.addf %31, %33 : vector<1x256xf32>
    %cst_20 = arith.constant 5.000000e-01 : f32
    %35 = vector.broadcast %cst_20 : f32 to vector<1x256xf32>
    %36 = arith.mulf %35, %34 : vector<1x256xf32>
    %37 = math.tanh %36 : vector<1x256xf32>
    %cst_21 = arith.constant 5.000000e-01 : f32
    %38 = vector.broadcast %cst_21 : f32 to vector<1x256xf32>
    %39 = arith.mulf %38, %37 : vector<1x256xf32>
    %cst_22 = arith.constant 5.000000e-01 : f32
    %40 = vector.broadcast %cst_22 : f32 to vector<1x256xf32>
    %41 = arith.addf %39, %40 : vector<1x256xf32>
    %c0_23 = arith.constant 0 : index
    %c0_24 = arith.constant 0 : index
    %42 = vector.load %arg8[%c0_23, %c0_24] : memref<1x256xf32, #tpu.memory_space<vmem>>, vector<1x256xf32>
    tpu.vector_store %arg8[%c0_23, %c0_24], %41 {strides = array<i32>} : memref<1x256xf32, #tpu.memory_space<vmem>>, vector<1x256xf32>,
    return
  }
  func.func @transform_0(%arg0: i32) -> (i32, i32) {
    %c0_i32 = arith.constant 0 : i32
    %c0_i32_0 = arith.constant 0 : i32
    return %arg0, %c0_i32 : i32, i32
  }
  func.func @transform_1(%arg0: i32) -> (i32, i32) {
    %c0_i32 = arith.constant 0 : i32
    %c0_i32_0 = arith.constant 0 : i32
    %c0_i32_1 = arith.constant 0 : i32
    return %c0_i32, %c0_i32_0 : i32, i32
  }
  func.func @transform_2(%arg0: i32) -> (i32, i32) {
    %c0_i32 = arith.constant 0 : i32
    %c0_i32_0 = arith.constant 0 : i32
    %c0_i32_1 = arith.constant 0 : i32
    return %c0_i32, %c0_i32_0 : i32, i32
  }
  func.func @transform_3(%arg0: i32) -> (i32, i32) {
    %c0_i32 = arith.constant 0 : i32
    %c0_i32_0 = arith.constant 0 : i32
    %c0_i32_1 = arith.constant 0 : i32
    return %c0_i32, %c0_i32_0 : i32, i32
  }
  func.func @transform_4(%arg0: i32) -> (i32, i32) {
    %c0_i32 = arith.constant 0 : i32
    %c0_i32_0 = arith.constant 0 : i32
    %c0_i32_1 = arith.constant 0 : i32
    return %c0_i32, %c0_i32_0 : i32, i32
  }
  func.func @transform_5(%arg0: i32) -> (i32, i32) {
    %c0_i32 = arith.constant 0 : i32
    %c0_i32_0 = arith.constant 0 : i32
    %c0_i32_1 = arith.constant 0 : i32
    return %c0_i32, %c0_i32_0 : i32, i32
  }
  func.func @transform_6(%arg0: i32) -> i32 {
    %c0_i32 = arith.constant 0 : i32
    %c0_i32_0 = arith.constant 0 : i32
    return %c0_i32 : i32
  }
  func.func @transform_7(%arg0: i32) -> (i32, i32) {
    %c0_i32 = arith.constant 0 : i32
    %c0_i32_0 = arith.constant 0 : i32
    return %c0_i32, %arg0 : i32, i32
  }
}

</mosaic_0001>

<llo_original>
// kernel: mlp_forward.1
$region0: #{mlp_forward.1}
  #allocation0 [shape = 'u32[]', space=smem, size = 0x4, offset = 0x4, fixed_abs, tag = 'smem constant byte address 0x4 - core index']
  #allocation1 [shape = 'u32[144,128]{1,0:T(1,128)}', space=vmem, size = 0x12000, scoped, tag = 'internal scratch']
  #allocation2 [shape = 'f32[1]{0:T(128)S(6)}', space=smem, size = 0x200, scoped, tag = 'scoped memory for mlp_forward.1']
  %s0 = inlined_call_operand.vmem [shape: f32[512,24], index: 0, kind: input, shape index: {}]
  %s1 = inlined_call_operand.vmem [shape: bf16[400,24], index: 1, kind: input, shape index: {}]
  %s2 = inlined_call_operand.vmem [shape: f32[400,1], index: 2, kind: input, shape index: {}]
  %s3 = inlined_call_operand.vmem [shape: bf16[304,400], index: 3, kind: input, shape index: {}]
  %s4 = inlined_call_operand.vmem [shape: f32[304,1], index: 4, kind: input, shape index: {}]
  %s5 = inlined_call_operand.vmem [shape: f32[304,1], index: 5, kind: input, shape index: {}]
  %s6 = inlined_call_operand.<no memory space> [shape: f32[1], index: 6, kind: input, shape index: {}]
  %s7 = inlined_call_operand.vmem [shape: f32[1,512], index: 7, kind: output, shape index: {}]
  %s8 = sld [smem:[#allocation0]]
  $region61: #{mlp_forward.1} parent=0
    _
  %s10 = ssub.s32 1, %s8
  %s11 = scalar_select 0, %s10, %s8
  %12 = sst [smem:[#allocation2]] %s6
  loop: start=0, step=1, limit=4
  $region2: #{mlp_forward.1} parent=0 // loop_pre_header
    _
  $region3: #{mlp_forward.1} parent=0 // loop_header
    %s14 = sphi 0, %s18
    %p15 = scmp.ge.s32.totalorder %s14, 4
    %s24 = sphi 0, %s26
    %s27 = sphi 0, %s24
    %s28 = sphi 0, %s27
    %s44 = sphi 0, %s28
    %s48 = sphi 0, %s48
    %s50 = sphi 0, %s48
    %s51 = sphi 0, %s50
    %s65 = sphi 0, %s51
    %s69 = sphi 0, %s69
    %s71 = sphi 0, %s69
    %s72 = sphi 0, %s71
    %s86 = sphi 0, %s72
    %s90 = sphi 0, %s90
    %s92 = sphi 0, %s90
    %s93 = sphi 0, %s92
    %s107 = sphi 0, %s93
    %s111 = sphi 0, %s111
    %s113 = sphi 0, %s111
    %s114 = sphi 0, %s113
    %s128 = sphi 0, %s114
    %s132 = sphi 0, %s132
    %s134 = sphi 0, %s132
    %s135 = sphi 0, %s134
    %s149 = sphi 0, %s135
    %s153 = sphi 0, %s153
    %s155 = sphi 0, %s153
    %s156 = sphi 0, %s155
    %s170 = sphi 0, %s156
    %s176 = sphi 0, %s178
    %s179 = sphi 0, %s176
    %s180 = sphi 0, %s179
    %s196 = sphi 0, %s180
  $region4: #{mlp_forward.1} parent=0 // loop_header_branch
    %17 = sbr.rel (%p15) target = $region8
  $region5: #{mlp_forward.1} parent=0 // loop_body
    %s19 = ssub.s32 %s14, 1
    %s20 = ssub.s32 %s14, 2
    %s21 = sadd.s32 %s14, 1
    %s22 = ssub.s32 %s14, %s21
    %p23 = scmp.eq.s32.totalorder %s22, 0
    %s25 = sadd.s32 %s24, 1
    %s26 = scalar_select %p23, %s24, %s25
    %p29 = pneg %p23
    %p30 = scmp.eq.s32.totalorder %s14, 1
    %p31 = por %p29, %p30
    %p32 = scmp.ne.s32.totalorder %s24, %s27
    %p33 = scmp.eq.s32.totalorder %s14, 0
    %p34 = por %p32, %p33
    %p35 = scmp.ne.s32.totalorder %s24, %s27
    %p36 = scmp.eq.s32.totalorder %s19, 1
    %p37 = por %p35, %p36
    %p38 = scmp.ne.s32.totalorder %s27, %s28
    %p39 = scmp.eq.s32.totalorder %s19, 0
    %p40 = por %p38, %p39
    %p41 = scmp.ne.s32.totalorder %s27, %s28
    %p42 = scmp.eq.s32.totalorder %s20, 1
    %p43 = por %p41, %p42
    %p45 = scmp.ne.s32.totalorder %s28, %s44
    %p46 = scmp.eq.s32.totalorder %s20, 0
    %p47 = por %p45, %p46
    %s49 = sadd.s32 %s48, 1
    %p52 = scmp.eq.s32.totalorder %s14, 1
    %p53 = scmp.ne.s32.totalorder %s48, %s50
    %p54 = scmp.eq.s32.totalorder %s14, 0
    %p55 = por %p53, %p54
    %p56 = scmp.ne.s32.totalorder %s48, %s50
    %p57 = scmp.eq.s32.totalorder %s19, 1
    %p58 = por %p56, %p57
    %p59 = scmp.ne.s32.totalorder %s50, %s51
    %p60 = scmp.eq.s32.totalorder %s19, 0
    %p61 = por %p59, %p60
    %p62 = scmp.ne.s32.totalorder %s50, %s51
    %p63 = scmp.eq.s32.totalorder %s20, 1
    %p64 = por %p62, %p63
    %p66 = scmp.ne.s32.totalorder %s51, %s65
    %p67 = scmp.eq.s32.totalorder %s20, 0
    %p68 = por %p66, %p67
    %s70 = sadd.s32 %s69, 1
    %p73 = scmp.eq.s32.totalorder %s14, 1
    %p74 = scmp.ne.s32.totalorder %s69, %s71
    %p75 = scmp.eq.s32.totalorder %s14, 0
    %p76 = por %p74, %p75
    %p77 = scmp.ne.s32.totalorder %s69, %s71
    %p78 = scmp.eq.s32.totalorder %s19, 1
    %p79 = por %p77, %p78
    %p80 = scmp.ne.s32.totalorder %s71, %s72
    %p81 = scmp.eq.s32.totalorder %s19, 0
    %p82 = por %p80, %p81
    %p83 = scmp.ne.s32.totalorder %s71, %s72
    %p84 = scmp.eq.s32.totalorder %s20, 1
    %p85 = por %p83, %p84
    %p87 = scmp.ne.s32.totalorder %s72, %s86
    %p88 = scmp.eq.s32.totalorder %s20, 0
    %p89 = por %p87, %p88
    %s91 = sadd.s32 %s90, 1
    %p94 = scmp.eq.s32.totalorder %s14, 1
    %p95 = scmp.ne.s32.totalorder %s90, %s92
    %p96 = scmp.eq.s32.totalorder %s14, 0
    %p97 = por %p95, %p96
    %p98 = scmp.ne.s32.totalorder %s90, %s92
    %p99 = scmp.eq.s32.totalorder %s19, 1
    %p100 = por %p98, %p99
    %p101 = scmp.ne.s32.totalorder %s92, %s93
    %p102 = scmp.eq.s32.totalorder %s19, 0
    %p103 = por %p101, %p102
    %p104 = scmp.ne.s32.totalorder %s92, %s93
    %p105 = scmp.eq.s32.totalorder %s20, 1
    %p106 = por %p104, %p105
    %p108 = scmp.ne.s32.totalorder %s93, %s107
    %p109 = scmp.eq.s32.totalorder %s20, 0
    %p110 = por %p108, %p109
    %s112 = sadd.s32 %s111, 1
    %p115 = scmp.eq.s32.totalorder %s14, 1
    %p116 = scmp.ne.s32.totalorder %s111, %s113
    %p117 = scmp.eq.s32.totalorder %s14, 0
    %p118 = por %p116, %p117
    %p119 = scmp.ne.s32.totalorder %s111, %s113
    %p120 = scmp.eq.s32.totalorder %s19, 1
    %p121 = por %p119, %p120
    %p122 = scmp.ne.s32.totalorder %s113, %s114
    %p123 = scmp.eq.s32.totalorder %s19, 0
    %p124 = por %p122, %p123
    %p125 = scmp.ne.s32.totalorder %s113, %s114
    %p126 = scmp.eq.s32.totalorder %s20, 1
    %p127 = por %p125, %p126
    %p129 = scmp.ne.s32.totalorder %s114, %s128
    %p130 = scmp.eq.s32.totalorder %s20, 0
    %p131 = por %p129, %p130
    %s133 = sadd.s32 %s132, 1
    %p136 = scmp.eq.s32.totalorder %s14, 1
    %p137 = scmp.ne.s32.totalorder %s132, %s134
    %p138 = scmp.eq.s32.totalorder %s14, 0
    %p139 = por %p137, %p138
    %p140 = scmp.ne.s32.totalorder %s132, %s134
    %p141 = scmp.eq.s32.totalorder %s19, 1
    %p142 = por %p140, %p141
    %p143 = scmp.ne.s32.totalorder %s134, %s135
    %p144 = scmp.eq.s32.totalorder %s19, 0
    %p145 = por %p143, %p144
    %p146 = scmp.ne.s32.totalorder %s134, %s135
    %p147 = scmp.eq.s32.totalorder %s20, 1
    %p148 = por %p146, %p147
    %p150 = scmp.ne.s32.totalorder %s135, %s149
    %p151 = scmp.eq.s32.totalorder %s20, 0
    %p152 = por %p150, %p151
    %s154 = sadd.s32 %s153, 1
    %p157 = scmp.eq.s32.totalorder %s14, 1
    %p158 = scmp.ne.s32.totalorder %s153, %s155
    %p159 = scmp.eq.s32.totalorder %s14, 0
    %p160 = por %p158, %p159
    %p161 = scmp.ne.s32.totalorder %s153, %s155
    %p162 = scmp.eq.s32.totalorder %s19, 1
    %p163 = por %p161, %p162
    %p164 = scmp.ne.s32.totalorder %s155, %s156
    %p165 = scmp.eq.s32.totalorder %s19, 0
    %p166 = por %p164, %p165
    %p167 = scmp.ne.s32.totalorder %s155, %s156
    %p168 = scmp.eq.s32.totalorder %s20, 1
    %p169 = por %p167, %p168
    %p171 = scmp.ne.s32.totalorder %s156, %s170
    %p172 = scmp.eq.s32.totalorder %s20, 0
    %p173 = por %p171, %p172
    %s174 = ssub.s32 %s14, %s21
    %p175 = scmp.eq.s32.totalorder %s174, 0
    %s177 = sadd.s32 %s176, 1
    %s178 = scalar_select %p175, %s176, %s177
    %p181 = pneg %p175
    %p182 = scmp.eq.s32.totalorder %s14, 1
    %p183 = por %p181, %p182
    %p184 = scmp.ne.s32.totalorder %s176, %s179
    %p185 = scmp.eq.s32.totalorder %s14, 0
    %p186 = por %p184, %p185
    %p187 = scmp.ne.s32.totalorder %s176, %s179
    %p188 = scmp.eq.s32.totalorder %s19, 1
    %p189 = por %p187, %p188
    %p190 = scmp.ne.s32.totalorder %s179, %s180
    %p191 = scmp.eq.s32.totalorder %s19, 0
    %p192 = por %p190, %p191
    %p193 = scmp.ne.s32.totalorder %s179, %s180
    %p194 = scmp.eq.s32.totalorder %s20, 1
    %p195 = por %p193, %p194
    %p197 = scmp.ne.s32.totalorder %s180, %s196
    %p198 = scmp.eq.s32.totalorder %s20, 0
    %p199 = por %p197, %p198
    %p200 = scmp.le.s32.totalorder 1, %s14
    %p201 = scmp.lt.s32.totalorder %s14, 3
    %p202 = pnand %p200, %p201
    %p203 = pneg %p202
    // Predicated region
    $region9: #{mlp_forward.1} parent=5 // pred_check
      _
    $region10: #{mlp_forward.1} parent=5 // pred_check_branch
      %205 = sbr.rel (%p202) target = $region12
    $region11: #{mlp_forward.1} parent=5 // pred_region
      %s206 = ssub.s32 %s14, 1
      // Predicated region
      $region13: #{mlp_forward.1} parent=11 // pred_check
        %p207 = pneg %p61
      $region14: #{mlp_forward.1} parent=11 // pred_check_branch
        %209 = sbr.rel (%p207) target = $region16
      $region15: #{mlp_forward.1} parent=11 // pred_region
        _
      $region16: #{mlp_forward.1} parent=11 // pred_fallthru
        _
      // Predicated region
      $region17: #{mlp_forward.1} parent=11 // pred_check
        %p210 = pneg %p82
      $region18: #{mlp_forward.1} parent=11 // pred_check_branch
        %212 = sbr.rel (%p210) target = $region20
      $region19: #{mlp_forward.1} parent=11 // pred_region
        _
      $region20: #{mlp_forward.1} parent=11 // pred_fallthru
        _
      // Predicated region
      $region21: #{mlp_forward.1} parent=11 // pred_check
        %p213 = pneg %p103
      $region22: #{mlp_forward.1} parent=11 // pred_check_branch
        %215 = sbr.rel (%p213) target = $region24
      $region23: #{mlp_forward.1} parent=11 // pred_region
        _
      $region24: #{mlp_forward.1} parent=11 // pred_fallthru
        _
      // Predicated region
      $region25: #{mlp_forward.1} parent=11 // pred_check
        %p216 = pneg %p124
      $region26: #{mlp_forward.1} parent=11 // pred_check_branch
        %218 = sbr.rel (%p216) target = $region28
      $region27: #{mlp_forward.1} parent=11 // pred_region
        _
      $region28: #{mlp_forward.1} parent=11 // pred_fallthru
        _
      // Predicated region
      $region29: #{mlp_forward.1} parent=11 // pred_check
        %p219 = pneg %p145
      $region30: #{mlp_forward.1} parent=11 // pred_check_branch
        %221 = sbr.rel (%p219) target = $region32
      $region31: #{mlp_forward.1} parent=11 // pred_region
        _
      $region32: #{mlp_forward.1} parent=11 // pred_fallthru
        _
      // Predicated region
      $region33: #{mlp_forward.1} parent=11 // pred_check
        %p222 = pneg %p166
      $region34: #{mlp_forward.1} parent=11 // pred_check_branch
        %224 = sbr.rel (%p222) target = $region36
      $region35: #{mlp_forward.1} parent=11 // pred_region
        _
      $region36: #{mlp_forward.1} parent=11 // pred_fallthru
        _
    $region12: #{mlp_forward.1} parent=5 // pred_fallthru
      _
    %p225 = scmp.lt.s32.totalorder %s14, 2
    // Predicated region
    $region37: #{mlp_forward.1} parent=5 // pred_check
      %p226 = pneg %p225
    $region38: #{mlp_forward.1} parent=5 // pred_check_branch
      %228 = sbr.rel (%p226) target = $region40
    $region39: #{mlp_forward.1} parent=5 // pred_region
      // Predicated region
      $region41: #{mlp_forward.1} parent=39 // pred_check
        %p229 = pneg %p34
      $region42: #{mlp_forward.1} parent=39 // pred_check_branch
        %231 = sbr.rel (%p229) target = $region44
      $region43: #{mlp_forward.1} parent=39 // pred_region
        %s232 = smul.u32 32, %s14
        %p233 = scmp.lt.s32.totalorder %s232, 63
        %s234 = scalar_select %p233, %s232, 63
        %s235 = smul.addr %s234, 8
        %s236 = scalar_lea.vmem %s0, %s235
        %s237 = smul.u32 32, %s14
      $region44: #{mlp_forward.1} parent=39 // pred_fallthru
        _
    $region40: #{mlp_forward.1} parent=5 // pred_fallthru
      _
    %p238 = scmp.le.s32.totalorder 1, %s14
    %p239 = scmp.lt.s32.totalorder %s14, 3
    %p240 = pnand %p238, %p239
    %p241 = pneg %p240
    // Predicated region
    $region45: #{mlp_forward.1} parent=5 // pred_check
      _
    $region46: #{mlp_forward.1} parent=5 // pred_check_branch
      %243 = sbr.rel (%p240) target = $region48
    $region47: #{mlp_forward.1} parent=5 // pred_region
      %s244 = ssub.s32 %s14, 1
      %s245 = smul.u32 32, %s19
      %p246 = scmp.lt.s32.totalorder %s245, 63
      %s247 = scalar_select %p246, %s245, 63
      %s248 = smul.addr %s247, 8
      %s249 = scalar_lea.vmem %s0, %s248
      %p250 = pneg %p40
      %p251 = pneg %p37
      %p252 = pneg %p61
      %p253 = pneg %p58
      %p254 = pneg %p82
      %p255 = pneg %p79
      %p256 = pneg %p103
      %p257 = pneg %p100
      %p258 = pneg %p124
      %p259 = pneg %p121
      %p260 = pneg %p145
      %p261 = pneg %p142
      %p262 = pneg %p166
      %p263 = pneg %p163
      %p264 = pneg %p192
      %p265 = pneg %p189
      %s266 = smul.u32 2, %s19
      %p267 = scmp.lt.s32.totalorder %s266, 3
      %s268 = scalar_select %p267, %s266, 3
      %s269 = scalar_lea.vmem %s7, %s268
      %s270 = smul.u32 32, %s19
      %p271 = scmp.lt.s32.totalorder %s270, 63
      %s272 = scalar_select %p271, %s270, 63
      %s273 = smul.addr %s272, 8
      %s274 = scalar_lea.vmem %s0, %s273
      %s275 = smul.u32 32, %s19
      %s276 = smul.u32 2, %s19
      %p277 = scmp.lt.s32.totalorder %s276, 3
      %s278 = scalar_select %p277, %s276, 3
      %s279 = scalar_lea.vmem %s7, %s278
      %s280 = smul.u32 2, %s19
      %v282 = vld [vmem:[%s274] sm:$0xff]
      %v283 = vld [vmem:[%s274 + $0x8] sm:$0xff]
      %v284 = vld [vmem:[%s274 + $0x10] sm:$0xff]
      %v285 = vld [vmem:[%s274 + $0x18] sm:$0xff]
      %v286 = vld [vmem:[%s274 + $0x20] sm:$0xff]
      %v287 = vld [vmem:[%s274 + $0x28] sm:$0xff]
      %v288 = vld [vmem:[%s274 + $0x30] sm:$0xff]
      %v289 = vld [vmem:[%s274 + $0x38] sm:$0xff]
      %v290 = vld [vmem:[%s274 + $0x40] sm:$0xff]
      %v291 = vld [vmem:[%s274 + $0x48] sm:$0xff]
      %v292 = vld [vmem:[%s274 + $0x50] sm:$0xff]
      %v293 = vld [vmem:[%s274 + $0x58] sm:$0xff]
      %v294 = vld [vmem:[%s274 + $0x60] sm:$0xff]
      %v295 = vld [vmem:[%s274 + $0x68] sm:$0xff]
      %v296 = vld [vmem:[%s274 + $0x70] sm:$0xff]
      %v297 = vld [vmem:[%s274 + $0x78] sm:$0xff]
      %v298 = vld [vmem:[%s274 + $0x80] sm:$0xff]
      %v299 = vld [vmem:[%s274 + $0x88] sm:$0xff]
      %v300 = vld [vmem:[%s274 + $0x90] sm:$0xff]
      %v301 = vld [vmem:[%s274 + $0x98] sm:$0xff]
      %v302 = vld [vmem:[%s274 + $0xa0] sm:$0xff]
      %v303 = vld [vmem:[%s274 + $0xa8] sm:$0xff]
      %v304 = vld [vmem:[%s274 + $0xb0] sm:$0xff]
      %v305 = vld [vmem:[%s274 + $0xb8] sm:$0xff]
      %v306 = vld [vmem:[%s274 + $0xc0] sm:$0xff]
      %v307 = vld [vmem:[%s274 + $0xc8] sm:$0xff]
      %v308 = vld [vmem:[%s274 + $0xd0] sm:$0xff]
      %v309 = vld [vmem:[%s274 + $0xd8] sm:$0xff]
      %v310 = vld [vmem:[%s274 + $0xe0] sm:$0xff]
      %v311 = vld [vmem:[%s274 + $0xe8] sm:$0xff]
      %v312 = vld [vmem:[%s274 + $0xf0] sm:$0xff]
      %v313 = vld [vmem:[%s274 + $0xf8] sm:$0xff]
      %v314 = vpack.c.bf16 %v283, %v282
      %v315 = vpack.c.bf16 %v285, %v284
      %v316 = vpack.c.bf16 %v287, %v286
      %v317 = vpack.c.bf16 %v289, %v288
      %v318 = vpack.c.bf16 %v291, %v290
      %v319 = vpack.c.bf16 %v293, %v292
      %v320 = vpack.c.bf16 %v295, %v294
      %v321 = vpack.c.bf16 %v297, %v296
      %v322 = vpack.c.bf16 %v299, %v298
      %v323 = vpack.c.bf16 %v301, %v300
      %v324 = vpack.c.bf16 %v303, %v302
      %v325 = vpack.c.bf16 %v305, %v304
      %v326 = vpack.c.bf16 %v307, %v306
      %v327 = vpack.c.bf16 %v309, %v308
      %v328 = vpack.c.bf16 %v311, %v310
      %v329 = vpack.c.bf16 %v313, %v312
      %v330 = vld [vmem:[%s1] sm:$0xf]
      %v331 = vld [vmem:[%s1 + $0x4] sm:$0xf]
      %v332 = vld [vmem:[%s1 + $0x8] sm:$0xf]
      %v333 = vld [vmem:[%s1 + $0xc] sm:$0xf]
      %v334 = vld [vmem:[%s1 + $0x10] sm:$0xf]
      %v335 = vld [vmem:[%s1 + $0x14] sm:$0xf]
      %v336 = vld [vmem:[%s1 + $0x18] sm:$0xf]
      %v337 = vld [vmem:[%s1 + $0x1c] sm:$0xf]
      %v338 = vld [vmem:[%s1 + $0x20] sm:$0xf]
      %v339 = vld [vmem:[%s1 + $0x24] sm:$0xf]
      %v340 = vld [vmem:[%s1 + $0x28] sm:$0xf]
      %v341 = vld [vmem:[%s1 + $0x2c] sm:$0xf]
      %v342 = vld [vmem:[%s1 + $0x30] sm:$0xf]
      %v343 = vld [vmem:[%s1 + $0x34] sm:$0xf]
      %v344 = vld [vmem:[%s1 + $0x38] sm:$0xf]
      %v345 = vld [vmem:[%s1 + $0x3c] sm:$0xf]
      %v346 = vld [vmem:[%s1 + $0x40] sm:$0xf]
      %v347 = vld [vmem:[%s1 + $0x44] sm:$0xf]
      %v348 = vld [vmem:[%s1 + $0x48] sm:$0xf]
      %v349 = vld [vmem:[%s1 + $0x4c] sm:$0xf]
      %v350 = vld [vmem:[%s1 + $0x50] sm:$0xf]
      %v351 = vld [vmem:[%s1 + $0x54] sm:$0xf]
      %v352 = vld [vmem:[%s1 + $0x58] sm:$0xf]
      %v353 = vld [vmem:[%s1 + $0x5c] sm:$0xf]
      %v354 = vld [vmem:[%s1 + $0x60] sm:$0xf]
      %v355 = vld [vmem:[%s1 + $0x64] sm:$0xf]
      %v356 = vld [vmem:[%s1 + $0x68] sm:$0xf]
      %v357 = vld [vmem:[%s1 + $0x6c] sm:$0xf]
      %v358 = vld [vmem:[%s1 + $0x70] sm:$0xf]
      %v359 = vld [vmem:[%s1 + $0x74] sm:$0xf]
      %v360 = vld [vmem:[%s1 + $0x78] sm:$0xf]
      %v361 = vld [vmem:[%s1 + $0x7c] sm:$0xf]
      %v362 = vld [vmem:[%s1 + $0x80] sm:$0xf]
      %v363 = vld [vmem:[%s1 + $0x84] sm:$0xf]
      %v364 = vld [vmem:[%s1 + $0x88] sm:$0xf]
      %v365 = vld [vmem:[%s1 + $0x8c] sm:$0xf]
      %v366 = vld [vmem:[%s1 + $0x90] sm:$0xf]
      %v367 = vld [vmem:[%s1 + $0x94] sm:$0xf]
      %v368 = vld [vmem:[%s1 + $0x98] sm:$0xf]
      %v369 = vld [vmem:[%s1 + $0x9c] sm:$0xf]
      %v370 = vld [vmem:[%s1 + $0xa0] sm:$0xf]
      %v371 = vld [vmem:[%s1 + $0xa4] sm:$0xf]
      %v372 = vld [vmem:[%s1 + $0xa8] sm:$0xf]
      %v373 = vld [vmem:[%s1 + $0xac] sm:$0xf]
      %v374 = vld [vmem:[%s1 + $0xb0] sm:$0xf]
      %v375 = vld [vmem:[%s1 + $0xb4] sm:$0xf]
      %v376 = vld [vmem:[%s1 + $0xb8] sm:$0xf]
      %v377 = vld [vmem:[%s1 + $0xbc] sm:$0xf]
      %v378 = vld [vmem:[%s1 + $0xc0] sm:$0xf]
      %v379 = vld [vmem:[%s1 + $0xc4] sm:$0xf]
      %v380 = vld [vmem:[%s2] sm:$0xff]
      %v381 = vld [vmem:[%s2 + $0x8] sm:$0xff]
      %v382 = vld [vmem:[%s2 + $0x10] sm:$0xff]
      %v383 = vld [vmem:[%s2 + $0x18] sm:$0xff]
      %v384 = vld [vmem:[%s2 + $0x20] sm:$0xff]
      %v385 = vld [vmem:[%s2 + $0x28] sm:$0xff]
      %v386 = vld [vmem:[%s2 + $0x30] sm:$0xff]
      %v387 = vld [vmem:[%s2 + $0x38] sm:$0xff]
      %v388 = vld [vmem:[%s2 + $0x40] sm:$0xff]
      %v389 = vld [vmem:[%s2 + $0x48] sm:$0xff]
      %v390 = vld [vmem:[%s2 + $0x50] sm:$0xff]
      %v391 = vld [vmem:[%s2 + $0x58] sm:$0xff]
      %v392 = vld [vmem:[%s2 + $0x60] sm:$0xff]
      %v393 = vld [vmem:[%s2 + $0x68] sm:$0xff]
      %v394 = vld [vmem:[%s2 + $0x70] sm:$0xff]
      %v395 = vld [vmem:[%s2 + $0x78] sm:$0xff]
      %v396 = vld [vmem:[%s2 + $0x80] sm:$0xff]
      %v397 = vld [vmem:[%s2 + $0x88] sm:$0xff]
      %v398 = vld [vmem:[%s2 + $0x90] sm:$0xff]
      %v399 = vld [vmem:[%s2 + $0x98] sm:$0xff]
      %v400 = vld [vmem:[%s2 + $0xa0] sm:$0xff]
      %v401 = vld [vmem:[%s2 + $0xa8] sm:$0xff]
      %v402 = vld [vmem:[%s2 + $0xb0] sm:$0xff]
      %v403 = vld [vmem:[%s2 + $0xb8] sm:$0xff]
      %v404 = vld [vmem:[%s2 + $0xc0] sm:$0xff]
      %v405 = vld [vmem:[%s2 + $0xc8] sm:$0xff]
      %v406 = vld [vmem:[%s2 + $0xd0] sm:$0xff]
      %v407 = vld [vmem:[%s2 + $0xd8] sm:$0xff]
      %v408 = vld [vmem:[%s2 + $0xe0] sm:$0xff]
      %v409 = vld [vmem:[%s2 + $0xe8] sm:$0xff]
      %v410 = vld [vmem:[%s2 + $0xf0] sm:$0xff]
      %v411 = vld [vmem:[%s2 + $0xf8] sm:$0xff]
      %v412 = vld [vmem:[%s2 + $0x100] sm:$0xff]
      %v413 = vld [vmem:[%s2 + $0x108] sm:$0xff]
      %v414 = vld [vmem:[%s2 + $0x110] sm:$0xff]
      %v415 = vld [vmem:[%s2 + $0x118] sm:$0xff]
      %v416 = vld [vmem:[%s2 + $0x120] sm:$0xff]
      %v417 = vld [vmem:[%s2 + $0x128] sm:$0xff]
      %v418 = vld [vmem:[%s2 + $0x130] sm:$0xff]
      %v419 = vld [vmem:[%s2 + $0x138] sm:$0xff]
      %v420 = vld [vmem:[%s2 + $0x140] sm:$0xff]
      %v421 = vld [vmem:[%s2 + $0x148] sm:$0xff]
      %v422 = vld [vmem:[%s2 + $0x150] sm:$0xff]
      %v423 = vld [vmem:[%s2 + $0x158] sm:$0xff]
      %v424 = vld [vmem:[%s2 + $0x160] sm:$0xff]
      %v425 = vld [vmem:[%s2 + $0x168] sm:$0xff]
      %v426 = vld [vmem:[%s2 + $0x170] sm:$0xff]
      %v427 = vld [vmem:[%s2 + $0x178] sm:$0xff]
      %v428 = vld [vmem:[%s2 + $0x180] sm:$0xff]
      %v429 = vld [vmem:[%s2 + $0x188] sm:$0xff]
      %431 = vset.pattern.permute.xlu0 0
      %432 = vperm.xlu0 %431, %v380
      %v433 = vpop.permute.xlu0 %432
      %436 = vset.pattern.permute.xlu0 0
      %437 = vperm.xlu0 %436, %v381
      %v438 = vpop.permute.xlu0 %437
      %441 = vset.pattern.permute.xlu0 0
      %442 = vperm.xlu0 %441, %v382
      %v443 = vpop.permute.xlu0 %442
      %446 = vset.pattern.permute.xlu0 0
      %447 = vperm.xlu0 %446, %v383
      %v448 = vpop.permute.xlu0 %447
      %451 = vset.pattern.permute.xlu0 0
      %452 = vperm.xlu0 %451, %v384
      %v453 = vpop.permute.xlu0 %452
      %456 = vset.pattern.permute.xlu0 0
      %457 = vperm.xlu0 %456, %v385
      %v458 = vpop.permute.xlu0 %457
      %461 = vset.pattern.permute.xlu0 0
      %462 = vperm.xlu0 %461, %v386
      %v463 = vpop.permute.xlu0 %462
      %466 = vset.pattern.permute.xlu0 0
      %467 = vperm.xlu0 %466, %v387
      %v468 = vpop.permute.xlu0 %467
      %471 = vset.pattern.permute.xlu0 0
      %472 = vperm.xlu0 %471, %v388
      %v473 = vpop.permute.xlu0 %472
      %476 = vset.pattern.permute.xlu0 0
      %477 = vperm.xlu0 %476, %v389
      %v478 = vpop.permute.xlu0 %477
      %481 = vset.pattern.permute.xlu0 0
      %482 = vperm.xlu0 %481, %v390
      %v483 = vpop.permute.xlu0 %482
      %486 = vset.pattern.permute.xlu0 0
      %487 = vperm.xlu0 %486, %v391
      %v488 = vpop.permute.xlu0 %487
      %491 = vset.pattern.permute.xlu0 0
      %492 = vperm.xlu0 %491, %v392
      %v493 = vpop.permute.xlu0 %492
      %496 = vset.pattern.permute.xlu0 0
      %497 = vperm.xlu0 %496, %v393
      %v498 = vpop.permute.xlu0 %497
      %501 = vset.pattern.permute.xlu0 0
      %502 = vperm.xlu0 %501, %v394
      %v503 = vpop.permute.xlu0 %502
      %506 = vset.pattern.permute.xlu0 0
      %507 = vperm.xlu0 %506, %v395
      %v508 = vpop.permute.xlu0 %507
      %511 = vset.pattern.permute.xlu0 0
      %512 = vperm.xlu0 %511, %v396
      %v513 = vpop.permute.xlu0 %512
      %516 = vset.pattern.permute.xlu0 0
      %517 = vperm.xlu0 %516, %v397
      %v518 = vpop.permute.xlu0 %517
      %521 = vset.pattern.permute.xlu0 0
      %522 = vperm.xlu0 %521, %v398
      %v523 = vpop.permute.xlu0 %522
      %526 = vset.pattern.permute.xlu0 0
      %527 = vperm.xlu0 %526, %v399
      %v528 = vpop.permute.xlu0 %527
      %531 = vset.pattern.permute.xlu0 0
      %532 = vperm.xlu0 %531, %v400
      %v533 = vpop.permute.xlu0 %532
      %536 = vset.pattern.permute.xlu0 0
      %537 = vperm.xlu0 %536, %v401
      %v538 = vpop.permute.xlu0 %537
      %541 = vset.pattern.permute.xlu0 0
      %542 = vperm.xlu0 %541, %v402
      %v543 = vpop.permute.xlu0 %542
      %546 = vset.pattern.permute.xlu0 0
      %547 = vperm.xlu0 %546, %v403
      %v548 = vpop.permute.xlu0 %547
      %551 = vset.pattern.permute.xlu0 0
      %552 = vperm.xlu0 %551, %v404
      %v553 = vpop.permute.xlu0 %552
      %556 = vset.pattern.permute.xlu0 0
      %557 = vperm.xlu0 %556, %v405
      %v558 = vpop.permute.xlu0 %557
      %561 = vset.pattern.permute.xlu0 0
      %562 = vperm.xlu0 %561, %v406
      %v563 = vpop.permute.xlu0 %562
      %566 = vset.pattern.permute.xlu0 0
      %567 = vperm.xlu0 %566, %v407
      %v568 = vpop.permute.xlu0 %567
      %571 = vset.pattern.permute.xlu0 0
      %572 = vperm.xlu0 %571, %v408
      %v573 = vpop.permute.xlu0 %572
      %576 = vset.pattern.permute.xlu0 0
      %577 = vperm.xlu0 %576, %v409
      %v578 = vpop.permute.xlu0 %577
      %581 = vset.pattern.permute.xlu0 0
      %582 = vperm.xlu0 %581, %v410
      %v583 = vpop.permute.xlu0 %582
      %586 = vset.pattern.permute.xlu0 0
      %587 = vperm.xlu0 %586, %v411
      %v588 = vpop.permute.xlu0 %587
      %591 = vset.pattern.permute.xlu0 0
      %592 = vperm.xlu0 %591, %v412
      %v593 = vpop.permute.xlu0 %592
      %596 = vset.pattern.permute.xlu0 0
      %597 = vperm.xlu0 %596, %v413
      %v598 = vpop.permute.xlu0 %597
      %601 = vset.pattern.permute.xlu0 0
      %602 = vperm.xlu0 %601, %v414
      %v603 = vpop.permute.xlu0 %602
      %606 = vset.pattern.permute.xlu0 0
      %607 = vperm.xlu0 %606, %v415
      %v608 = vpop.permute.xlu0 %607
      %611 = vset.pattern.permute.xlu0 0
      %612 = vperm.xlu0 %611, %v416
      %v613 = vpop.permute.xlu0 %612
      %616 = vset.pattern.permute.xlu0 0
      %617 = vperm.xlu0 %616, %v417
      %v618 = vpop.permute.xlu0 %617
      %621 = vset.pattern.permute.xlu0 0
      %622 = vperm.xlu0 %621, %v418
      %v623 = vpop.permute.xlu0 %622
      %626 = vset.pattern.permute.xlu0 0
      %627 = vperm.xlu0 %626, %v419
      %v628 = vpop.permute.xlu0 %627
      %631 = vset.pattern.permute.xlu0 0
      %632 = vperm.xlu0 %631, %v420
      %v633 = vpop.permute.xlu0 %632
      %636 = vset.pattern.permute.xlu0 0
      %637 = vperm.xlu0 %636, %v421
      %v638 = vpop.permute.xlu0 %637
      %641 = vset.pattern.permute.xlu0 0
      %642 = vperm.xlu0 %641, %v422
      %v643 = vpop.permute.xlu0 %642
      %646 = vset.pattern.permute.xlu0 0
      %647 = vperm.xlu0 %646, %v423
      %v648 = vpop.permute.xlu0 %647
      %651 = vset.pattern.permute.xlu0 0
      %652 = vperm.xlu0 %651, %v424
      %v653 = vpop.permute.xlu0 %652
      %656 = vset.pattern.permute.xlu0 0
      %657 = vperm.xlu0 %656, %v425
      %v658 = vpop.permute.xlu0 %657
      %661 = vset.pattern.permute.xlu0 0
      %662 = vperm.xlu0 %661, %v426
      %v663 = vpop.permute.xlu0 %662
      %666 = vset.pattern.permute.xlu0 0
      %667 = vperm.xlu0 %666, %v427
      %v668 = vpop.permute.xlu0 %667
      %671 = vset.pattern.permute.xlu0 0
      %672 = vperm.xlu0 %671, %v428
      %v673 = vpop.permute.xlu0 %672
      %676 = vset.pattern.permute.xlu0 0
      %677 = vperm.xlu0 %676, %v429
      %v678 = vpop.permute.xlu0 %677
      %v730 = vunpack.c.l.b16 %v330
      %v731 = vunpack.c.l.b16 %v331
      %v732 = vunpack.c.l.b16 %v332
      %v733 = vunpack.c.l.b16 %v333
      %v734 = vunpack.c.l.b16 %v334
      %v735 = vunpack.c.l.b16 %v335
      %v736 = vunpack.c.l.b16 %v336
      %v737 = vunpack.c.l.b16 %v337
      %v738 = vunpack.c.l.b16 %v338
      %v739 = vunpack.c.l.b16 %v339
      %v740 = vunpack.c.l.b16 %v340
      %v741 = vunpack.c.l.b16 %v341
      %v742 = vunpack.c.l.b16 %v342
      %v743 = vunpack.c.l.b16 %v343
      %v744 = vunpack.c.l.b16 %v344
      %v745 = vunpack.c.l.b16 %v345
      %v746 = vunpack.c.l.b16 %v346
      %v747 = vunpack.c.l.b16 %v347
      %v748 = vunpack.c.l.b16 %v348
      %v749 = vunpack.c.l.b16 %v349
      %v750 = vunpack.c.l.b16 %v350
      %v751 = vunpack.c.l.b16 %v351
      %v752 = vunpack.c.l.b16 %v352
      %v753 = vunpack.c.l.b16 %v353
      %v754 = vunpack.c.l.b16 %v354
      %v755 = vunpack.c.l.b16 %v355
      %v756 = vunpack.c.l.b16 %v356
      %v757 = vunpack.c.l.b16 %v357
      %v758 = vunpack.c.l.b16 %v358
      %v759 = vunpack.c.l.b16 %v359
      %v760 = vunpack.c.l.b16 %v360
      %v761 = vunpack.c.l.b16 %v361
      %v762 = vunpack.c.l.b16 %v362
      %v763 = vunpack.c.l.b16 %v363
      %v764 = vunpack.c.l.b16 %v364
      %v765 = vunpack.c.l.b16 %v365
      %v766 = vunpack.c.l.b16 %v366
      %v767 = vunpack.c.l.b16 %v367
      %v768 = vunpack.c.l.b16 %v368
      %v769 = vunpack.c.l.b16 %v369
      %v770 = vunpack.c.l.b16 %v370
      %v771 = vunpack.c.l.b16 %v371
      %v772 = vunpack.c.l.b16 %v372
      %v773 = vunpack.c.l.b16 %v373
      %v774 = vunpack.c.l.b16 %v374
      %v775 = vunpack.c.l.b16 %v375
      %v776 = vunpack.c.l.b16 %v376
      %v777 = vunpack.c.l.b16 %v377
      %v778 = vunpack.c.l.b16 %v378
      %v779 = vunpack.c.l.b16 %v379
      %v780 = vpack.c.b16 %v731, %v730
      %v781 = vpack.c.b16 %v733, %v732
      %v782 = vpack.c.b16 %v735, %v734
      %v783 = vpack.c.b16 %v737, %v736
      %v784 = vpack.c.b16 %v739, %v738
      %v785 = vpack.c.b16 %v741, %v740
      %v786 = vpack.c.b16 %v743, %v742
      %v787 = vpack.c.b16 %v745, %v744
      %v788 = vpack.c.b16 %v747, %v746
      %v789 = vpack.c.b16 %v749, %v748
      %v790 = vpack.c.b16 %v751, %v750
      %v791 = vpack.c.b16 %v753, %v752
      %v792 = vpack.c.b16 %v755, %v754
      %v793 = vpack.c.b16 %v757, %v756
      %v794 = vpack.c.b16 %v759, %v758
      %v795 = vpack.c.b16 %v761, %v760
      %v796 = vpack.c.b16 %v763, %v762
      %v797 = vpack.c.b16 %v765, %v764
      %v798 = vpack.c.b16 %v767, %v766
      %v799 = vpack.c.b16 %v769, %v768
      %v800 = vpack.c.b16 %v771, %v770
      %v801 = vpack.c.b16 %v773, %v772
      %v802 = vpack.c.b16 %v775, %v774
      %v803 = vpack.c.b16 %v777, %v776
      %v804 = vpack.c.b16 %v779, %v778
      %vm805 = vcmask 195584
      %v807 = vsel %vm805, %v780, 0
      %v810 = vsel %vm805, %v781, 0
      %v813 = vsel %vm805, %v782, 0
      %v816 = vsel %vm805, %v783, 0
      %v819 = vsel %vm805, %v784, 0
      %v822 = vsel %vm805, %v785, 0
      %v825 = vsel %vm805, %v786, 0
      %v828 = vsel %vm805, %v787, 0
      %v831 = vsel %vm805, %v788, 0
      %v834 = vsel %vm805, %v789, 0
      %v837 = vsel %vm805, %v790, 0
      %v840 = vsel %vm805, %v791, 0
      %v843 = vsel %vm805, %v792, 0
      %v846 = vsel %vm805, %v793, 0
      %v849 = vsel %vm805, %v794, 0
      %v852 = vsel %vm805, %v795, 0
      %v855 = vsel %vm805, %v796, 0
      %v858 = vsel %vm805, %v797, 0
      %v861 = vsel %vm805, %v798, 0
      %v864 = vsel %vm805, %v799, 0
      %v867 = vsel %vm805, %v800, 0
      %v870 = vsel %vm805, %v801, 0
      %v873 = vsel %vm805, %v802, 0
      %v876 = vsel %vm805, %v803, 0
      %v879 = vsel %vm805, %v804, 0
      %v882 = vsel %vm805, %v314, 0
      %v885 = vsel %vm805, %v315, 0
      %v888 = vsel %vm805, %v316, 0
      %v891 = vsel %vm805, %v317, 0
      %v894 = vsel %vm805, %v318, 0
      %v897 = vsel %vm805, %v319, 0
      %v900 = vsel %vm805, %v320, 0
      %v903 = vsel %vm805, %v321, 0
      %v906 = vsel %vm805, %v322, 0
      %v909 = vsel %vm805, %v323, 0
      %v912 = vsel %vm805, %v324, 0
      %v915 = vsel %vm805, %v325, 0
      %v918 = vsel %vm805, %v326, 0
      %v921 = vsel %vm805, %v327, 0
      %v924 = vsel %vm805, %v328, 0
      %v927 = vsel %vm805, %v329, 0
      %929 = vmatprep.subr.bf16.mxu0 0
      %930 = vmatpush1.bf16.xpose.msra.mxu0 %v882
      %931 = vmatprep.subr.bf16.mxu0 0
      %932 = vmatpush1.bf16.xpose.msra.mxu0 %v885
      %933 = vmatprep.subr.bf16.mxu0 0
      %934 = vmatpush1.bf16.xpose.msra.mxu0 %v888
      %935 = vmatprep.subr.bf16.mxu0 0
      %936 = vmatpush1.bf16.xpose.msra.mxu0 %v891
      %937 = vmatprep.subr.bf16.mxu0 0
      %938 = vmatpush1.bf16.xpose.msra.mxu0 %v894
      %939 = vmatprep.subr.bf16.mxu0 0
      %940 = vmatpush1.bf16.xpose.msra.mxu0 %v897
      %941 = vmatprep.subr.bf16.mxu0 0
      %942 = vmatpush1.bf16.xpose.msra.mxu0 %v900
      %943 = vmatprep.subr.bf16.mxu0 0
      %944 = vmatpush1.bf16.xpose.msra.mxu0 %v903
      %945 = vmatprep.subr.bf16.mxu0 0
      %946 = vmatpush1.bf16.xpose.msra.mxu0 %v906
      %947 = vmatprep.subr.bf16.mxu0 0
      %948 = vmatpush1.bf16.xpose.msra.mxu0 %v909
      %949 = vmatprep.subr.bf16.mxu0 0
      %950 = vmatpush1.bf16.xpose.msra.mxu0 %v912
      %951 = vmatprep.subr.bf16.mxu0 0
      %952 = vmatpush1.bf16.xpose.msra.mxu0 %v915
      %953 = vmatprep.subr.bf16.mxu0 0
      %954 = vmatpush1.bf16.xpose.msra.mxu0 %v918
      %955 = vmatprep.subr.bf16.mxu0 0
      %956 = vmatpush1.bf16.xpose.msra.mxu0 %v921
      %957 = vmatprep.subr.bf16.mxu0 0
      %958 = vmatpush1.bf16.xpose.msra.mxu0 %v924
      %959 = vmatprep.subr.bf16.mxu0 0
      %960 = vmatpush1.bf16.xpose.msra.mxu0 %v927
      %961 = vmatprep.mubr.bf16.mxu0 0
      %962 = vmatmul.mubr.bf16.gmra.mrb[0].mxu0 %v807
      %v963 = vpop.f32.mrb[0].mxu0
      %v964 = vadd.f32 %v433, %v963
      %v965 = vpop.f32.mrb[0].mxu0
      %v966 = vadd.f32 %v433, %v965
      %v967 = vpop.f32.mrb[0].mxu0
      %v968 = vadd.f32 %v438, %v967
      %v969 = vpop.f32.mrb[0].mxu0
      %v970 = vadd.f32 %v438, %v969
      %971 = vmatprep.mubr.bf16.mxu0 0
      %972 = vmatmul.mubr.bf16.gmra.mrb[0].mxu0 %v810
      %v973 = vpop.f32.mrb[0].mxu0
      %v974 = vadd.f32 %v443, %v973
      %v975 = vpop.f32.mrb[0].mxu0
      %v976 = vadd.f32 %v443, %v975
      %v977 = vpop.f32.mrb[0].mxu0
      %v978 = vadd.f32 %v448, %v977
      %v979 = vpop.f32.mrb[0].mxu0
      %v980 = vadd.f32 %v448, %v979
      %981 = vmatprep.mubr.bf16.mxu0 0
      %982 = vmatmul.mubr.bf16.gmra.mrb[0].mxu0 %v813
      %v983 = vpop.f32.mrb[0].mxu0
      %v984 = vadd.f32 %v453, %v983
      %v985 = vpop.f32.mrb[0].mxu0
      %v986 = vadd.f32 %v453, %v985
      %v987 = vpop.f32.mrb[0].mxu0
      %v988 = vadd.f32 %v458, %v987
      %v989 = vpop.f32.mrb[0].mxu0
      %v990 = vadd.f32 %v458, %v989
      %991 = vmatprep.mubr.bf16.mxu0 0
      %992 = vmatmul.mubr.bf16.gmra.mrb[0].mxu0 %v816
      %v993 = vpop.f32.mrb[0].mxu0
      %v994 = vadd.f32 %v463, %v993
      %v995 = vpop.f32.mrb[0].mxu0
      %v996 = vadd.f32 %v463, %v995
      %v997 = vpop.f32.mrb[0].mxu0
      %v998 = vadd.f32 %v468, %v997
      %v999 = vpop.f32.mrb[0].mxu0
      %v1000 = vadd.f32 %v468, %v999
      %1001 = vmatprep.mubr.bf16.mxu0 0
      %1002 = vmatmul.mubr.bf16.gmra.mrb[0].mxu0 %v819
      %v1003 = vpop.f32.mrb[0].mxu0
      %v1004 = vadd.f32 %v473, %v1003
      %v1005 = vpop.f32.mrb[0].mxu0
      %v1006 = vadd.f32 %v473, %v1005
      %v1007 = vpop.f32.mrb[0].mxu0
      %v1008 = vadd.f32 %v478, %v1007
      %v1009 = vpop.f32.mrb[0].mxu0
      %v1010 = vadd.f32 %v478, %v1009
      %1011 = vmatprep.mubr.bf16.mxu0 0
      %1012 = vmatmul.mubr.bf16.gmra.mrb[0].mxu0 %v822
      %v1013 = vpop.f32.mrb[0].mxu0
      %v1014 = vadd.f32 %v483, %v1013
      %v1015 = vpop.f32.mrb[0].mxu0
      %v1016 = vadd.f32 %v483, %v1015
      %v1017 = vpop.f32.mrb[0].mxu0
      %v1018 = vadd.f32 %v488, %v1017
      %v1019 = vpop.f32.mrb[0].mxu0
      %v1020 = vadd.f32 %v488, %v1019
      %1021 = vmatprep.mubr.bf16.mxu0 0
      %1022 = vmatmul.mubr.bf16.gmra.mrb[0].mxu0 %v825
      %v1023 = vpop.f32.mrb[0].mxu0
      %v1024 = vadd.f32 %v493, %v1023
      %v1025 = vpop.f32.mrb[0].mxu0
      %v1026 = vadd.f32 %v493, %v1025
      %v1027 = vpop.f32.mrb[0].mxu0
      %v1028 = vadd.f32 %v498, %v1027
      %v1029 = vpop.f32.mrb[0].mxu0
      %v1030 = vadd.f32 %v498, %v1029
      %1031 = vmatprep.mubr.bf16.mxu0 0
      %1032 = vmatmul.mubr.bf16.gmra.mrb[0].mxu0 %v828
      %v1033 = vpop.f32.mrb[0].mxu0
      %v1034 = vadd.f32 %v503, %v1033
      %v1035 = vpop.f32.mrb[0].mxu0
      %v1036 = vadd.f32 %v503, %v1035
      %v1037 = vpop.f32.mrb[0].mxu0
      %v1038 = vadd.f32 %v508, %v1037
      %v1039 = vpop.f32.mrb[0].mxu0
      %v1040 = vadd.f32 %v508, %v1039
      %1041 = vmatprep.mubr.bf16.mxu0 0
      %1042 = vmatmul.mubr.bf16.gmra.mrb[0].mxu0 %v831
      %v1043 = vpop.f32.mrb[0].mxu0
      %v1044 = vadd.f32 %v513, %v1043
      %v1045 = vpop.f32.mrb[0].mxu0
      %v1046 = vadd.f32 %v513, %v1045
      %v1047 = vpop.f32.mrb[0].mxu0
      %v1048 = vadd.f32 %v518, %v1047
      %v1049 = vpop.f32.mrb[0].mxu0
      %v1050 = vadd.f32 %v518, %v1049
      %1051 = vmatprep.mubr.bf16.mxu0 0
      %1052 = vmatmul.mubr.bf16.gmra.mrb[0].mxu0 %v834
      %v1053 = vpop.f32.mrb[0].mxu0
      %v1054 = vadd.f32 %v523, %v1053
      %v1055 = vpop.f32.mrb[0].mxu0
      %v1056 = vadd.f32 %v523, %v1055
      %v1057 = vpop.f32.mrb[0].mxu0
      %v1058 = vadd.f32 %v528, %v1057
      %v1059 = vpop.f32.mrb[0].mxu0
      %v1060 = vadd.f32 %v528, %v1059
      %1061 = vmatprep.mubr.bf16.mxu0 0
      %1062 = vmatmul.mubr.bf16.gmra.mrb[0].mxu0 %v837
      %v1063 = vpop.f32.mrb[0].mxu0
      %v1064 = vadd.f32 %v533, %v1063
      %v1065 = vpop.f32.mrb[0].mxu0
      %v1066 = vadd.f32 %v533, %v1065
      %v1067 = vpop.f32.mrb[0].mxu0
      %v1068 = vadd.f32 %v538, %v1067
      %v1069 = vpop.f32.mrb[0].mxu0
      %v1070 = vadd.f32 %v538, %v1069
      %1071 = vmatprep.mubr.bf16.mxu0 0
      %1072 = vmatmul.mubr.bf16.gmra.mrb[0].mxu0 %v840
      %v1073 = vpop.f32.mrb[0].mxu0
      %v1074 = vadd.f32 %v543, %v1073
      %v1075 = vpop.f32.mrb[0].mxu0
      %v1076 = vadd.f32 %v543, %v1075
      %v1077 = vpop.f32.mrb[0].mxu0
      %v1078 = vadd.f32 %v548, %v1077
      %v1079 = vpop.f32.mrb[0].mxu0
      %v1080 = vadd.f32 %v548, %v1079
      %1081 = vmatprep.mubr.bf16.mxu0 0
      %1082 = vmatmul.mubr.bf16.gmra.mrb[0].mxu0 %v843
      %v1083 = vpop.f32.mrb[0].mxu0
      %v1084 = vadd.f32 %v553, %v1083
      %v1085 = vpop.f32.mrb[0].mxu0
      %v1086 = vadd.f32 %v553, %v1085
      %v1087 = vpop.f32.mrb[0].mxu0
      %v1088 = vadd.f32 %v558, %v1087
      %v1089 = vpop.f32.mrb[0].mxu0
      %v1090 = vadd.f32 %v558, %v1089
      %1091 = vmatprep.mubr.bf16.mxu0 0
      %1092 = vmatmul.mubr.bf16.gmra.mrb[0].mxu0 %v846
      %v1093 = vpop.f32.mrb[0].mxu0
      %v1094 = vadd.f32 %v563, %v1093
      %v1095 = vpop.f32.mrb[0].mxu0
      %v1096 = vadd.f32 %v563, %v1095
      %v1097 = vpop.f32.mrb[0].mxu0
      %v1098 = vadd.f32 %v568, %v1097
      %v1099 = vpop.f32.mrb[0].mxu0
      %v1100 = vadd.f32 %v568, %v1099
      %1101 = vmatprep.mubr.bf16.mxu0 0
      %1102 = vmatmul.mubr.bf16.gmra.mrb[0].mxu0 %v849
      %v1103 = vpop.f32.mrb[0].mxu0
      %v1104 = vadd.f32 %v573, %v1103
      %v1105 = vpop.f32.mrb[0].mxu0
      %v1106 = vadd.f32 %v573, %v1105
      %v1107 = vpop.f32.mrb[0].mxu0
      %v1108 = vadd.f32 %v578, %v1107
      %v1109 = vpop.f32.mrb[0].mxu0
      %v1110 = vadd.f32 %v578, %v1109
      %1111 = vmatprep.mubr.bf16.mxu0 0
      %1112 = vmatmul.mubr.bf16.gmra.mrb[0].mxu0 %v852
      %v1113 = vpop.f32.mrb[0].mxu0
      %v1114 = vadd.f32 %v583, %v1113
      %v1115 = vpop.f32.mrb[0].mxu0
      %v1116 = vadd.f32 %v583, %v1115
      %v1117 = vpop.f32.mrb[0].mxu0
      %v1118 = vadd.f32 %v588, %v1117
      %v1119 = vpop.f32.mrb[0].mxu0
      %v1120 = vadd.f32 %v588, %v1119
      %1121 = vmatprep.mubr.bf16.mxu0 0
      %1122 = vmatmul.mubr.bf16.gmra.mrb[0].mxu0 %v855
      %v1123 = vpop.f32.mrb[0].mxu0
      %v1124 = vadd.f32 %v593, %v1123
      %v1125 = vpop.f32.mrb[0].mxu0
      %v1126 = vadd.f32 %v593, %v1125
      %v1127 = vpop.f32.mrb[0].mxu0
      %v1128 = vadd.f32 %v598, %v1127
      %v1129 = vpop.f32.mrb[0].mxu0
      %v1130 = vadd.f32 %v598, %v1129
      %1131 = vmatprep.mubr.bf16.mxu0 0
      %1132 = vmatmul.mubr.bf16.gmra.mrb[0].mxu0 %v858
      %v1133 = vpop.f32.mrb[0].mxu0
      %v1134 = vadd.f32 %v603, %v1133
      %v1135 = vpop.f32.mrb[0].mxu0
      %v1136 = vadd.f32 %v603, %v1135
      %v1137 = vpop.f32.mrb[0].mxu0
      %v1138 = vadd.f32 %v608, %v1137
      %v1139 = vpop.f32.mrb[0].mxu0
      %v1140 = vadd.f32 %v608, %v1139
      %1141 = vmatprep.mubr.bf16.mxu0 0
      %1142 = vmatmul.mubr.bf16.gmra.mrb[0].mxu0 %v861
      %v1143 = vpop.f32.mrb[0].mxu0
      %v1144 = vadd.f32 %v613, %v1143
      %v1145 = vpop.f32.mrb[0].mxu0
      %v1146 = vadd.f32 %v613, %v1145
      %v1147 = vpop.f32.mrb[0].mxu0
      %v1148 = vadd.f32 %v618, %v1147
      %v1149 = vpop.f32.mrb[0].mxu0
      %v1150 = vadd.f32 %v618, %v1149
      %1151 = vmatprep.mubr.bf16.mxu0 0
      %1152 = vmatmul.mubr.bf16.gmra.mrb[0].mxu0 %v864
      %v1153 = vpop.f32.mrb[0].mxu0
      %v1154 = vadd.f32 %v623, %v1153
      %v1155 = vpop.f32.mrb[0].mxu0
      %v1156 = vadd.f32 %v623, %v1155
      %v1157 = vpop.f32.mrb[0].mxu0
      %v1158 = vadd.f32 %v628, %v1157
      %v1159 = vpop.f32.mrb[0].mxu0
      %v1160 = vadd.f32 %v628, %v1159
      %1161 = vmatprep.mubr.bf16.mxu0 0
      %1162 = vmatmul.mubr.bf16.gmra.mrb[0].mxu0 %v867
      %v1163 = vpop.f32.mrb[0].mxu0
      %v1164 = vadd.f32 %v633, %v1163
      %v1165 = vpop.f32.mrb[0].mxu0
      %v1166 = vadd.f32 %v633, %v1165
      %v1167 = vpop.f32.mrb[0].mxu0
      %v1168 = vadd.f32 %v638, %v1167
      %v1169 = vpop.f32.mrb[0].mxu0
      %v1170 = vadd.f32 %v638, %v1169
      %1171 = vmatprep.mubr.bf16.mxu0 0
      %1172 = vmatmul.mubr.bf16.gmra.mrb[0].mxu0 %v870
      %v1173 = vpop.f32.mrb[0].mxu0
      %v1174 = vadd.f32 %v643, %v1173
      %v1175 = vpop.f32.mrb[0].mxu0
      %v1176 = vadd.f32 %v643, %v1175
      %v1177 = vpop.f32.mrb[0].mxu0
      %v1178 = vadd.f32 %v648, %v1177
      %v1179 = vpop.f32.mrb[0].mxu0
      %v1180 = vadd.f32 %v648, %v1179
      %1181 = vmatprep.mubr.bf16.mxu0 0
      %1182 = vmatmul.mubr.bf16.gmra.mrb[0].mxu0 %v873
      %v1183 = vpop.f32.mrb[0].mxu0
      %v1184 = vadd.f32 %v653, %v1183
      %v1185 = vpop.f32.mrb[0].mxu0
      %v1186 = vadd.f32 %v653, %v1185
      %v1187 = vpop.f32.mrb[0].mxu0
      %v1188 = vadd.f32 %v658, %v1187
      %v1189 = vpop.f32.mrb[0].mxu0
      %v1190 = vadd.f32 %v658, %v1189
      %1191 = vmatprep.mubr.bf16.mxu0 0
      %1192 = vmatmul.mubr.bf16.gmra.mrb[0].mxu0 %v876
      %v1193 = vpop.f32.mrb[0].mxu0
      %v1194 = vadd.f32 %v663, %v1193
      %v1195 = vpop.f32.mrb[0].mxu0
      %v1196 = vadd.f32 %v663, %v1195
      %v1197 = vpop.f32.mrb[0].mxu0
      %v1198 = vadd.f32 %v668, %v1197
      %v1199 = vpop.f32.mrb[0].mxu0
      %v1200 = vadd.f32 %v668, %v1199
      %1201 = vmatprep.mubr.bf16.mxu0 0
      %1202 = vmatmul.mubr.bf16.gmra.mrb[0].mxu0 %v879
      %v1203 = vpop.f32.mrb[0].mxu0
      %v1204 = vadd.f32 %v673, %v1203
      %v1205 = vpop.f32.mrb[0].mxu0
      %v1206 = vadd.f32 %v673, %v1205
      %v1207 = vpop.f32.mrb[0].mxu0
      %v1208 = vadd.f32 %v678, %v1207
      %v1209 = vpop.f32.mrb[0].mxu0
      %v1210 = vadd.f32 %v678, %v1209
      %1211 = vdwg.mxu0
      %v1212 = vmul.f32 %v964, 0.5
      %v1213 = vmul.f32 %v966, 0.5
      %v1214 = vmul.f32 %v968, 0.5
      %v1215 = vmul.f32 %v970, 0.5
      %v1216 = vmul.f32 %v974, 0.5
      %v1217 = vmul.f32 %v976, 0.5
      %v1218 = vmul.f32 %v978, 0.5
      %v1219 = vmul.f32 %v980, 0.5
      %v1220 = vmul.f32 %v984, 0.5
      %v1221 = vmul.f32 %v986, 0.5
      %v1222 = vmul.f32 %v988, 0.5
      %v1223 = vmul.f32 %v990, 0.5
      %v1224 = vmul.f32 %v994, 0.5
      %v1225 = vmul.f32 %v996, 0.5
      %v1226 = vmul.f32 %v998, 0.5
      %v1227 = vmul.f32 %v1000, 0.5
      %v1228 = vmul.f32 %v1004, 0.5
      %v1229 = vmul.f32 %v1006, 0.5
      %v1230 = vmul.f32 %v1008, 0.5
      %v1231 = vmul.f32 %v1010, 0.5
      %v1232 = vmul.f32 %v1014, 0.5
      %v1233 = vmul.f32 %v1016, 0.5
      %v1234 = vmul.f32 %v1018, 0.5
      %v1235 = vmul.f32 %v1020, 0.5
      %v1236 = vmul.f32 %v1024, 0.5
      %v1237 = vmul.f32 %v1026, 0.5
      %v1238 = vmul.f32 %v1028, 0.5
      %v1239 = vmul.f32 %v1030, 0.5
      %v1240 = vmul.f32 %v1034, 0.5
      %v1241 = vmul.f32 %v1036, 0.5
      %v1242 = vmul.f32 %v1038, 0.5
      %v1243 = vmul.f32 %v1040, 0.5
      %v1244 = vmul.f32 %v1044, 0.5
      %v1245 = vmul.f32 %v1046, 0.5
      %v1246 = vmul.f32 %v1048, 0.5
      %v1247 = vmul.f32 %v1050, 0.5
      %v1248 = vmul.f32 %v1054, 0.5
      %v1249 = vmul.f32 %v1056, 0.5
      %v1250 = vmul.f32 %v1058, 0.5
      %v1251 = vmul.f32 %v1060, 0.5
      %v1252 = vmul.f32 %v1064, 0.5
      %v1253 = vmul.f32 %v1066, 0.5
      %v1254 = vmul.f32 %v1068, 0.5
      %v1255 = vmul.f32 %v1070, 0.5
      %v1256 = vmul.f32 %v1074, 0.5
      %v1257 = vmul.f32 %v1076, 0.5
      %v1258 = vmul.f32 %v1078, 0.5
      %v1259 = vmul.f32 %v1080, 0.5
      %v1260 = vmul.f32 %v1084, 0.5
      %v1261 = vmul.f32 %v1086, 0.5
      %v1262 = vmul.f32 %v1088, 0.5
      %v1263 = vmul.f32 %v1090, 0.5
      %v1264 = vmul.f32 %v1094, 0.5
      %v1265 = vmul.f32 %v1096, 0.5
      %v1266 = vmul.f32 %v1098, 0.5
      %v1267 = vmul.f32 %v1100, 0.5
      %v1268 = vmul.f32 %v1104, 0.5
      %v1269 = vmul.f32 %v1106, 0.5
      %v1270 = vmul.f32 %v1108, 0.5
      %v1271 = vmul.f32 %v1110, 0.5
      %v1272 = vmul.f32 %v1114, 0.5
      %v1273 = vmul.f32 %v1116, 0.5
      %v1274 = vmul.f32 %v1118, 0.5
      %v1275 = vmul.f32 %v1120, 0.5
      %v1276 = vmul.f32 %v1124, 0.5
      %v1277 = vmul.f32 %v1126, 0.5
      %v1278 = vmul.f32 %v1128, 0.5
      %v1279 = vmul.f32 %v1130, 0.5
      %v1280 = vmul.f32 %v1134, 0.5
      %v1281 = vmul.f32 %v1136, 0.5
      %v1282 = vmul.f32 %v1138, 0.5
      %v1283 = vmul.f32 %v1140, 0.5
      %v1284 = vmul.f32 %v1144, 0.5
      %v1285 = vmul.f32 %v1146, 0.5
      %v1286 = vmul.f32 %v1148, 0.5
      %v1287 = vmul.f32 %v1150, 0.5
      %v1288 = vmul.f32 %v1154, 0.5
      %v1289 = vmul.f32 %v1156, 0.5
      %v1290 = vmul.f32 %v1158, 0.5
      %v1291 = vmul.f32 %v1160, 0.5
      %v1292 = vmul.f32 %v1164, 0.5
      %v1293 = vmul.f32 %v1166, 0.5
      %v1294 = vmul.f32 %v1168, 0.5
      %v1295 = vmul.f32 %v1170, 0.5
      %v1296 = vmul.f32 %v1174, 0.5
      %v1297 = vmul.f32 %v1176, 0.5
      %v1298 = vmul.f32 %v1178, 0.5
      %v1299 = vmul.f32 %v1180, 0.5
      %v1300 = vmul.f32 %v1184, 0.5
      %v1301 = vmul.f32 %v1186, 0.5
      %v1302 = vmul.f32 %v1188, 0.5
      %v1303 = vmul.f32 %v1190, 0.5
      %v1304 = vmul.f32 %v1194, 0.5
      %v1305 = vmul.f32 %v1196, 0.5
      %v1306 = vmul.f32 %v1198, 0.5
      %v1307 = vmul.f32 %v1200, 0.5
      %v1308 = vmul.f32 %v1204, 0.5
      %v1309 = vmul.f32 %v1206, 0.5
      %v1310 = vmul.f32 %v1208, 0.5
      %v1311 = vmul.f32 %v1210, 0.5
      %v1312 = vtanh.pop %v1212
      %v1313 = vtanh.pop %v1213
      %v1314 = vtanh.pop %v1214
      %v1315 = vtanh.pop %v1215
      %v1316 = vtanh.pop %v1216
      %v1317 = vtanh.pop %v1217
      %v1318 = vtanh.pop %v1218
      %v1319 = vtanh.pop %v1219
      %v1320 = vtanh.pop %v1220
      %v1321 = vtanh.pop %v1221
      %v1322 = vtanh.pop %v1222
      %v1323 = vtanh.pop %v1223
      %v1324 = vtanh.pop %v1224
      %v1325 = vtanh.pop %v1225
      %v1326 = vtanh.pop %v1226
      %v1327 = vtanh.pop %v1227
      %v1328 = vtanh.pop %v1228
      %v1329 = vtanh.pop %v1229
      %v1330 = vtanh.pop %v1230
      %v1331 = vtanh.pop %v1231
      %v1332 = vtanh.pop %v1232
      %v1333 = vtanh.pop %v1233
      %v1334 = vtanh.pop %v1234
      %v1335 = vtanh.pop %v1235
      %v1336 = vtanh.pop %v1236
      %v1337 = vtanh.pop %v1237
      %v1338 = vtanh.pop %v1238
      %v1339 = vtanh.pop %v1239
      %v1340 = vtanh.pop %v1240
      %v1341 = vtanh.pop %v1241
      %v1342 = vtanh.pop %v1242
      %v1343 = vtanh.pop %v1243
      %v1344 = vtanh.pop %v1244
      %v1345 = vtanh.pop %v1245
      %v1346 = vtanh.pop %v1246
      %v1347 = vtanh.pop %v1247
      %v1348 = vtanh.pop %v1248
      %v1349 = vtanh.pop %v1249
      %v1350 = vtanh.pop %v1250
      %v1351 = vtanh.pop %v1251
      %v1352 = vtanh.pop %v1252
      %v1353 = vtanh.pop %v1253
      %v1354 = vtanh.pop %v1254
      %v1355 = vtanh.pop %v1255
      %v1356 = vtanh.pop %v1256
      %v1357 = vtanh.pop %v1257
      %v1358 = vtanh.pop %v1258
      %v1359 = vtanh.pop %v1259
      %v1360 = vtanh.pop %v1260
      %v1361 = vtanh.pop %v1261
      %v1362 = vtanh.pop %v1262
      %v1363 = vtanh.pop %v1263
      %v1364 = vtanh.pop %v1264
      %v1365 = vtanh.pop %v1265
      %v1366 = vtanh.pop %v1266
      %v1367 = vtanh.pop %v1267
      %v1368 = vtanh.pop %v1268
      %v1369 = vtanh.pop %v1269
      %v1370 = vtanh.pop %v1270
      %v1371 = vtanh.pop %v1271
      %v1372 = vtanh.pop %v1272
      %v1373 = vtanh.pop %v1273
      %v1374 = vtanh.pop %v1274
      %v1375 = vtanh.pop %v1275
      %v1376 = vtanh.pop %v1276
      %v1377 = vtanh.pop %v1277
      %v1378 = vtanh.pop %v1278
      %v1379 = vtanh.pop %v1279
      %v1380 = vtanh.pop %v1280
      %v1381 = vtanh.pop %v1281
      %v1382 = vtanh.pop %v1282
      %v1383 = vtanh.pop %v1283
      %v1384 = vtanh.pop %v1284
      %v1385 = vtanh.pop %v1285
      %v1386 = vtanh.pop %v1286
      %v1387 = vtanh.pop %v1287
      %v1388 = vtanh.pop %v1288
      %v1389 = vtanh.pop %v1289
      %v1390 = vtanh.pop %v1290
      %v1391 = vtanh.pop %v1291
      %v1392 = vtanh.pop %v1292
      %v1393 = vtanh.pop %v1293
      %v1394 = vtanh.pop %v1294
      %v1395 = vtanh.pop %v1295
      %v1396 = vtanh.pop %v1296
      %v1397 = vtanh.pop %v1297
      %v1398 = vtanh.pop %v1298
      %v1399 = vtanh.pop %v1299
      %v1400 = vtanh.pop %v1300
      %v1401 = vtanh.pop %v1301
      %v1402 = vtanh.pop %v1302
      %v1403 = vtanh.pop %v1303
      %v1404 = vtanh.pop %v1304
      %v1405 = vtanh.pop %v1305
      %v1406 = vtanh.pop %v1306
      %v1407 = vtanh.pop %v1307
      %v1408 = vtanh.pop %v1308
      %v1409 = vtanh.pop %v1309
      %v1410 = vtanh.pop %v1310
      %v1411 = vtanh.pop %v1311
      %v1412 = vmul.f32 %v1312, 0.5
      %v1413 = vmul.f32 %v1313, 0.5
      %v1414 = vmul.f32 %v1314, 0.5
      %v1415 = vmul.f32 %v1315, 0.5
      %v1416 = vmul.f32 %v1316, 0.5
      %v1417 = vmul.f32 %v1317, 0.5
      %v1418 = vmul.f32 %v1318, 0.5
      %v1419 = vmul.f32 %v1319, 0.5
      %v1420 = vmul.f32 %v1320, 0.5
      %v1421 = vmul.f32 %v1321, 0.5
      %v1422 = vmul.f32 %v1322, 0.5
      %v1423 = vmul.f32 %v1323, 0.5
      %v1424 = vmul.f32 %v1324, 0.5
      %v1425 = vmul.f32 %v1325, 0.5
      %v1426 = vmul.f32 %v1326, 0.5
      %v1427 = vmul.f32 %v1327, 0.5
      %v1428 = vmul.f32 %v1328, 0.5
      %v1429 = vmul.f32 %v1329, 0.5
      %v1430 = vmul.f32 %v1330, 0.5
      %v1431 = vmul.f32 %v1331, 0.5
      %v1432 = vmul.f32 %v1332, 0.5
      %v1433 = vmul.f32 %v1333, 0.5
      %v1434 = vmul.f32 %v1334, 0.5
      %v1435 = vmul.f32 %v1335, 0.5
      %v1436 = vmul.f32 %v1336, 0.5
      %v1437 = vmul.f32 %v1337, 0.5
      %v1438 = vmul.f32 %v1338, 0.5
      %v1439 = vmul.f32 %v1339, 0.5
      %v1440 = vmul.f32 %v1340, 0.5
      %v1441 = vmul.f32 %v1341, 0.5
      %v1442 = vmul.f32 %v1342, 0.5
      %v1443 = vmul.f32 %v1343, 0.5
      %v1444 = vmul.f32 %v1344, 0.5
      %v1445 = vmul.f32 %v1345, 0.5
      %v1446 = vmul.f32 %v1346, 0.5
      %v1447 = vmul.f32 %v1347, 0.5
      %v1448 = vmul.f32 %v1348, 0.5
      %v1449 = vmul.f32 %v1349, 0.5
      %v1450 = vmul.f32 %v1350, 0.5
      %v1451 = vmul.f32 %v1351, 0.5
      %v1452 = vmul.f32 %v1352, 0.5
      %v1453 = vmul.f32 %v1353, 0.5
      %v1454 = vmul.f32 %v1354, 0.5
      %v1455 = vmul.f32 %v1355, 0.5
      %v1456 = vmul.f32 %v1356, 0.5
      %v1457 = vmul.f32 %v1357, 0.5
      %v1458 = vmul.f32 %v1358, 0.5
      %v1459 = vmul.f32 %v1359, 0.5
      %v1460 = vmul.f32 %v1360, 0.5
      %v1461 = vmul.f32 %v1361, 0.5
      %v1462 = vmul.f32 %v1362, 0.5
      %v1463 = vmul.f32 %v1363, 0.5
      %v1464 = vmul.f32 %v1364, 0.5
      %v1465 = vmul.f32 %v1365, 0.5
      %v1466 = vmul.f32 %v1366, 0.5
      %v1467 = vmul.f32 %v1367, 0.5
      %v1468 = vmul.f32 %v1368, 0.5
      %v1469 = vmul.f32 %v1369, 0.5
      %v1470 = vmul.f32 %v1370, 0.5
      %v1471 = vmul.f32 %v1371, 0.5
      %v1472 = vmul.f32 %v1372, 0.5
      %v1473 = vmul.f32 %v1373, 0.5
      %v1474 = vmul.f32 %v1374, 0.5
      %v1475 = vmul.f32 %v1375, 0.5
      %v1476 = vmul.f32 %v1376, 0.5
      %v1477 = vmul.f32 %v1377, 0.5
      %v1478 = vmul.f32 %v1378, 0.5
      %v1479 = vmul.f32 %v1379, 0.5
      %v1480 = vmul.f32 %v1380, 0.5
      %v1481 = vmul.f32 %v1381, 0.5
      %v1482 = vmul.f32 %v1382, 0.5
      %v1483 = vmul.f32 %v1383, 0.5
      %v1484 = vmul.f32 %v1384, 0.5
      %v1485 = vmul.f32 %v1385, 0.5
      %v1486 = vmul.f32 %v1386, 0.5
      %v1487 = vmul.f32 %v1387, 0.5
      %v1488 = vmul.f32 %v1388, 0.5
      %v1489 = vmul.f32 %v1389, 0.5
      %v1490 = vmul.f32 %v1390, 0.5
      %v1491 = vmul.f32 %v1391, 0.5
      %v1492 = vmul.f32 %v1392, 0.5
      %v1493 = vmul.f32 %v1393, 0.5
      %v1494 = vmul.f32 %v1394, 0.5
      %v1495 = vmul.f32 %v1395, 0.5
      %v1496 = vmul.f32 %v1396, 0.5
      %v1497 = vmul.f32 %v1397, 0.5
      %v1498 = vmul.f32 %v1398, 0.5
      %v1499 = vmul.f32 %v1399, 0.5
      %v1500 = vmul.f32 %v1400, 0.5
      %v1501 = vmul.f32 %v1401, 0.5
      %v1502 = vmul.f32 %v1402, 0.5
      %v1503 = vmul.f32 %v1403, 0.5
      %v1504 = vmul.f32 %v1404, 0.5
      %v1505 = vmul.f32 %v1405, 0.5
      %v1506 = vmul.f32 %v1406, 0.5
      %v1507 = vmul.f32 %v1407, 0.5
      %v1508 = vmul.f32 %v1408, 0.5
      %v1509 = vmul.f32 %v1409, 0.5
      %v1510 = vmul.f32 %v1410, 0.5
      %v1511 = vmul.f32 %v1411, 0.5
      %v1512 = vadd.f32 %v1412, 0.5
      %v1513 = vadd.f32 %v1413, 0.5
      %v1514 = vadd.f32 %v1414, 0.5
      %v1515 = vadd.f32 %v1415, 0.5
      %v1516 = vadd.f32 %v1416, 0.5
      %v1517 = vadd.f32 %v1417, 0.5
      %v1518 = vadd.f32 %v1418, 0.5
      %v1519 = vadd.f32 %v1419, 0.5
      %v1520 = vadd.f32 %v1420, 0.5
      %v1521 = vadd.f32 %v1421, 0.5
      %v1522 = vadd.f32 %v1422, 0.5
      %v1523 = vadd.f32 %v1423, 0.5
      %v1524 = vadd.f32 %v1424, 0.5
      %v1525 = vadd.f32 %v1425, 0.5
      %v1526 = vadd.f32 %v1426, 0.5
      %v1527 = vadd.f32 %v1427, 0.5
      %v1528 = vadd.f32 %v1428, 0.5
      %v1529 = vadd.f32 %v1429, 0.5
      %v1530 = vadd.f32 %v1430, 0.5
      %v1531 = vadd.f32 %v1431, 0.5
      %v1532 = vadd.f32 %v1432, 0.5
      %v1533 = vadd.f32 %v1433, 0.5
      %v1534 = vadd.f32 %v1434, 0.5
      %v1535 = vadd.f32 %v1435, 0.5
      %v1536 = vadd.f32 %v1436, 0.5
      %v1537 = vadd.f32 %v1437, 0.5
      %v1538 = vadd.f32 %v1438, 0.5
      %v1539 = vadd.f32 %v1439, 0.5
      %v1540 = vadd.f32 %v1440, 0.5
      %v1541 = vadd.f32 %v1441, 0.5
      %v1542 = vadd.f32 %v1442, 0.5
      %v1543 = vadd.f32 %v1443, 0.5
      %v1544 = vadd.f32 %v1444, 0.5
      %v1545 = vadd.f32 %v1445, 0.5
      %v1546 = vadd.f32 %v1446, 0.5
      %v1547 = vadd.f32 %v1447, 0.5
      %v1548 = vadd.f32 %v1448, 0.5
      %v1549 = vadd.f32 %v1449, 0.5
      %v1550 = vadd.f32 %v1450, 0.5
      %v1551 = vadd.f32 %v1451, 0.5
      %v1552 = vadd.f32 %v1452, 0.5
      %v1553 = vadd.f32 %v1453, 0.5
      %v1554 = vadd.f32 %v1454, 0.5
      %v1555 = vadd.f32 %v1455, 0.5
      %v1556 = vadd.f32 %v1456, 0.5
      %v1557 = vadd.f32 %v1457, 0.5
      %v1558 = vadd.f32 %v1458, 0.5
      %v1559 = vadd.f32 %v1459, 0.5
      %v1560 = vadd.f32 %v1460, 0.5
      %v1561 = vadd.f32 %v1461, 0.5
      %v1562 = vadd.f32 %v1462, 0.5
      %v1563 = vadd.f32 %v1463, 0.5
      %v1564 = vadd.f32 %v1464, 0.5
      %v1565 = vadd.f32 %v1465, 0.5
      %v1566 = vadd.f32 %v1466, 0.5
      %v1567 = vadd.f32 %v1467, 0.5
      %v1568 = vadd.f32 %v1468, 0.5
      %v1569 = vadd.f32 %v1469, 0.5
      %v1570 = vadd.f32 %v1470, 0.5
      %v1571 = vadd.f32 %v1471, 0.5
      %v1572 = vadd.f32 %v1472, 0.5
      %v1573 = vadd.f32 %v1473, 0.5
      %v1574 = vadd.f32 %v1474, 0.5
      %v1575 = vadd.f32 %v1475, 0.5
      %v1576 = vadd.f32 %v1476, 0.5
      %v1577 = vadd.f32 %v1477, 0.5
      %v1578 = vadd.f32 %v1478, 0.5
      %v1579 = vadd.f32 %v1479, 0.5
      %v1580 = vadd.f32 %v1480, 0.5
      %v1581 = vadd.f32 %v1481, 0.5
      %v1582 = vadd.f32 %v1482, 0.5
      %v1583 = vadd.f32 %v1483, 0.5
      %v1584 = vadd.f32 %v1484, 0.5
      %v1585 = vadd.f32 %v1485, 0.5
      %v1586 = vadd.f32 %v1486, 0.5
      %v1587 = vadd.f32 %v1487, 0.5
      %v1588 = vadd.f32 %v1488, 0.5
      %v1589 = vadd.f32 %v1489, 0.5
      %v1590 = vadd.f32 %v1490, 0.5
      %v1591 = vadd.f32 %v1491, 0.5
      %v1592 = vadd.f32 %v1492, 0.5
      %v1593 = vadd.f32 %v1493, 0.5
      %v1594 = vadd.f32 %v1494, 0.5
      %v1595 = vadd.f32 %v1495, 0.5
      %v1596 = vadd.f32 %v1496, 0.5
      %v1597 = vadd.f32 %v1497, 0.5
      %v1598 = vadd.f32 %v1498, 0.5
      %v1599 = vadd.f32 %v1499, 0.5
      %v1600 = vadd.f32 %v1500, 0.5
      %v1601 = vadd.f32 %v1501, 0.5
      %v1602 = vadd.f32 %v1502, 0.5
      %v1603 = vadd.f32 %v1503, 0.5
      %v1604 = vadd.f32 %v1504, 0.5
      %v1605 = vadd.f32 %v1505, 0.5
      %v1606 = vadd.f32 %v1506, 0.5
      %v1607 = vadd.f32 %v1507, 0.5
      %v1608 = vadd.f32 %v1508, 0.5
      %v1609 = vadd.f32 %v1509, 0.5
      %v1610 = vadd.f32 %v1510, 0.5
      %v1611 = vadd.f32 %v1511, 0.5
      %v1612 = vpack.c.bf16 %v1514, %v1512
      %v1613 = vpack.c.bf16 %v1515, %v1513
      %v1614 = vpack.c.bf16 %v1518, %v1516
      %v1615 = vpack.c.bf16 %v1519, %v1517
      %v1616 = vpack.c.bf16 %v1522, %v1520
      %v1617 = vpack.c.bf16 %v1523, %v1521
      %v1618 = vpack.c.bf16 %v1526, %v1524
      %v1619 = vpack.c.bf16 %v1527, %v1525
      %v1620 = vpack.c.bf16 %v1530, %v1528
      %v1621 = vpack.c.bf16 %v1531, %v1529
      %v1622 = vpack.c.bf16 %v1534, %v1532
      %v1623 = vpack.c.bf16 %v1535, %v1533
      %v1624 = vpack.c.bf16 %v1538, %v1536
      %v1625 = vpack.c.bf16 %v1539, %v1537
      %v1626 = vpack.c.bf16 %v1542, %v1540
      %v1627 = vpack.c.bf16 %v1543, %v1541
      %v1628 = vpack.c.bf16 %v1546, %v1544
      %v1629 = vpack.c.bf16 %v1547, %v1545
      %v1630 = vpack.c.bf16 %v1550, %v1548
      %v1631 = vpack.c.bf16 %v1551, %v1549
      %v1632 = vpack.c.bf16 %v1554, %v1552
      %v1633 = vpack.c.bf16 %v1555, %v1553
      %v1634 = vpack.c.bf16 %v1558, %v1556
      %v1635 = vpack.c.bf16 %v1559, %v1557
      %v1636 = vpack.c.bf16 %v1562, %v1560
      %v1637 = vpack.c.bf16 %v1563, %v1561
      %v1638 = vpack.c.bf16 %v1566, %v1564
      %v1639 = vpack.c.bf16 %v1567, %v1565
      %v1640 = vpack.c.bf16 %v1570, %v1568
      %v1641 = vpack.c.bf16 %v1571, %v1569
      %v1642 = vpack.c.bf16 %v1574, %v1572
      %v1643 = vpack.c.bf16 %v1575, %v1573
      %v1644 = vpack.c.bf16 %v1578, %v1576
      %v1645 = vpack.c.bf16 %v1579, %v1577
      %v1646 = vpack.c.bf16 %v1582, %v1580
      %v1647 = vpack.c.bf16 %v1583, %v1581
      %v1648 = vpack.c.bf16 %v1586, %v1584
      %v1649 = vpack.c.bf16 %v1587, %v1585
      %v1650 = vpack.c.bf16 %v1590, %v1588
      %v1651 = vpack.c.bf16 %v1591, %v1589
      %v1652 = vpack.c.bf16 %v1594, %v1592
      %v1653 = vpack.c.bf16 %v1595, %v1593
      %v1654 = vpack.c.bf16 %v1598, %v1596
      %v1655 = vpack.c.bf16 %v1599, %v1597
      %v1656 = vpack.c.bf16 %v1602, %v1600
      %v1657 = vpack.c.bf16 %v1603, %v1601
      %v1658 = vpack.c.bf16 %v1606, %v1604
      %v1659 = vpack.c.bf16 %v1607, %v1605
      %v1660 = vpack.c.bf16 %v1610, %v1608
      %v1661 = vpack.c.bf16 %v1611, %v1609
      %v1662 = vld [vmem:[%s3] sm:$0xff]
      %v1663 = vld [vmem:[%s3 + $0x8] sm:$0xff]
      %v1664 = vld [vmem:[%s3 + $0x10] sm:$0xff]
      %v1665 = vld [vmem:[%s3 + $0x18] sm:$0xff]
      %v1666 = vld [vmem:[%s3 + $0x20] sm:$0xff]
      %v1667 = vld [vmem:[%s3 + $0x28] sm:$0xff]
      %v1668 = vld [vmem:[%s3 + $0x30] sm:$0xff]
      %v1669 = vld [vmem:[%s3 + $0x38] sm:$0xff]
      %v1670 = vld [vmem:[%s3 + $0x40] sm:$0xff]
      %v1671 = vld [vmem:[%s3 + $0x48] sm:$0xff]
      %v1672 = vld [vmem:[%s3 + $0x50] sm:$0xff]
      %v1673 = vld [vmem:[%s3 + $0x58] sm:$0xff]
      %v1674 = vld [vmem:[%s3 + $0x60] sm:$0xff]
      %v1675 = vld [vmem:[%s3 + $0x68] sm:$0xff]
      %v1676 = vld [vmem:[%s3 + $0x70] sm:$0xff]
      %v1677 = vld [vmem:[%s3 + $0x78] sm:$0xff]
      %v1678 = vld [vmem:[%s3 + $0x80] sm:$0xff]
      %v1679 = vld [vmem:[%s3 + $0x88] sm:$0xff]
      %v1680 = vld [vmem:[%s3 + $0x90] sm:$0xff]
      %v1681 = vld [vmem:[%s3 + $0x98] sm:$0xff]
      %v1682 = vld [vmem:[%s3 + $0xa0] sm:$0xff]
      %v1683 = vld [vmem:[%s3 + $0xa8] sm:$0xff]
      %v1684 = vld [vmem:[%s3 + $0xb0] sm:$0xff]
      %v1685 = vld [vmem:[%s3 + $0xb8] sm:$0xff]
      %v1686 = vld [vmem:[%s3 + $0xc0] sm:$0xff]
      %v1687 = vld [vmem:[%s3 + $0xc8] sm:$0xff]
      %v1688 = vld [vmem:[%s3 + $0xd0] sm:$0xff]
      %v1689 = vld [vmem:[%s3 + $0xd8] sm:$0xff]
      %v1690 = vld [vmem:[%s3 + $0xe0] sm:$0xff]
      %v1691 = vld [vmem:[%s3 + $0xe8] sm:$0xff]
      %v1692 = vld [vmem:[%s3 + $0xf0] sm:$0xff]
      %v1693 = vld [vmem:[%s3 + $0xf8] sm:$0xff]
      %v1694 = vld [vmem:[%s3 + $0x100] sm:$0xff]
      %v1695 = vld [vmem:[%s3 + $0x108] sm:$0xff]
      %v1696 = vld [vmem:[%s3 + $0x110] sm:$0xff]
      %v1697 = vld [vmem:[%s3 + $0x118] sm:$0xff]
      %v1698 = vld [vmem:[%s3 + $0x120] sm:$0xff]
      %v1699 = vld [vmem:[%s3 + $0x128] sm:$0xff]
      %v1700 = vld [vmem:[%s3 + $0x130] sm:$0xff]
      %v1701 = vld [vmem:[%s3 + $0x138] sm:$0xff]
      %v1702 = vld [vmem:[%s3 + $0x140] sm:$0xff]
      %v1703 = vld [vmem:[%s3 + $0x148] sm:$0xff]
      %v1704 = vld [vmem:[%s3 + $0x150] sm:$0xff]
      %v1705 = vld [vmem:[%s3 + $0x158] sm:$0xff]
      %v1706 = vld [vmem:[%s3 + $0x160] sm:$0xff]
      %v1707 = vld [vmem:[%s3 + $0x168] sm:$0xff]
      %v1708 = vld [vmem:[%s3 + $0x170] sm:$0xff]
      %v1709 = vld [vmem:[%s3 + $0x178] sm:$0xff]
      %v1710 = vld [vmem:[%s3 + $0x180] sm:$0xff]
      %v1711 = vld [vmem:[%s3 + $0x188] sm:$0xff]
      %v1712 = vld [vmem:[%s3 + $0x190] sm:$0xff]
      %v1713 = vld [vmem:[%s3 + $0x198] sm:$0xff]
      %v1714 = vld [vmem:[%s3 + $0x1a0] sm:$0xff]
      %v1715 = vld [vmem:[%s3 + $0x1a8] sm:$0xff]
      %v1716 = vld [vmem:[%s3 + $0x1b0] sm:$0xff]
      %v1717 = vld [vmem:[%s3 + $0x1b8] sm:$0xff]
      %v1718 = vld [vmem:[%s3 + $0x1c0] sm:$0xff]
      %v1719 = vld [vmem:[%s3 + $0x1c8] sm:$0xff]
      %v1720 = vld [vmem:[%s3 + $0x1d0] sm:$0xff]
      %v1721 = vld [vmem:[%s3 + $0x1d8] sm:$0xff]
      %v1722 = vld [vmem:[%s3 + $0x1e0] sm:$0xff]
      %v1723 = vld [vmem:[%s3 + $0x1e8] sm:$0xff]
      %v1724 = vld [vmem:[%s3 + $0x1f0] sm:$0xff]
      %v1725 = vld [vmem:[%s3 + $0x1f8] sm:$0xff]
      %v1726 = vld [vmem:[%s3 + $0x200] sm:$0xff]
      %v1727 = vld [vmem:[%s3 + $0x208] sm:$0xff]
      %v1728 = vld [vmem:[%s3 + $0x210] sm:$0xff]
      %v1729 = vld [vmem:[%s3 + $0x218] sm:$0xff]
      %v1730 = vld [vmem:[%s3 + $0x220] sm:$0xff]
      %v1731 = vld [vmem:[%s3 + $0x228] sm:$0xff]
      %v1732 = vld [vmem:[%s3 + $0x230] sm:$0xff]
      %v1733 = vld [vmem:[%s3 + $0x238] sm:$0xff]
      %v1734 = vld [vmem:[%s3 + $0x240] sm:$0xff]
      %v1735 = vld [vmem:[%s3 + $0x248] sm:$0xff]
      %v1736 = vld [vmem:[%s3 + $0x250] sm:$0xff]
      %v1737 = vld [vmem:[%s3 + $0x258] sm:$0xff]
      %v1738 = vld [vmem:[%s4] sm:$0xff]
      %v1739 = vld [vmem:[%s4 + $0x8] sm:$0xff]
      %v1740 = vld [vmem:[%s4 + $0x10] sm:$0xff]
      %v1741 = vld [vmem:[%s4 + $0x18] sm:$0xff]
      %v1742 = vld [vmem:[%s4 + $0x20] sm:$0xff]
      %v1743 = vld [vmem:[%s4 + $0x28] sm:$0xff]
      %v1744 = vld [vmem:[%s4 + $0x30] sm:$0xff]
      %v1745 = vld [vmem:[%s4 + $0x38] sm:$0xff]
      %v1746 = vld [vmem:[%s4 + $0x40] sm:$0xff]
      %v1747 = vld [vmem:[%s4 + $0x48] sm:$0xff]
      %v1748 = vld [vmem:[%s4 + $0x50] sm:$0xff]
      %v1749 = vld [vmem:[%s4 + $0x58] sm:$0xff]
      %v1750 = vld [vmem:[%s4 + $0x60] sm:$0xff]
      %v1751 = vld [vmem:[%s4 + $0x68] sm:$0xff]
      %v1752 = vld [vmem:[%s4 + $0x70] sm:$0xff]
      %v1753 = vld [vmem:[%s4 + $0x78] sm:$0xff]
      %v1754 = vld [vmem:[%s4 + $0x80] sm:$0xff]
      %v1755 = vld [vmem:[%s4 + $0x88] sm:$0xff]
      %v1756 = vld [vmem:[%s4 + $0x90] sm:$0xff]
      %v1757 = vld [vmem:[%s4 + $0x98] sm:$0xff]
      %v1758 = vld [vmem:[%s4 + $0xa0] sm:$0xff]
      %v1759 = vld [vmem:[%s4 + $0xa8] sm:$0xff]
      %v1760 = vld [vmem:[%s4 + $0xb0] sm:$0xff]
      %v1761 = vld [vmem:[%s4 + $0xb8] sm:$0xff]
      %v1762 = vld [vmem:[%s4 + $0xc0] sm:$0xff]
      %v1763 = vld [vmem:[%s4 + $0xc8] sm:$0xff]
      %v1764 = vld [vmem:[%s4 + $0xd0] sm:$0xff]
      %v1765 = vld [vmem:[%s4 + $0xd8] sm:$0xff]
      %v1766 = vld [vmem:[%s4 + $0xe0] sm:$0xff]
      %v1767 = vld [vmem:[%s4 + $0xe8] sm:$0xff]
      %v1768 = vld [vmem:[%s4 + $0xf0] sm:$0xff]
      %v1769 = vld [vmem:[%s4 + $0xf8] sm:$0xff]
      %v1770 = vld [vmem:[%s4 + $0x100] sm:$0xff]
      %v1771 = vld [vmem:[%s4 + $0x108] sm:$0xff]
      %v1772 = vld [vmem:[%s4 + $0x110] sm:$0xff]
      %v1773 = vld [vmem:[%s4 + $0x118] sm:$0xff]
      %v1774 = vld [vmem:[%s4 + $0x120] sm:$0xff]
      %v1775 = vld [vmem:[%s4 + $0x128] sm:$0xff]
      %1777 = vset.pattern.permute.xlu0 0
      %1778 = vperm.xlu0 %1777, %v1738
      %v1779 = vpop.permute.xlu0 %1778
      %1782 = vset.pattern.permute.xlu0 0
      %1783 = vperm.xlu0 %1782, %v1739
      %v1784 = vpop.permute.xlu0 %1783
      %1787 = vset.pattern.permute.xlu0 0
      %1788 = vperm.xlu0 %1787, %v1740
      %v1789 = vpop.permute.xlu0 %1788
      %1792 = vset.pattern.permute.xlu0 0
      %1793 = vperm.xlu0 %1792, %v1741
      %v1794 = vpop.permute.xlu0 %1793
      %1797 = vset.pattern.permute.xlu0 0
      %1798 = vperm.xlu0 %1797, %v1742
      %v1799 = vpop.permute.xlu0 %1798
      %1802 = vset.pattern.permute.xlu0 0
      %1803 = vperm.xlu0 %1802, %v1743
      %v1804 = vpop.permute.xlu0 %1803
      %1807 = vset.pattern.permute.xlu0 0
      %1808 = vperm.xlu0 %1807, %v1744
      %v1809 = vpop.permute.xlu0 %1808
      %1812 = vset.pattern.permute.xlu0 0
      %1813 = vperm.xlu0 %1812, %v1745
      %v1814 = vpop.permute.xlu0 %1813
      %1817 = vset.pattern.permute.xlu0 0
      %1818 = vperm.xlu0 %1817, %v1746
      %v1819 = vpop.permute.xlu0 %1818
      %1822 = vset.pattern.permute.xlu0 0
      %1823 = vperm.xlu0 %1822, %v1747
      %v1824 = vpop.permute.xlu0 %1823
      %1827 = vset.pattern.permute.xlu0 0
      %1828 = vperm.xlu0 %1827, %v1748
      %v1829 = vpop.permute.xlu0 %1828
      %1832 = vset.pattern.permute.xlu0 0
      %1833 = vperm.xlu0 %1832, %v1749
      %v1834 = vpop.permute.xlu0 %1833
      %1837 = vset.pattern.permute.xlu0 0
      %1838 = vperm.xlu0 %1837, %v1750
      %v1839 = vpop.permute.xlu0 %1838
      %1842 = vset.pattern.permute.xlu0 0
      %1843 = vperm.xlu0 %1842, %v1751
      %v1844 = vpop.permute.xlu0 %1843
      %1847 = vset.pattern.permute.xlu0 0
      %1848 = vperm.xlu0 %1847, %v1752
      %v1849 = vpop.permute.xlu0 %1848
      %1852 = vset.pattern.permute.xlu0 0
      %1853 = vperm.xlu0 %1852, %v1753
      %v1854 = vpop.permute.xlu0 %1853
      %1857 = vset.pattern.permute.xlu0 0
      %1858 = vperm.xlu0 %1857, %v1754
      %v1859 = vpop.permute.xlu0 %1858
      %1862 = vset.pattern.permute.xlu0 0
      %1863 = vperm.xlu0 %1862, %v1755
      %v1864 = vpop.permute.xlu0 %1863
      %1867 = vset.pattern.permute.xlu0 0
      %1868 = vperm.xlu0 %1867, %v1756
      %v1869 = vpop.permute.xlu0 %1868
      %1872 = vset.pattern.permute.xlu0 0
      %1873 = vperm.xlu0 %1872, %v1757
      %v1874 = vpop.permute.xlu0 %1873
      %1877 = vset.pattern.permute.xlu0 0
      %1878 = vperm.xlu0 %1877, %v1758
      %v1879 = vpop.permute.xlu0 %1878
      %1882 = vset.pattern.permute.xlu0 0
      %1883 = vperm.xlu0 %1882, %v1759
      %v1884 = vpop.permute.xlu0 %1883
      %1887 = vset.pattern.permute.xlu0 0
      %1888 = vperm.xlu0 %1887, %v1760
      %v1889 = vpop.permute.xlu0 %1888
      %1892 = vset.pattern.permute.xlu0 0
      %1893 = vperm.xlu0 %1892, %v1761
      %v1894 = vpop.permute.xlu0 %1893
      %1897 = vset.pattern.permute.xlu0 0
      %1898 = vperm.xlu0 %1897, %v1762
      %v1899 = vpop.permute.xlu0 %1898
      %1902 = vset.pattern.permute.xlu0 0
      %1903 = vperm.xlu0 %1902, %v1763
      %v1904 = vpop.permute.xlu0 %1903
      %1907 = vset.pattern.permute.xlu0 0
      %1908 = vperm.xlu0 %1907, %v1764
      %v1909 = vpop.permute.xlu0 %1908
      %1912 = vset.pattern.permute.xlu0 0
      %1913 = vperm.xlu0 %1912, %v1765
      %v1914 = vpop.permute.xlu0 %1913
      %1917 = vset.pattern.permute.xlu0 0
      %1918 = vperm.xlu0 %1917, %v1766
      %v1919 = vpop.permute.xlu0 %1918
      %1922 = vset.pattern.permute.xlu0 0
      %1923 = vperm.xlu0 %1922, %v1767
      %v1924 = vpop.permute.xlu0 %1923
      %1927 = vset.pattern.permute.xlu0 0
      %1928 = vperm.xlu0 %1927, %v1768
      %v1929 = vpop.permute.xlu0 %1928
      %1932 = vset.pattern.permute.xlu0 0
      %1933 = vperm.xlu0 %1932, %v1769
      %v1934 = vpop.permute.xlu0 %1933
      %1937 = vset.pattern.permute.xlu0 0
      %1938 = vperm.xlu0 %1937, %v1770
      %v1939 = vpop.permute.xlu0 %1938
      %1942 = vset.pattern.permute.xlu0 0
      %1943 = vperm.xlu0 %1942, %v1771
      %v1944 = vpop.permute.xlu0 %1943
      %1947 = vset.pattern.permute.xlu0 0
      %1948 = vperm.xlu0 %1947, %v1772
      %v1949 = vpop.permute.xlu0 %1948
      %1952 = vset.pattern.permute.xlu0 0
      %1953 = vperm.xlu0 %1952, %v1773
      %v1954 = vpop.permute.xlu0 %1953
      %1957 = vset.pattern.permute.xlu0 0
      %1958 = vperm.xlu0 %1957, %v1774
      %v1959 = vpop.permute.xlu0 %1958
      %1962 = vset.pattern.permute.xlu0 0
      %1963 = vperm.xlu0 %1962, %v1775
      %v1964 = vpop.permute.xlu0 %1963
      %v2042 = vunpack.c.l.b16 %v1662
      %v2043 = vunpack.c.h.b16 %v1662
      %v2044 = vunpack.c.l.b16 %v1663
      %v2045 = vunpack.c.h.b16 %v1663
      %v2046 = vunpack.c.l.b16 %v1664
      %v2047 = vunpack.c.h.b16 %v1664
      %v2048 = vunpack.c.l.b16 %v1665
      %v2049 = vunpack.c.h.b16 %v1665
      %v2050 = vunpack.c.l.b16 %v1666
      %v2051 = vunpack.c.h.b16 %v1666
      %v2052 = vunpack.c.l.b16 %v1667
      %v2053 = vunpack.c.h.b16 %v1667
      %v2054 = vunpack.c.l.b16 %v1668
      %v2055 = vunpack.c.h.b16 %v1668
      %v2056 = vunpack.c.l.b16 %v1669
      %v2057 = vunpack.c.h.b16 %v1669
      %v2058 = vunpack.c.l.b16 %v1670
      %v2059 = vunpack.c.h.b16 %v1670
      %v2060 = vunpack.c.l.b16 %v1671
      %v2061 = vunpack.c.h.b16 %v1671
      %v2062 = vunpack.c.l.b16 %v1672
      %v2063 = vunpack.c.h.b16 %v1672
      %v2064 = vunpack.c.l.b16 %v1673
      %v2065 = vunpack.c.h.b16 %v1673
      %v2066 = vunpack.c.l.b16 %v1674
      %v2067 = vunpack.c.h.b16 %v1674
      %v2068 = vunpack.c.l.b16 %v1675
      %v2069 = vunpack.c.h.b16 %v1675
      %v2070 = vunpack.c.l.b16 %v1676
      %v2071 = vunpack.c.h.b16 %v1676
      %v2072 = vunpack.c.l.b16 %v1677
      %v2073 = vunpack.c.h.b16 %v1677
      %v2074 = vunpack.c.l.b16 %v1678
      %v2075 = vunpack.c.h.b16 %v1678
      %v2076 = vunpack.c.l.b16 %v1679
      %v2077 = vunpack.c.h.b16 %v1679
      %v2078 = vunpack.c.l.b16 %v1680
      %v2079 = vunpack.c.h.b16 %v1680
      %v2080 = vunpack.c.l.b16 %v1681
      %v2081 = vunpack.c.h.b16 %v1681
      %v2082 = vunpack.c.l.b16 %v1682
      %v2083 = vunpack.c.h.b16 %v1682
      %v2084 = vunpack.c.l.b16 %v1683
      %v2085 = vunpack.c.h.b16 %v1683
      %v2086 = vunpack.c.l.b16 %v1684
      %v2087 = vunpack.c.h.b16 %v1684
      %v2088 = vunpack.c.l.b16 %v1685
      %v2089 = vunpack.c.h.b16 %v1685
      %v2090 = vunpack.c.l.b16 %v1686
      %v2091 = vunpack.c.h.b16 %v1686
      %v2092 = vunpack.c.l.b16 %v1687
      %v2093 = vunpack.c.h.b16 %v1687
      %v2094 = vunpack.c.l.b16 %v1688
      %v2095 = vunpack.c.h.b16 %v1688
      %v2096 = vunpack.c.l.b16 %v1689
      %v2097 = vunpack.c.h.b16 %v1689
      %v2098 = vunpack.c.l.b16 %v1690
      %v2099 = vunpack.c.h.b16 %v1690
      %v2100 = vunpack.c.l.b16 %v1691
      %v2101 = vunpack.c.h.b16 %v1691
      %v2102 = vunpack.c.l.b16 %v1692
      %v2103 = vunpack.c.h.b16 %v1692
      %v2104 = vunpack.c.l.b16 %v1693
      %v2105 = vunpack.c.h.b16 %v1693
      %v2106 = vunpack.c.l.b16 %v1694
      %v2107 = vunpack.c.h.b16 %v1694
      %v2108 = vunpack.c.l.b16 %v1695
      %v2109 = vunpack.c.h.b16 %v1695
      %v2110 = vunpack.c.l.b16 %v1696
      %v2111 = vunpack.c.h.b16 %v1696
      %v2112 = vunpack.c.l.b16 %v1697
      %v2113 = vunpack.c.h.b16 %v1697
      %v2114 = vunpack.c.l.b16 %v1698
      %v2115 = vunpack.c.h.b16 %v1698
      %v2116 = vunpack.c.l.b16 %v1699
      %v2117 = vunpack.c.h.b16 %v1699
      %v2118 = vunpack.c.l.b16 %v1700
      %v2119 = vunpack.c.h.b16 %v1700
      %v2120 = vunpack.c.l.b16 %v1701
      %v2121 = vunpack.c.h.b16 %v1701
      %v2122 = vunpack.c.l.b16 %v1702
      %v2123 = vunpack.c.h.b16 %v1702
      %v2124 = vunpack.c.l.b16 %v1703
      %v2125 = vunpack.c.h.b16 %v1703
      %v2126 = vunpack.c.l.b16 %v1704
      %v2127 = vunpack.c.h.b16 %v1704
      %v2128 = vunpack.c.l.b16 %v1705
      %v2129 = vunpack.c.h.b16 %v1705
      %v2130 = vunpack.c.l.b16 %v1706
      %v2131 = vunpack.c.h.b16 %v1706
      %v2132 = vunpack.c.l.b16 %v1707
      %v2133 = vunpack.c.h.b16 %v1707
      %v2134 = vunpack.c.l.b16 %v1708
      %v2135 = vunpack.c.h.b16 %v1708
      %v2136 = vunpack.c.l.b16 %v1709
      %v2137 = vunpack.c.h.b16 %v1709
      %v2138 = vunpack.c.l.b16 %v1710
      %v2139 = vunpack.c.h.b16 %v1710
      %v2140 = vunpack.c.l.b16 %v1711
      %v2141 = vunpack.c.h.b16 %v1711
      %v2142 = vunpack.c.l.b16 %v1712
      %v2143 = vunpack.c.h.b16 %v1712
      %v2144 = vunpack.c.l.b16 %v1713
      %v2145 = vunpack.c.h.b16 %v1713
      %v2146 = vunpack.c.l.b16 %v1714
      %v2147 = vunpack.c.h.b16 %v1714
      %v2148 = vunpack.c.l.b16 %v1715
      %v2149 = vunpack.c.h.b16 %v1715
      %v2150 = vunpack.c.l.b16 %v1716
      %v2151 = vunpack.c.h.b16 %v1716
      %v2152 = vunpack.c.l.b16 %v1717
      %v2153 = vunpack.c.h.b16 %v1717
      %v2154 = vunpack.c.l.b16 %v1718
      %v2155 = vunpack.c.h.b16 %v1718
      %v2156 = vunpack.c.l.b16 %v1719
      %v2157 = vunpack.c.h.b16 %v1719
      %v2158 = vunpack.c.l.b16 %v1720
      %v2159 = vunpack.c.h.b16 %v1720
      %v2160 = vunpack.c.l.b16 %v1721
      %v2161 = vunpack.c.h.b16 %v1721
      %v2162 = vunpack.c.l.b16 %v1722
      %v2163 = vunpack.c.h.b16 %v1722
      %v2164 = vunpack.c.l.b16 %v1723
      %v2165 = vunpack.c.h.b16 %v1723
      %v2166 = vunpack.c.l.b16 %v1724
      %v2167 = vunpack.c.h.b16 %v1724
      %v2168 = vunpack.c.l.b16 %v1725
      %v2169 = vunpack.c.h.b16 %v1725
      %v2170 = vunpack.c.l.b16 %v1726
      %v2171 = vunpack.c.h.b16 %v1726
      %v2172 = vunpack.c.l.b16 %v1727
      %v2173 = vunpack.c.h.b16 %v1727
      %v2174 = vunpack.c.l.b16 %v1728
      %v2175 = vunpack.c.h.b16 %v1728
      %v2176 = vunpack.c.l.b16 %v1729
      %v2177 = vunpack.c.h.b16 %v1729
      %v2178 = vunpack.c.l.b16 %v1730
      %v2179 = vunpack.c.h.b16 %v1730
      %v2180 = vunpack.c.l.b16 %v1731
      %v2181 = vunpack.c.h.b16 %v1731
      %v2182 = vunpack.c.l.b16 %v1732
      %v2183 = vunpack.c.h.b16 %v1732
      %v2184 = vunpack.c.l.b16 %v1733
      %v2185 = vunpack.c.h.b16 %v1733
      %v2186 = vunpack.c.l.b16 %v1734
      %v2187 = vunpack.c.h.b16 %v1734
      %v2188 = vunpack.c.l.b16 %v1735
      %v2189 = vunpack.c.h.b16 %v1735
      %v2190 = vunpack.c.l.b16 %v1736
      %v2191 = vunpack.c.h.b16 %v1736
      %v2192 = vunpack.c.l.b16 %v1737
      %v2193 = vunpack.c.h.b16 %v1737
      %v2194 = vpack.c.b16 %v2046, %v2042
      %v2195 = vpack.c.b16 %v2047, %v2043
      %v2196 = vpack.c.b16 %v2048, %v2044
      %v2197 = vpack.c.b16 %v2049, %v2045
      %v2198 = vpack.c.b16 %v2054, %v2050
      %v2199 = vpack.c.b16 %v2055, %v2051
      %v2200 = vpack.c.b16 %v2056, %v2052
      %v2201 = vpack.c.b16 %v2057, %v2053
      %v2202 = vpack.c.b16 %v2062, %v2058
      %v2203 = vpack.c.b16 %v2063, %v2059
      %v2204 = vpack.c.b16 %v2064, %v2060
      %v2205 = vpack.c.b16 %v2065, %v2061
      %v2206 = vpack.c.b16 %v2070, %v2066
      %v2207 = vpack.c.b16 %v2071, %v2067
      %v2208 = vpack.c.b16 %v2072, %v2068
      %v2209 = vpack.c.b16 %v2073, %v2069
      %v2210 = vpack.c.b16 %v2078, %v2074
      %v2211 = vpack.c.b16 %v2079, %v2075
      %v2212 = vpack.c.b16 %v2080, %v2076
      %v2213 = vpack.c.b16 %v2081, %v2077
      %v2214 = vpack.c.b16 %v2086, %v2082
      %v2215 = vpack.c.b16 %v2087, %v2083
      %v2216 = vpack.c.b16 %v2088, %v2084
      %v2217 = vpack.c.b16 %v2089, %v2085
      %v2218 = vpack.c.b16 %v2094, %v2090
      %v2219 = vpack.c.b16 %v2095, %v2091
      %v2220 = vpack.c.b16 %v2096, %v2092
      %v2221 = vpack.c.b16 %v2097, %v2093
      %v2222 = vpack.c.b16 %v2102, %v2098
      %v2223 = vpack.c.b16 %v2103, %v2099
      %v2224 = vpack.c.b16 %v2104, %v2100
      %v2225 = vpack.c.b16 %v2105, %v2101
      %v2226 = vpack.c.b16 %v2110, %v2106
      %v2227 = vpack.c.b16 %v2111, %v2107
      %v2228 = vpack.c.b16 %v2112, %v2108
      %v2229 = vpack.c.b16 %v2113, %v2109
      %v2230 = vpack.c.b16 %v2118, %v2114
      %v2231 = vpack.c.b16 %v2119, %v2115
      %v2232 = vpack.c.b16 %v2120, %v2116
      %v2233 = vpack.c.b16 %v2121, %v2117
      %v2234 = vpack.c.b16 %v2126, %v2122
      %v2235 = vpack.c.b16 %v2127, %v2123
      %v2236 = vpack.c.b16 %v2128, %v2124
      %v2237 = vpack.c.b16 %v2129, %v2125
      %v2238 = vpack.c.b16 %v2134, %v2130
      %v2239 = vpack.c.b16 %v2135, %v2131
      %v2240 = vpack.c.b16 %v2136, %v2132
      %v2241 = vpack.c.b16 %v2137, %v2133
      %v2242 = vpack.c.b16 %v2142, %v2138
      %v2243 = vpack.c.b16 %v2143, %v2139
      %v2244 = vpack.c.b16 %v2144, %v2140
      %v2245 = vpack.c.b16 %v2145, %v2141
      %v2246 = vpack.c.b16 %v2150, %v2146
      %v2247 = vpack.c.b16 %v2151, %v2147
      %v2248 = vpack.c.b16 %v2152, %v2148
      %v2249 = vpack.c.b16 %v2153, %v2149
      %v2250 = vpack.c.b16 %v2158, %v2154
      %v2251 = vpack.c.b16 %v2159, %v2155
      %v2252 = vpack.c.b16 %v2160, %v2156
      %v2253 = vpack.c.b16 %v2161, %v2157
      %v2254 = vpack.c.b16 %v2166, %v2162
      %v2255 = vpack.c.b16 %v2167, %v2163
      %v2256 = vpack.c.b16 %v2168, %v2164
      %v2257 = vpack.c.b16 %v2169, %v2165
      %v2258 = vpack.c.b16 %v2174, %v2170
      %v2259 = vpack.c.b16 %v2175, %v2171
      %v2260 = vpack.c.b16 %v2176, %v2172
      %v2261 = vpack.c.b16 %v2177, %v2173
      %v2262 = vpack.c.b16 %v2182, %v2178
      %v2263 = vpack.c.b16 %v2183, %v2179
      %v2264 = vpack.c.b16 %v2184, %v2180
      %v2265 = vpack.c.b16 %v2185, %v2181
      %v2266 = vpack.c.b16 %v2190, %v2186
      %v2267 = vpack.c.b16 %v2191, %v2187
      %v2268 = vpack.c.b16 %v2192, %v2188
      %v2269 = vpack.c.b16 %v2193, %v2189
      %vm2327 = vcmask 130048
      %v2329 = vsel %vm2327, %v2197, 0
      %v2332 = vsel %vm2327, %v2201, 0
      %v2335 = vsel %vm2327, %v2205, 0
      %v2338 = vsel %vm2327, %v2209, 0
      %v2341 = vsel %vm2327, %v2213, 0
      %v2344 = vsel %vm2327, %v2217, 0
      %v2347 = vsel %vm2327, %v2221, 0
      %v2350 = vsel %vm2327, %v2225, 0
      %v2353 = vsel %vm2327, %v2229, 0
      %v2356 = vsel %vm2327, %v2233, 0
      %v2359 = vsel %vm2327, %v2237, 0
      %v2362 = vsel %vm2327, %v2241, 0
      %v2365 = vsel %vm2327, %v2245, 0
      %v2368 = vsel %vm2327, %v2249, 0
      %v2371 = vsel %vm2327, %v2253, 0
      %v2374 = vsel %vm2327, %v2257, 0
      %v2377 = vsel %vm2327, %v2261, 0
      %v2380 = vsel %vm2327, %v2265, 0
      %v2383 = vsel %vm2327, %v2269, 0
      %2385 = vmatprep.subr.bf16.mxu0 %v1613
      %2386 = vmatpush1.bf16.msra.mxu0 %v1612
      %2387 = vmatprep.subr.bf16.mxu0 %v1615
      %2388 = vmatpush1.bf16.msra.mxu0 %v1614
      %2389 = vmatprep.subr.bf16.mxu0 %v1617
      %2390 = vmatpush1.bf16.msra.mxu0 %v1616
      %2391 = vmatprep.subr.bf16.mxu0 %v1619
      %2392 = vmatpush1.bf16.msra.mxu0 %v1618
      %2393 = vmatprep.subr.bf16.mxu0 %v1621
      %2394 = vmatpush1.bf16.msra.mxu0 %v1620
      %2395 = vmatprep.subr.bf16.mxu0 %v1623
      %2396 = vmatpush1.bf16.msra.mxu0 %v1622
      %2397 = vmatprep.subr.bf16.mxu0 %v1625
      %2398 = vmatpush1.bf16.msra.mxu0 %v1624
      %2399 = vmatprep.subr.bf16.mxu0 %v1627
      %2400 = vmatpush1.bf16.msra.mxu0 %v1626
      %2401 = vmatprep.subr.bf16.mxu0 %v1629
      %2402 = vmatpush1.bf16.msra.mxu0 %v1628
      %2403 = vmatprep.subr.bf16.mxu0 %v1631
      %2404 = vmatpush1.bf16.msra.mxu0 %v1630
      %2405 = vmatprep.subr.bf16.mxu0 %v1633
      %2406 = vmatpush1.bf16.msra.mxu0 %v1632
      %2407 = vmatprep.subr.bf16.mxu0 %v1635
      %2408 = vmatpush1.bf16.msra.mxu0 %v1634
      %2409 = vmatprep.subr.bf16.mxu0 %v1637
      %2410 = vmatpush1.bf16.msra.mxu0 %v1636
      %2411 = vmatprep.subr.bf16.mxu0 %v1639
      %2412 = vmatpush1.bf16.msra.mxu0 %v1638
      %2413 = vmatprep.subr.bf16.mxu0 %v1641
      %2414 = vmatpush1.bf16.msra.mxu0 %v1640
      %2415 = vmatprep.subr.bf16.mxu0 %v1643
      %2416 = vmatpush1.bf16.msra.mxu0 %v1642
      %2417 = vmatprep.mubr.bf16.mxu0 %v2195
      %2418 = vmatmul.mubr.bf16.gmra.mrb[0].mxu0 %v2194
      %v2419 = vpop.f32.mrb[0].mxu0
      %v2420 = vadd.f32 %v1779, %v2419
      %v2421 = vpop.f32.mrb[0].mxu0
      %v2422 = vadd.f32 %v1779, %v2421
      %v2423 = vpop.f32.mrb[0].mxu0
      %v2424 = vadd.f32 %v1784, %v2423
      %v2425 = vpop.f32.mrb[0].mxu0
      %v2426 = vadd.f32 %v1784, %v2425
      %2427 = vmatprep.mubr.bf16.mxu0 %v2199
      %2428 = vmatmul.mubr.bf16.gmra.mrb[0].mxu0 %v2198
      %v2429 = vpop.f32.mrb[0].mxu0
      %v2430 = vadd.f32 %v1789, %v2429
      %v2431 = vpop.f32.mrb[0].mxu0
      %v2432 = vadd.f32 %v1789, %v2431
      %v2433 = vpop.f32.mrb[0].mxu0
      %v2434 = vadd.f32 %v1794, %v2433
      %v2435 = vpop.f32.mrb[0].mxu0
      %v2436 = vadd.f32 %v1794, %v2435
      %2437 = vmatprep.mubr.bf16.mxu0 %v2203
      %2438 = vmatmul.mubr.bf16.gmra.mrb[0].mxu0 %v2202
      %v2439 = vpop.f32.mrb[0].mxu0
      %v2440 = vadd.f32 %v1799, %v2439
      %v2441 = vpop.f32.mrb[0].mxu0
      %v2442 = vadd.f32 %v1799, %v2441
      %v2443 = vpop.f32.mrb[0].mxu0
      %v2444 = vadd.f32 %v1804, %v2443
      %v2445 = vpop.f32.mrb[0].mxu0
      %v2446 = vadd.f32 %v1804, %v2445
      %2447 = vmatprep.mubr.bf16.mxu0 %v2207
      %2448 = vmatmul.mubr.bf16.gmra.mrb[0].mxu0 %v2206
      %v2449 = vpop.f32.mrb[0].mxu0
      %v2450 = vadd.f32 %v1809, %v2449
      %v2451 = vpop.f32.mrb[0].mxu0
      %v2452 = vadd.f32 %v1809, %v2451
      %v2453 = vpop.f32.mrb[0].mxu0
      %v2454 = vadd.f32 %v1814, %v2453
      %v2455 = vpop.f32.mrb[0].mxu0
      %v2456 = vadd.f32 %v1814, %v2455
      %2457 = vmatprep.mubr.bf16.mxu0 %v2211
      %2458 = vmatmul.mubr.bf16.gmra.mrb[0].mxu0 %v2210
      %v2459 = vpop.f32.mrb[0].mxu0
      %v2460 = vadd.f32 %v1819, %v2459
      %v2461 = vpop.f32.mrb[0].mxu0
      %v2462 = vadd.f32 %v1819, %v2461
      %v2463 = vpop.f32.mrb[0].mxu0
      %v2464 = vadd.f32 %v1824, %v2463
      %v2465 = vpop.f32.mrb[0].mxu0
      %v2466 = vadd.f32 %v1824, %v2465
      %2467 = vmatprep.mubr.bf16.mxu0 %v2215
      %2468 = vmatmul.mubr.bf16.gmra.mrb[0].mxu0 %v2214
      %v2469 = vpop.f32.mrb[0].mxu0
      %v2470 = vadd.f32 %v1829, %v2469
      %v2471 = vpop.f32.mrb[0].mxu0
      %v2472 = vadd.f32 %v1829, %v2471
      %v2473 = vpop.f32.mrb[0].mxu0
      %v2474 = vadd.f32 %v1834, %v2473
      %v2475 = vpop.f32.mrb[0].mxu0
      %v2476 = vadd.f32 %v1834, %v2475
      %2477 = vmatprep.mubr.bf16.mxu0 %v2219
      %2478 = vmatmul.mubr.bf16.gmra.mrb[0].mxu0 %v2218
      %v2479 = vpop.f32.mrb[0].mxu0
      %v2480 = vadd.f32 %v1839, %v2479
      %v2481 = vpop.f32.mrb[0].mxu0
      %v2482 = vadd.f32 %v1839, %v2481
      %v2483 = vpop.f32.mrb[0].mxu0
      %v2484 = vadd.f32 %v1844, %v2483
      %v2485 = vpop.f32.mrb[0].mxu0
      %v2486 = vadd.f32 %v1844, %v2485
      %2487 = vmatprep.mubr.bf16.mxu0 %v2223
      %2488 = vmatmul.mubr.bf16.gmra.mrb[0].mxu0 %v2222
      %v2489 = vpop.f32.mrb[0].mxu0
      %v2490 = vadd.f32 %v1849, %v2489
      %v2491 = vpop.f32.mrb[0].mxu0
      %v2492 = vadd.f32 %v1849, %v2491
      %v2493 = vpop.f32.mrb[0].mxu0
      %v2494 = vadd.f32 %v1854, %v2493
      %v2495 = vpop.f32.mrb[0].mxu0
      %v2496 = vadd.f32 %v1854, %v2495
      %2497 = vmatprep.mubr.bf16.mxu0 %v2227
      %2498 = vmatmul.mubr.bf16.gmra.mrb[0].mxu0 %v2226
      %v2499 = vpop.f32.mrb[0].mxu0
      %v2500 = vadd.f32 %v1859, %v2499
      %v2501 = vpop.f32.mrb[0].mxu0
      %v2502 = vadd.f32 %v1859, %v2501
      %v2503 = vpop.f32.mrb[0].mxu0
      %v2504 = vadd.f32 %v1864, %v2503
      %v2505 = vpop.f32.mrb[0].mxu0
      %v2506 = vadd.f32 %v1864, %v2505
      %2507 = vmatprep.mubr.bf16.mxu0 %v2231
      %2508 = vmatmul.mubr.bf16.gmra.mrb[0].mxu0 %v2230
      %v2509 = vpop.f32.mrb[0].mxu0
      %v2510 = vadd.f32 %v1869, %v2509
      %v2511 = vpop.f32.mrb[0].mxu0
      %v2512 = vadd.f32 %v1869, %v2511
      %v2513 = vpop.f32.mrb[0].mxu0
      %v2514 = vadd.f32 %v1874, %v2513
      %v2515 = vpop.f32.mrb[0].mxu0
      %v2516 = vadd.f32 %v1874, %v2515
      %2517 = vmatprep.mubr.bf16.mxu0 %v2235
      %2518 = vmatmul.mubr.bf16.gmra.mrb[0].mxu0 %v2234
      %v2519 = vpop.f32.mrb[0].mxu0
      %v2520 = vadd.f32 %v1879, %v2519
      %v2521 = vpop.f32.mrb[0].mxu0
      %v2522 = vadd.f32 %v1879, %v2521
      %v2523 = vpop.f32.mrb[0].mxu0
      %v2524 = vadd.f32 %v1884, %v2523
      %v2525 = vpop.f32.mrb[0].mxu0
      %v2526 = vadd.f32 %v1884, %v2525
      %2527 = vmatprep.mubr.bf16.mxu0 %v2239
      %2528 = vmatmul.mubr.bf16.gmra.mrb[0].mxu0 %v2238
      %v2529 = vpop.f32.mrb[0].mxu0
      %v2530 = vadd.f32 %v1889, %v2529
      %v2531 = vpop.f32.mrb[0].mxu0
      %v2532 = vadd.f32 %v1889, %v2531
      %v2533 = vpop.f32.mrb[0].mxu0
      %v2534 = vadd.f32 %v1894, %v2533
      %v2535 = vpop.f32.mrb[0].mxu0
      %v2536 = vadd.f32 %v1894, %v2535
      %2537 = vmatprep.mubr.bf16.mxu0 %v2243
      %2538 = vmatmul.mubr.bf16.gmra.mrb[0].mxu0 %v2242
      %v2539 = vpop.f32.mrb[0].mxu0
      %v2540 = vadd.f32 %v1899, %v2539
      %v2541 = vpop.f32.mrb[0].mxu0
      %v2542 = vadd.f32 %v1899, %v2541
      %v2543 = vpop.f32.mrb[0].mxu0
      %v2544 = vadd.f32 %v1904, %v2543
      %v2545 = vpop.f32.mrb[0].mxu0
      %v2546 = vadd.f32 %v1904, %v2545
      %2547 = vmatprep.mubr.bf16.mxu0 %v2247
      %2548 = vmatmul.mubr.bf16.gmra.mrb[0].mxu0 %v2246
      %v2549 = vpop.f32.mrb[0].mxu0
      %v2550 = vadd.f32 %v1909, %v2549
      %v2551 = vpop.f32.mrb[0].mxu0
      %v2552 = vadd.f32 %v1909, %v2551
      %v2553 = vpop.f32.mrb[0].mxu0
      %v2554 = vadd.f32 %v1914, %v2553
      %v2555 = vpop.f32.mrb[0].mxu0
      %v2556 = vadd.f32 %v1914, %v2555
      %2557 = vmatprep.mubr.bf16.mxu0 %v2251
      %2558 = vmatmul.mubr.bf16.gmra.mrb[0].mxu0 %v2250
      %v2559 = vpop.f32.mrb[0].mxu0
      %v2560 = vadd.f32 %v1919, %v2559
      %v2561 = vpop.f32.mrb[0].mxu0
      %v2562 = vadd.f32 %v1919, %v2561
      %v2563 = vpop.f32.mrb[0].mxu0
      %v2564 = vadd.f32 %v1924, %v2563
      %v2565 = vpop.f32.mrb[0].mxu0
      %v2566 = vadd.f32 %v1924, %v2565
      %2567 = vmatprep.mubr.bf16.mxu0 %v2255
      %2568 = vmatmul.mubr.bf16.gmra.mrb[0].mxu0 %v2254
      %v2569 = vpop.f32.mrb[0].mxu0
      %v2570 = vadd.f32 %v1929, %v2569
      %v2571 = vpop.f32.mrb[0].mxu0
      %v2572 = vadd.f32 %v1929, %v2571
      %v2573 = vpop.f32.mrb[0].mxu0
      %v2574 = vadd.f32 %v1934, %v2573
      %v2575 = vpop.f32.mrb[0].mxu0
      %v2576 = vadd.f32 %v1934, %v2575
      %2577 = vmatprep.mubr.bf16.mxu0 %v2259
      %2578 = vmatmul.mubr.bf16.gmra.mrb[0].mxu0 %v2258
      %v2579 = vpop.f32.mrb[0].mxu0
      %v2580 = vadd.f32 %v1939, %v2579
      %v2581 = vpop.f32.mrb[0].mxu0
      %v2582 = vadd.f32 %v1939, %v2581
      %v2583 = vpop.f32.mrb[0].mxu0
      %v2584 = vadd.f32 %v1944, %v2583
      %v2585 = vpop.f32.mrb[0].mxu0
      %v2586 = vadd.f32 %v1944, %v2585
      %2587 = vmatprep.mubr.bf16.mxu0 %v2263
      %2588 = vmatmul.mubr.bf16.gmra.mrb[0].mxu0 %v2262
      %v2589 = vpop.f32.mrb[0].mxu0
      %v2590 = vadd.f32 %v1949, %v2589
      %v2591 = vpop.f32.mrb[0].mxu0
      %v2592 = vadd.f32 %v1949, %v2591
      %v2593 = vpop.f32.mrb[0].mxu0
      %v2594 = vadd.f32 %v1954, %v2593
      %v2595 = vpop.f32.mrb[0].mxu0
      %v2596 = vadd.f32 %v1954, %v2595
      %2597 = vmatprep.mubr.bf16.mxu0 %v2267
      %2598 = vmatmul.mubr.bf16.gmra.mrb[0].mxu0 %v2266
      %v2599 = vpop.f32.mrb[0].mxu0
      %v2600 = vadd.f32 %v1959, %v2599
      %v2601 = vpop.f32.mrb[0].mxu0
      %v2602 = vadd.f32 %v1959, %v2601
      %v2603 = vpop.f32.mrb[0].mxu0
      %v2604 = vadd.f32 %v1964, %v2603
      %v2605 = vpop.f32.mrb[0].mxu0
      %v2606 = vadd.f32 %v1964, %v2605
      %2607 = vdwg.mxu0
      %2608 = vmatprep.subr.bf16.mxu0 %v1645
      %2609 = vmatpush1.bf16.msra.mxu0 %v1644
      %2610 = vmatprep.subr.bf16.mxu0 %v1647
      %2611 = vmatpush1.bf16.msra.mxu0 %v1646
      %2612 = vmatprep.subr.bf16.mxu0 %v1649
      %2613 = vmatpush1.bf16.msra.mxu0 %v1648
      %2614 = vmatprep.subr.bf16.mxu0 %v1651
      %2615 = vmatpush1.bf16.msra.mxu0 %v1650
      %2616 = vmatprep.subr.bf16.mxu0 %v1653
      %2617 = vmatpush1.bf16.msra.mxu0 %v1652
      %2618 = vmatprep.subr.bf16.mxu0 %v1655
      %2619 = vmatpush1.bf16.msra.mxu0 %v1654
      %2620 = vmatprep.subr.bf16.mxu0 %v1657
      %2621 = vmatpush1.bf16.msra.mxu0 %v1656
      %2622 = vmatprep.subr.bf16.mxu0 %v1659
      %2623 = vmatpush1.bf16.msra.mxu0 %v1658
      %2624 = vmatprep.subr.bf16.mxu0 %v1661
      %2625 = vmatpush1.bf16.msra.mxu0 %v1660
      %2626 = vmatprep.subr.bf16.mxu0 0
      %2627 = vmatpush1.bf16.msra.mxu0 0
      %2628 = vmatprep.subr.bf16.mxu0 0
      %2629 = vmatpush1.bf16.msra.mxu0 0
      %2630 = vmatprep.subr.bf16.mxu0 0
      %2631 = vmatpush1.bf16.msra.mxu0 0
      %2632 = vmatprep.subr.bf16.mxu0 0
      %2633 = vmatpush1.bf16.msra.mxu0 0
      %2634 = vmatprep.subr.bf16.mxu0 0
      %2635 = vmatpush1.bf16.msra.mxu0 0
      %2636 = vmatprep.subr.bf16.mxu0 0
      %2637 = vmatpush1.bf16.msra.mxu0 0
      %2638 = vmatprep.subr.bf16.mxu0 0
      %2639 = vmatpush1.bf16.msra.mxu0 0
      %2640 = vmatprep.mubr.bf16.mxu0 %v2329
      %2641 = vmatmul.mubr.bf16.gmra.mrb[0].mxu0 %v2196
      %v2642 = vpop.f32.mrb[0].mxu0
      %v2643 = vadd.f32 %v2420, %v2642
      %v2644 = vpop.f32.mrb[0].mxu0
      %v2645 = vadd.f32 %v2422, %v2644
      %v2646 = vpop.f32.mrb[0].mxu0
      %v2647 = vadd.f32 %v2424, %v2646
      %v2648 = vpop.f32.mrb[0].mxu0
      %v2649 = vadd.f32 %v2426, %v2648
      %2650 = vmatprep.mubr.bf16.mxu0 %v2332
      %2651 = vmatmul.mubr.bf16.gmra.mrb[0].mxu0 %v2200
      %v2652 = vpop.f32.mrb[0].mxu0
      %v2653 = vadd.f32 %v2430, %v2652
      %v2654 = vpop.f32.mrb[0].mxu0
      %v2655 = vadd.f32 %v2432, %v2654
      %v2656 = vpop.f32.mrb[0].mxu0
      %v2657 = vadd.f32 %v2434, %v2656
      %v2658 = vpop.f32.mrb[0].mxu0
      %v2659 = vadd.f32 %v2436, %v2658
      %2660 = vmatprep.mubr.bf16.mxu0 %v2335
      %2661 = vmatmul.mubr.bf16.gmra.mrb[0].mxu0 %v2204
      %v2662 = vpop.f32.mrb[0].mxu0
      %v2663 = vadd.f32 %v2440, %v2662
      %v2664 = vpop.f32.mrb[0].mxu0
      %v2665 = vadd.f32 %v2442, %v2664
      %v2666 = vpop.f32.mrb[0].mxu0
      %v2667 = vadd.f32 %v2444, %v2666
      %v2668 = vpop.f32.mrb[0].mxu0
      %v2669 = vadd.f32 %v2446, %v2668
      %2670 = vmatprep.mubr.bf16.mxu0 %v2338
      %2671 = vmatmul.mubr.bf16.gmra.mrb[0].mxu0 %v2208
      %v2672 = vpop.f32.mrb[0].mxu0
      %v2673 = vadd.f32 %v2450, %v2672
      %v2674 = vpop.f32.mrb[0].mxu0
      %v2675 = vadd.f32 %v2452, %v2674
      %v2676 = vpop.f32.mrb[0].mxu0
      %v2677 = vadd.f32 %v2454, %v2676
      %v2678 = vpop.f32.mrb[0].mxu0
      %v2679 = vadd.f32 %v2456, %v2678
      %2680 = vmatprep.mubr.bf16.mxu0 %v2341
      %2681 = vmatmul.mubr.bf16.gmra.mrb[0].mxu0 %v2212
      %v2682 = vpop.f32.mrb[0].mxu0
      %v2683 = vadd.f32 %v2460, %v2682
      %v2684 = vpop.f32.mrb[0].mxu0
      %v2685 = vadd.f32 %v2462, %v2684
      %v2686 = vpop.f32.mrb[0].mxu0
      %v2687 = vadd.f32 %v2464, %v2686
      %v2688 = vpop.f32.mrb[0].mxu0
      %v2689 = vadd.f32 %v2466, %v2688
      %2690 = vmatprep.mubr.bf16.mxu0 %v2344
      %2691 = vmatmul.mubr.bf16.gmra.mrb[0].mxu0 %v2216
      %v2692 = vpop.f32.mrb[0].mxu0
      %v2693 = vadd.f32 %v2470, %v2692
      %v2694 = vpop.f32.mrb[0].mxu0
      %v2695 = vadd.f32 %v2472, %v2694
      %v2696 = vpop.f32.mrb[0].mxu0
      %v2697 = vadd.f32 %v2474, %v2696
      %v2698 = vpop.f32.mrb[0].mxu0
      %v2699 = vadd.f32 %v2476, %v2698
      %2700 = vmatprep.mubr.bf16.mxu0 %v2347
      %2701 = vmatmul.mubr.bf16.gmra.mrb[0].mxu0 %v2220
      %v2702 = vpop.f32.mrb[0].mxu0
      %v2703 = vadd.f32 %v2480, %v2702
      %v2704 = vpop.f32.mrb[0].mxu0
      %v2705 = vadd.f32 %v2482, %v2704
      %v2706 = vpop.f32.mrb[0].mxu0
      %v2707 = vadd.f32 %v2484, %v2706
      %v2708 = vpop.f32.mrb[0].mxu0
      %v2709 = vadd.f32 %v2486, %v2708
      %2710 = vmatprep.mubr.bf16.mxu0 %v2350
      %2711 = vmatmul.mubr.bf16.gmra.mrb[0].mxu0 %v2224
      %v2712 = vpop.f32.mrb[0].mxu0
      %v2713 = vadd.f32 %v2490, %v2712
      %v2714 = vpop.f32.mrb[0].mxu0
      %v2715 = vadd.f32 %v2492, %v2714
      %v2716 = vpop.f32.mrb[0].mxu0
      %v2717 = vadd.f32 %v2494, %v2716
      %v2718 = vpop.f32.mrb[0].mxu0
      %v2719 = vadd.f32 %v2496, %v2718
      %2720 = vmatprep.mubr.bf16.mxu0 %v2353
      %2721 = vmatmul.mubr.bf16.gmra.mrb[0].mxu0 %v2228
      %v2722 = vpop.f32.mrb[0].mxu0
      %v2723 = vadd.f32 %v2500, %v2722
      %v2724 = vpop.f32.mrb[0].mxu0
      %v2725 = vadd.f32 %v2502, %v2724
      %v2726 = vpop.f32.mrb[0].mxu0
      %v2727 = vadd.f32 %v2504, %v2726
      %v2728 = vpop.f32.mrb[0].mxu0
      %v2729 = vadd.f32 %v2506, %v2728
      %2730 = vmatprep.mubr.bf16.mxu0 %v2356
      %2731 = vmatmul.mubr.bf16.gmra.mrb[0].mxu0 %v2232
      %v2732 = vpop.f32.mrb[0].mxu0
      %v2733 = vadd.f32 %v2510, %v2732
      %v2734 = vpop.f32.mrb[0].mxu0
      %v2735 = vadd.f32 %v2512, %v2734
      %v2736 = vpop.f32.mrb[0].mxu0
      %v2737 = vadd.f32 %v2514, %v2736
      %v2738 = vpop.f32.mrb[0].mxu0
      %v2739 = vadd.f32 %v2516, %v2738
      %2740 = vmatprep.mubr.bf16.mxu0 %v2359
      %2741 = vmatmul.mubr.bf16.gmra.mrb[0].mxu0 %v2236
      %v2742 = vpop.f32.mrb[0].mxu0
      %v2743 = vadd.f32 %v2520, %v2742
      %v2744 = vpop.f32.mrb[0].mxu0
      %v2745 = vadd.f32 %v2522, %v2744
      %v2746 = vpop.f32.mrb[0].mxu0
      %v2747 = vadd.f32 %v2524, %v2746
      %v2748 = vpop.f32.mrb[0].mxu0
      %v2749 = vadd.f32 %v2526, %v2748
      %2750 = vmatprep.mubr.bf16.mxu0 %v2362
      %2751 = vmatmul.mubr.bf16.gmra.mrb[0].mxu0 %v2240
      %v2752 = vpop.f32.mrb[0].mxu0
      %v2753 = vadd.f32 %v2530, %v2752
      %v2754 = vpop.f32.mrb[0].mxu0
      %v2755 = vadd.f32 %v2532, %v2754
      %v2756 = vpop.f32.mrb[0].mxu0
      %v2757 = vadd.f32 %v2534, %v2756
      %v2758 = vpop.f32.mrb[0].mxu0
      %v2759 = vadd.f32 %v2536, %v2758
      %2760 = vmatprep.mubr.bf16.mxu0 %v2365
      %2761 = vmatmul.mubr.bf16.gmra.mrb[0].mxu0 %v2244
      %v2762 = vpop.f32.mrb[0].mxu0
      %v2763 = vadd.f32 %v2540, %v2762
      %v2764 = vpop.f32.mrb[0].mxu0
      %v2765 = vadd.f32 %v2542, %v2764
      %v2766 = vpop.f32.mrb[0].mxu0
      %v2767 = vadd.f32 %v2544, %v2766
      %v2768 = vpop.f32.mrb[0].mxu0
      %v2769 = vadd.f32 %v2546, %v2768
      %2770 = vmatprep.mubr.bf16.mxu0 %v2368
      %2771 = vmatmul.mubr.bf16.gmra.mrb[0].mxu0 %v2248
      %v2772 = vpop.f32.mrb[0].mxu0
      %v2773 = vadd.f32 %v2550, %v2772
      %v2774 = vpop.f32.mrb[0].mxu0
      %v2775 = vadd.f32 %v2552, %v2774
      %v2776 = vpop.f32.mrb[0].mxu0
      %v2777 = vadd.f32 %v2554, %v2776
      %v2778 = vpop.f32.mrb[0].mxu0
      %v2779 = vadd.f32 %v2556, %v2778
      %2780 = vmatprep.mubr.bf16.mxu0 %v2371
      %2781 = vmatmul.mubr.bf16.gmra.mrb[0].mxu0 %v2252
      %v2782 = vpop.f32.mrb[0].mxu0
      %v2783 = vadd.f32 %v2560, %v2782
      %v2784 = vpop.f32.mrb[0].mxu0
      %v2785 = vadd.f32 %v2562, %v2784
      %v2786 = vpop.f32.mrb[0].mxu0
      %v2787 = vadd.f32 %v2564, %v2786
      %v2788 = vpop.f32.mrb[0].mxu0
      %v2789 = vadd.f32 %v2566, %v2788
      %2790 = vmatprep.mubr.bf16.mxu0 %v2374
      %2791 = vmatmul.mubr.bf16.gmra.mrb[0].mxu0 %v2256
      %v2792 = vpop.f32.mrb[0].mxu0
      %v2793 = vadd.f32 %v2570, %v2792
      %v2794 = vpop.f32.mrb[0].mxu0
      %v2795 = vadd.f32 %v2572, %v2794
      %v2796 = vpop.f32.mrb[0].mxu0
      %v2797 = vadd.f32 %v2574, %v2796
      %v2798 = vpop.f32.mrb[0].mxu0
      %v2799 = vadd.f32 %v2576, %v2798
      %2800 = vmatprep.mubr.bf16.mxu0 %v2377
      %2801 = vmatmul.mubr.bf16.gmra.mrb[0].mxu0 %v2260
      %v2802 = vpop.f32.mrb[0].mxu0
      %v2803 = vadd.f32 %v2580, %v2802
      %v2804 = vpop.f32.mrb[0].mxu0
      %v2805 = vadd.f32 %v2582, %v2804
      %v2806 = vpop.f32.mrb[0].mxu0
      %v2807 = vadd.f32 %v2584, %v2806
      %v2808 = vpop.f32.mrb[0].mxu0
      %v2809 = vadd.f32 %v2586, %v2808
      %2810 = vmatprep.mubr.bf16.mxu0 %v2380
      %2811 = vmatmul.mubr.bf16.gmra.mrb[0].mxu0 %v2264
      %v2812 = vpop.f32.mrb[0].mxu0
      %v2813 = vadd.f32 %v2590, %v2812
      %v2814 = vpop.f32.mrb[0].mxu0
      %v2815 = vadd.f32 %v2592, %v2814
      %v2816 = vpop.f32.mrb[0].mxu0
      %v2817 = vadd.f32 %v2594, %v2816
      %v2818 = vpop.f32.mrb[0].mxu0
      %v2819 = vadd.f32 %v2596, %v2818
      %2820 = vmatprep.mubr.bf16.mxu0 %v2383
      %2821 = vmatmul.mubr.bf16.gmra.mrb[0].mxu0 %v2268
      %v2822 = vpop.f32.mrb[0].mxu0
      %v2823 = vadd.f32 %v2600, %v2822
      %v2824 = vpop.f32.mrb[0].mxu0
      %v2825 = vadd.f32 %v2602, %v2824
      %v2826 = vpop.f32.mrb[0].mxu0
      %v2827 = vadd.f32 %v2604, %v2826
      %v2828 = vpop.f32.mrb[0].mxu0
      %v2829 = vadd.f32 %v2606, %v2828
      %2830 = vdwg.mxu0
      %v2831 = vmul.f32 %v2643, 0.5
      %v2832 = vmul.f32 %v2645, 0.5
      %v2833 = vmul.f32 %v2647, 0.5
      %v2834 = vmul.f32 %v2649, 0.5
      %v2835 = vmul.f32 %v2653, 0.5
      %v2836 = vmul.f32 %v2655, 0.5
      %v2837 = vmul.f32 %v2657, 0.5
      %v2838 = vmul.f32 %v2659, 0.5
      %v2839 = vmul.f32 %v2663, 0.5
      %v2840 = vmul.f32 %v2665, 0.5
      %v2841 = vmul.f32 %v2667, 0.5
      %v2842 = vmul.f32 %v2669, 0.5
      %v2843 = vmul.f32 %v2673, 0.5
      %v2844 = vmul.f32 %v2675, 0.5
      %v2845 = vmul.f32 %v2677, 0.5
      %v2846 = vmul.f32 %v2679, 0.5
      %v2847 = vmul.f32 %v2683, 0.5
      %v2848 = vmul.f32 %v2685, 0.5
      %v2849 = vmul.f32 %v2687, 0.5
      %v2850 = vmul.f32 %v2689, 0.5
      %v2851 = vmul.f32 %v2693, 0.5
      %v2852 = vmul.f32 %v2695, 0.5
      %v2853 = vmul.f32 %v2697, 0.5
      %v2854 = vmul.f32 %v2699, 0.5
      %v2855 = vmul.f32 %v2703, 0.5
      %v2856 = vmul.f32 %v2705, 0.5
      %v2857 = vmul.f32 %v2707, 0.5
      %v2858 = vmul.f32 %v2709, 0.5
      %v2859 = vmul.f32 %v2713, 0.5
      %v2860 = vmul.f32 %v2715, 0.5
      %v2861 = vmul.f32 %v2717, 0.5
      %v2862 = vmul.f32 %v2719, 0.5
      %v2863 = vmul.f32 %v2723, 0.5
      %v2864 = vmul.f32 %v2725, 0.5
      %v2865 = vmul.f32 %v2727, 0.5
      %v2866 = vmul.f32 %v2729, 0.5
      %v2867 = vmul.f32 %v2733, 0.5
      %v2868 = vmul.f32 %v2735, 0.5
      %v2869 = vmul.f32 %v2737, 0.5
      %v2870 = vmul.f32 %v2739, 0.5
      %v2871 = vmul.f32 %v2743, 0.5
      %v2872 = vmul.f32 %v2745, 0.5
      %v2873 = vmul.f32 %v2747, 0.5
      %v2874 = vmul.f32 %v2749, 0.5
      %v2875 = vmul.f32 %v2753, 0.5
      %v2876 = vmul.f32 %v2755, 0.5
      %v2877 = vmul.f32 %v2757, 0.5
      %v2878 = vmul.f32 %v2759, 0.5
      %v2879 = vmul.f32 %v2763, 0.5
      %v2880 = vmul.f32 %v2765, 0.5
      %v2881 = vmul.f32 %v2767, 0.5
      %v2882 = vmul.f32 %v2769, 0.5
      %v2883 = vmul.f32 %v2773, 0.5
      %v2884 = vmul.f32 %v2775, 0.5
      %v2885 = vmul.f32 %v2777, 0.5
      %v2886 = vmul.f32 %v2779, 0.5
      %v2887 = vmul.f32 %v2783, 0.5
      %v2888 = vmul.f32 %v2785, 0.5
      %v2889 = vmul.f32 %v2787, 0.5
      %v2890 = vmul.f32 %v2789, 0.5
      %v2891 = vmul.f32 %v2793, 0.5
      %v2892 = vmul.f32 %v2795, 0.5
      %v2893 = vmul.f32 %v2797, 0.5
      %v2894 = vmul.f32 %v2799, 0.5
      %v2895 = vmul.f32 %v2803, 0.5
      %v2896 = vmul.f32 %v2805, 0.5
      %v2897 = vmul.f32 %v2807, 0.5
      %v2898 = vmul.f32 %v2809, 0.5
      %v2899 = vmul.f32 %v2813, 0.5
      %v2900 = vmul.f32 %v2815, 0.5
      %v2901 = vmul.f32 %v2817, 0.5
      %v2902 = vmul.f32 %v2819, 0.5
      %v2903 = vmul.f32 %v2823, 0.5
      %v2904 = vmul.f32 %v2825, 0.5
      %v2905 = vmul.f32 %v2827, 0.5
      %v2906 = vmul.f32 %v2829, 0.5
      %v2907 = vtanh.pop %v2831
      %v2908 = vtanh.pop %v2832
      %v2909 = vtanh.pop %v2833
      %v2910 = vtanh.pop %v2834
      %v2911 = vtanh.pop %v2835
      %v2912 = vtanh.pop %v2836
      %v2913 = vtanh.pop %v2837
      %v2914 = vtanh.pop %v2838
      %v2915 = vtanh.pop %v2839
      %v2916 = vtanh.pop %v2840
      %v2917 = vtanh.pop %v2841
      %v2918 = vtanh.pop %v2842
      %v2919 = vtanh.pop %v2843
      %v2920 = vtanh.pop %v2844
      %v2921 = vtanh.pop %v2845
      %v2922 = vtanh.pop %v2846
      %v2923 = vtanh.pop %v2847
      %v2924 = vtanh.pop %v2848
      %v2925 = vtanh.pop %v2849
      %v2926 = vtanh.pop %v2850
      %v2927 = vtanh.pop %v2851
      %v2928 = vtanh.pop %v2852
      %v2929 = vtanh.pop %v2853
      %v2930 = vtanh.pop %v2854
      %v2931 = vtanh.pop %v2855
      %v2932 = vtanh.pop %v2856
      %v2933 = vtanh.pop %v2857
      %v2934 = vtanh.pop %v2858
      %v2935 = vtanh.pop %v2859
      %v2936 = vtanh.pop %v2860
      %v2937 = vtanh.pop %v2861
      %v2938 = vtanh.pop %v2862
      %v2939 = vtanh.pop %v2863
      %v2940 = vtanh.pop %v2864
      %v2941 = vtanh.pop %v2865
      %v2942 = vtanh.pop %v2866
      %v2943 = vtanh.pop %v2867
      %v2944 = vtanh.pop %v2868
      %v2945 = vtanh.pop %v2869
      %v2946 = vtanh.pop %v2870
      %v2947 = vtanh.pop %v2871
      %v2948 = vtanh.pop %v2872
      %v2949 = vtanh.pop %v2873
      %v2950 = vtanh.pop %v2874
      %v2951 = vtanh.pop %v2875
      %v2952 = vtanh.pop %v2876
      %v2953 = vtanh.pop %v2877
      %v2954 = vtanh.pop %v2878
      %v2955 = vtanh.pop %v2879
      %v2956 = vtanh.pop %v2880
      %v2957 = vtanh.pop %v2881
      %v2958 = vtanh.pop %v2882
      %v2959 = vtanh.pop %v2883
      %v2960 = vtanh.pop %v2884
      %v2961 = vtanh.pop %v2885
      %v2962 = vtanh.pop %v2886
      %v2963 = vtanh.pop %v2887
      %v2964 = vtanh.pop %v2888
      %v2965 = vtanh.pop %v2889
      %v2966 = vtanh.pop %v2890
      %v2967 = vtanh.pop %v2891
      %v2968 = vtanh.pop %v2892
      %v2969 = vtanh.pop %v2893
      %v2970 = vtanh.pop %v2894
      %v2971 = vtanh.pop %v2895
      %v2972 = vtanh.pop %v2896
      %v2973 = vtanh.pop %v2897
      %v2974 = vtanh.pop %v2898
      %v2975 = vtanh.pop %v2899
      %v2976 = vtanh.pop %v2900
      %v2977 = vtanh.pop %v2901
      %v2978 = vtanh.pop %v2902
      %v2979 = vtanh.pop %v2903
      %v2980 = vtanh.pop %v2904
      %v2981 = vtanh.pop %v2905
      %v2982 = vtanh.pop %v2906
      %v2983 = vmul.f32 %v2907, 0.5
      %v2984 = vmul.f32 %v2908, 0.5
      %v2985 = vmul.f32 %v2909, 0.5
      %v2986 = vmul.f32 %v2910, 0.5
      %v2987 = vmul.f32 %v2911, 0.5
      %v2988 = vmul.f32 %v2912, 0.5
      %v2989 = vmul.f32 %v2913, 0.5
      %v2990 = vmul.f32 %v2914, 0.5
      %v2991 = vmul.f32 %v2915, 0.5
      %v2992 = vmul.f32 %v2916, 0.5
      %v2993 = vmul.f32 %v2917, 0.5
      %v2994 = vmul.f32 %v2918, 0.5
      %v2995 = vmul.f32 %v2919, 0.5
      %v2996 = vmul.f32 %v2920, 0.5
      %v2997 = vmul.f32 %v2921, 0.5
      %v2998 = vmul.f32 %v2922, 0.5
      %v2999 = vmul.f32 %v2923, 0.5
      %v3000 = vmul.f32 %v2924, 0.5
      %v3001 = vmul.f32 %v2925, 0.5
      %v3002 = vmul.f32 %v2926, 0.5
      %v3003 = vmul.f32 %v2927, 0.5
      %v3004 = vmul.f32 %v2928, 0.5
      %v3005 = vmul.f32 %v2929, 0.5
      %v3006 = vmul.f32 %v2930, 0.5
      %v3007 = vmul.f32 %v2931, 0.5
      %v3008 = vmul.f32 %v2932, 0.5
      %v3009 = vmul.f32 %v2933, 0.5
      %v3010 = vmul.f32 %v2934, 0.5
      %v3011 = vmul.f32 %v2935, 0.5
      %v3012 = vmul.f32 %v2936, 0.5
      %v3013 = vmul.f32 %v2937, 0.5
      %v3014 = vmul.f32 %v2938, 0.5
      %v3015 = vmul.f32 %v2939, 0.5
      %v3016 = vmul.f32 %v2940, 0.5
      %v3017 = vmul.f32 %v2941, 0.5
      %v3018 = vmul.f32 %v2942, 0.5
      %v3019 = vmul.f32 %v2943, 0.5
      %v3020 = vmul.f32 %v2944, 0.5
      %v3021 = vmul.f32 %v2945, 0.5
      %v3022 = vmul.f32 %v2946, 0.5
      %v3023 = vmul.f32 %v2947, 0.5
      %v3024 = vmul.f32 %v2948, 0.5
      %v3025 = vmul.f32 %v2949, 0.5
      %v3026 = vmul.f32 %v2950, 0.5
      %v3027 = vmul.f32 %v2951, 0.5
      %v3028 = vmul.f32 %v2952, 0.5
      %v3029 = vmul.f32 %v2953, 0.5
      %v3030 = vmul.f32 %v2954, 0.5
      %v3031 = vmul.f32 %v2955, 0.5
      %v3032 = vmul.f32 %v2956, 0.5
      %v3033 = vmul.f32 %v2957, 0.5
      %v3034 = vmul.f32 %v2958, 0.5
      %v3035 = vmul.f32 %v2959, 0.5
      %v3036 = vmul.f32 %v2960, 0.5
      %v3037 = vmul.f32 %v2961, 0.5
      %v3038 = vmul.f32 %v2962, 0.5
      %v3039 = vmul.f32 %v2963, 0.5
      %v3040 = vmul.f32 %v2964, 0.5
      %v3041 = vmul.f32 %v2965, 0.5
      %v3042 = vmul.f32 %v2966, 0.5
      %v3043 = vmul.f32 %v2967, 0.5
      %v3044 = vmul.f32 %v2968, 0.5
      %v3045 = vmul.f32 %v2969, 0.5
      %v3046 = vmul.f32 %v2970, 0.5
      %v3047 = vmul.f32 %v2971, 0.5
      %v3048 = vmul.f32 %v2972, 0.5
      %v3049 = vmul.f32 %v2973, 0.5
      %v3050 = vmul.f32 %v2974, 0.5
      %v3051 = vmul.f32 %v2975, 0.5
      %v3052 = vmul.f32 %v2976, 0.5
      %v3053 = vmul.f32 %v2977, 0.5
      %v3054 = vmul.f32 %v2978, 0.5
      %v3055 = vmul.f32 %v2979, 0.5
      %v3056 = vmul.f32 %v2980, 0.5
      %v3057 = vmul.f32 %v2981, 0.5
      %v3058 = vmul.f32 %v2982, 0.5
      %v3059 = vadd.f32 %v2983, 0.5
      %v3060 = vadd.f32 %v2984, 0.5
      %v3061 = vadd.f32 %v2985, 0.5
      %v3062 = vadd.f32 %v2986, 0.5
      %v3063 = vadd.f32 %v2987, 0.5
      %v3064 = vadd.f32 %v2988, 0.5
      %v3065 = vadd.f32 %v2989, 0.5
      %v3066 = vadd.f32 %v2990, 0.5
      %v3067 = vadd.f32 %v2991, 0.5
      %v3068 = vadd.f32 %v2992, 0.5
      %v3069 = vadd.f32 %v2993, 0.5
      %v3070 = vadd.f32 %v2994, 0.5
      %v3071 = vadd.f32 %v2995, 0.5
      %v3072 = vadd.f32 %v2996, 0.5
      %v3073 = vadd.f32 %v2997, 0.5
      %v3074 = vadd.f32 %v2998, 0.5
      %v3075 = vadd.f32 %v2999, 0.5
      %v3076 = vadd.f32 %v3000, 0.5
      %v3077 = vadd.f32 %v3001, 0.5
      %v3078 = vadd.f32 %v3002, 0.5
      %v3079 = vadd.f32 %v3003, 0.5
      %v3080 = vadd.f32 %v3004, 0.5
      %v3081 = vadd.f32 %v3005, 0.5
      %v3082 = vadd.f32 %v3006, 0.5
      %v3083 = vadd.f32 %v3007, 0.5
      %v3084 = vadd.f32 %v3008, 0.5
      %v3085 = vadd.f32 %v3009, 0.5
      %v3086 = vadd.f32 %v3010, 0.5
      %v3087 = vadd.f32 %v3011, 0.5
      %v3088 = vadd.f32 %v3012, 0.5
      %v3089 = vadd.f32 %v3013, 0.5
      %v3090 = vadd.f32 %v3014, 0.5
      %v3091 = vadd.f32 %v3015, 0.5
      %v3092 = vadd.f32 %v3016, 0.5
      %v3093 = vadd.f32 %v3017, 0.5
      %v3094 = vadd.f32 %v3018, 0.5
      %v3095 = vadd.f32 %v3019, 0.5
      %v3096 = vadd.f32 %v3020, 0.5
      %v3097 = vadd.f32 %v3021, 0.5
      %v3098 = vadd.f32 %v3022, 0.5
      %v3099 = vadd.f32 %v3023, 0.5
      %v3100 = vadd.f32 %v3024, 0.5
      %v3101 = vadd.f32 %v3025, 0.5
      %v3102 = vadd.f32 %v3026, 0.5
      %v3103 = vadd.f32 %v3027, 0.5
      %v3104 = vadd.f32 %v3028, 0.5
      %v3105 = vadd.f32 %v3029, 0.5
      %v3106 = vadd.f32 %v3030, 0.5
      %v3107 = vadd.f32 %v3031, 0.5
      %v3108 = vadd.f32 %v3032, 0.5
      %v3109 = vadd.f32 %v3033, 0.5
      %v3110 = vadd.f32 %v3034, 0.5
      %v3111 = vadd.f32 %v3035, 0.5
      %v3112 = vadd.f32 %v3036, 0.5
      %v3113 = vadd.f32 %v3037, 0.5
      %v3114 = vadd.f32 %v3038, 0.5
      %v3115 = vadd.f32 %v3039, 0.5
      %v3116 = vadd.f32 %v3040, 0.5
      %v3117 = vadd.f32 %v3041, 0.5
      %v3118 = vadd.f32 %v3042, 0.5
      %v3119 = vadd.f32 %v3043, 0.5
      %v3120 = vadd.f32 %v3044, 0.5
      %v3121 = vadd.f32 %v3045, 0.5
      %v3122 = vadd.f32 %v3046, 0.5
      %v3123 = vadd.f32 %v3047, 0.5
      %v3124 = vadd.f32 %v3048, 0.5
      %v3125 = vadd.f32 %v3049, 0.5
      %v3126 = vadd.f32 %v3050, 0.5
      %v3127 = vadd.f32 %v3051, 0.5
      %v3128 = vadd.f32 %v3052, 0.5
      %v3129 = vadd.f32 %v3053, 0.5
      %v3130 = vadd.f32 %v3054, 0.5
      %v3131 = vadd.f32 %v3055, 0.5
      %v3132 = vadd.f32 %v3056, 0.5
      %v3133 = vadd.f32 %v3057, 0.5
      %v3134 = vadd.f32 %v3058, 0.5
      %v3135 = vld [vmem:[%s5] sm:$0xff]
      %v3136 = vld [vmem:[%s5 + $0x8] sm:$0xff]
      %v3137 = vld [vmem:[%s5 + $0x10] sm:$0xff]
      %v3138 = vld [vmem:[%s5 + $0x18] sm:$0xff]
      %v3139 = vld [vmem:[%s5 + $0x20] sm:$0xff]
      %v3140 = vld [vmem:[%s5 + $0x28] sm:$0xff]
      %v3141 = vld [vmem:[%s5 + $0x30] sm:$0xff]
      %v3142 = vld [vmem:[%s5 + $0x38] sm:$0xff]
      %v3143 = vld [vmem:[%s5 + $0x40] sm:$0xff]
      %v3144 = vld [vmem:[%s5 + $0x48] sm:$0xff]
      %v3145 = vld [vmem:[%s5 + $0x50] sm:$0xff]
      %v3146 = vld [vmem:[%s5 + $0x58] sm:$0xff]
      %v3147 = vld [vmem:[%s5 + $0x60] sm:$0xff]
      %v3148 = vld [vmem:[%s5 + $0x68] sm:$0xff]
      %v3149 = vld [vmem:[%s5 + $0x70] sm:$0xff]
      %v3150 = vld [vmem:[%s5 + $0x78] sm:$0xff]
      %v3151 = vld [vmem:[%s5 + $0x80] sm:$0xff]
      %v3152 = vld [vmem:[%s5 + $0x88] sm:$0xff]
      %v3153 = vld [vmem:[%s5 + $0x90] sm:$0xff]
      %v3154 = vld [vmem:[%s5 + $0x98] sm:$0xff]
      %v3155 = vld [vmem:[%s5 + $0xa0] sm:$0xff]
      %v3156 = vld [vmem:[%s5 + $0xa8] sm:$0xff]
      %v3157 = vld [vmem:[%s5 + $0xb0] sm:$0xff]
      %v3158 = vld [vmem:[%s5 + $0xb8] sm:$0xff]
      %v3159 = vld [vmem:[%s5 + $0xc0] sm:$0xff]
      %v3160 = vld [vmem:[%s5 + $0xc8] sm:$0xff]
      %v3161 = vld [vmem:[%s5 + $0xd0] sm:$0xff]
      %v3162 = vld [vmem:[%s5 + $0xd8] sm:$0xff]
      %v3163 = vld [vmem:[%s5 + $0xe0] sm:$0xff]
      %v3164 = vld [vmem:[%s5 + $0xe8] sm:$0xff]
      %v3165 = vld [vmem:[%s5 + $0xf0] sm:$0xff]
      %v3166 = vld [vmem:[%s5 + $0xf8] sm:$0xff]
      %v3167 = vld [vmem:[%s5 + $0x100] sm:$0xff]
      %v3168 = vld [vmem:[%s5 + $0x108] sm:$0xff]
      %v3169 = vld [vmem:[%s5 + $0x110] sm:$0xff]
      %v3170 = vld [vmem:[%s5 + $0x118] sm:$0xff]
      %v3171 = vld [vmem:[%s5 + $0x120] sm:$0xff]
      %v3172 = vld [vmem:[%s5 + $0x128] sm:$0xff]
      %3174 = vset.pattern.permute.xlu0 0
      %3175 = vperm.xlu0 %3174, %v3135
      %v3176 = vpop.permute.xlu0 %3175
      %3179 = vset.pattern.permute.xlu0 0
      %3180 = vperm.xlu0 %3179, %v3136
      %v3181 = vpop.permute.xlu0 %3180
      %3184 = vset.pattern.permute.xlu0 0
      %3185 = vperm.xlu0 %3184, %v3137
      %v3186 = vpop.permute.xlu0 %3185
      %3189 = vset.pattern.permute.xlu0 0
      %3190 = vperm.xlu0 %3189, %v3138
      %v3191 = vpop.permute.xlu0 %3190
      %3194 = vset.pattern.permute.xlu0 0
      %3195 = vperm.xlu0 %3194, %v3139
      %v3196 = vpop.permute.xlu0 %3195
      %3199 = vset.pattern.permute.xlu0 0
      %3200 = vperm.xlu0 %3199, %v3140
      %v3201 = vpop.permute.xlu0 %3200
      %3204 = vset.pattern.permute.xlu0 0
      %3205 = vperm.xlu0 %3204, %v3141
      %v3206 = vpop.permute.xlu0 %3205
      %3209 = vset.pattern.permute.xlu0 0
      %3210 = vperm.xlu0 %3209, %v3142
      %v3211 = vpop.permute.xlu0 %3210
      %3214 = vset.pattern.permute.xlu0 0
      %3215 = vperm.xlu0 %3214, %v3143
      %v3216 = vpop.permute.xlu0 %3215
      %3219 = vset.pattern.permute.xlu0 0
      %3220 = vperm.xlu0 %3219, %v3144
      %v3221 = vpop.permute.xlu0 %3220
      %3224 = vset.pattern.permute.xlu0 0
      %3225 = vperm.xlu0 %3224, %v3145
      %v3226 = vpop.permute.xlu0 %3225
      %3229 = vset.pattern.permute.xlu0 0
      %3230 = vperm.xlu0 %3229, %v3146
      %v3231 = vpop.permute.xlu0 %3230
      %3234 = vset.pattern.permute.xlu0 0
      %3235 = vperm.xlu0 %3234, %v3147
      %v3236 = vpop.permute.xlu0 %3235
      %3239 = vset.pattern.permute.xlu0 0
      %3240 = vperm.xlu0 %3239, %v3148
      %v3241 = vpop.permute.xlu0 %3240
      %3244 = vset.pattern.permute.xlu0 0
      %3245 = vperm.xlu0 %3244, %v3149
      %v3246 = vpop.permute.xlu0 %3245
      %3249 = vset.pattern.permute.xlu0 0
      %3250 = vperm.xlu0 %3249, %v3150
      %v3251 = vpop.permute.xlu0 %3250
      %3254 = vset.pattern.permute.xlu0 0
      %3255 = vperm.xlu0 %3254, %v3151
      %v3256 = vpop.permute.xlu0 %3255
      %3259 = vset.pattern.permute.xlu0 0
      %3260 = vperm.xlu0 %3259, %v3152
      %v3261 = vpop.permute.xlu0 %3260
      %3264 = vset.pattern.permute.xlu0 0
      %3265 = vperm.xlu0 %3264, %v3153
      %v3266 = vpop.permute.xlu0 %3265
      %3269 = vset.pattern.permute.xlu0 0
      %3270 = vperm.xlu0 %3269, %v3154
      %v3271 = vpop.permute.xlu0 %3270
      %3274 = vset.pattern.permute.xlu0 0
      %3275 = vperm.xlu0 %3274, %v3155
      %v3276 = vpop.permute.xlu0 %3275
      %3279 = vset.pattern.permute.xlu0 0
      %3280 = vperm.xlu0 %3279, %v3156
      %v3281 = vpop.permute.xlu0 %3280
      %3284 = vset.pattern.permute.xlu0 0
      %3285 = vperm.xlu0 %3284, %v3157
      %v3286 = vpop.permute.xlu0 %3285
      %3289 = vset.pattern.permute.xlu0 0
      %3290 = vperm.xlu0 %3289, %v3158
      %v3291 = vpop.permute.xlu0 %3290
      %3294 = vset.pattern.permute.xlu0 0
      %3295 = vperm.xlu0 %3294, %v3159
      %v3296 = vpop.permute.xlu0 %3295
      %3299 = vset.pattern.permute.xlu0 0
      %3300 = vperm.xlu0 %3299, %v3160
      %v3301 = vpop.permute.xlu0 %3300
      %3304 = vset.pattern.permute.xlu0 0
      %3305 = vperm.xlu0 %3304, %v3161
      %v3306 = vpop.permute.xlu0 %3305
      %3309 = vset.pattern.permute.xlu0 0
      %3310 = vperm.xlu0 %3309, %v3162
      %v3311 = vpop.permute.xlu0 %3310
      %3314 = vset.pattern.permute.xlu0 0
      %3315 = vperm.xlu0 %3314, %v3163
      %v3316 = vpop.permute.xlu0 %3315
      %3319 = vset.pattern.permute.xlu0 0
      %3320 = vperm.xlu0 %3319, %v3164
      %v3321 = vpop.permute.xlu0 %3320
      %3324 = vset.pattern.permute.xlu0 0
      %3325 = vperm.xlu0 %3324, %v3165
      %v3326 = vpop.permute.xlu0 %3325
      %3329 = vset.pattern.permute.xlu0 0
      %3330 = vperm.xlu0 %3329, %v3166
      %v3331 = vpop.permute.xlu0 %3330
      %3334 = vset.pattern.permute.xlu0 0
      %3335 = vperm.xlu0 %3334, %v3167
      %v3336 = vpop.permute.xlu0 %3335
      %3339 = vset.pattern.permute.xlu0 0
      %3340 = vperm.xlu0 %3339, %v3168
      %v3341 = vpop.permute.xlu0 %3340
      %3344 = vset.pattern.permute.xlu0 0
      %3345 = vperm.xlu0 %3344, %v3169
      %v3346 = vpop.permute.xlu0 %3345
      %3349 = vset.pattern.permute.xlu0 0
      %3350 = vperm.xlu0 %3349, %v3170
      %v3351 = vpop.permute.xlu0 %3350
      %3354 = vset.pattern.permute.xlu0 0
      %3355 = vperm.xlu0 %3354, %v3171
      %v3356 = vpop.permute.xlu0 %3355
      %3359 = vset.pattern.permute.xlu0 0
      %3360 = vperm.xlu0 %3359, %v3172
      %v3361 = vpop.permute.xlu0 %3360
      %v3363 = vmul.f32 %v3059, %v3176
      %v3364 = vmul.f32 %v3060, %v3176
      %v3365 = vmul.f32 %v3061, %v3181
      %v3366 = vmul.f32 %v3062, %v3181
      %v3367 = vmul.f32 %v3063, %v3186
      %v3368 = vmul.f32 %v3064, %v3186
      %v3369 = vmul.f32 %v3065, %v3191
      %v3370 = vmul.f32 %v3066, %v3191
      %v3371 = vmul.f32 %v3067, %v3196
      %v3372 = vmul.f32 %v3068, %v3196
      %v3373 = vmul.f32 %v3069, %v3201
      %v3374 = vmul.f32 %v3070, %v3201
      %v3375 = vmul.f32 %v3071, %v3206
      %v3376 = vmul.f32 %v3072, %v3206
      %v3377 = vmul.f32 %v3073, %v3211
      %v3378 = vmul.f32 %v3074, %v3211
      %v3379 = vmul.f32 %v3075, %v3216
      %v3380 = vmul.f32 %v3076, %v3216
      %v3381 = vmul.f32 %v3077, %v3221
      %v3382 = vmul.f32 %v3078, %v3221
      %v3383 = vmul.f32 %v3079, %v3226
      %v3384 = vmul.f32 %v3080, %v3226
      %v3385 = vmul.f32 %v3081, %v3231
      %v3386 = vmul.f32 %v3082, %v3231
      %v3387 = vmul.f32 %v3083, %v3236
      %v3388 = vmul.f32 %v3084, %v3236
      %v3389 = vmul.f32 %v3085, %v3241
      %v3390 = vmul.f32 %v3086, %v3241
      %v3391 = vmul.f32 %v3087, %v3246
      %v3392 = vmul.f32 %v3088, %v3246
      %v3393 = vmul.f32 %v3089, %v3251
      %v3394 = vmul.f32 %v3090, %v3251
      %v3395 = vmul.f32 %v3091, %v3256
      %v3396 = vmul.f32 %v3092, %v3256
      %v3397 = vmul.f32 %v3093, %v3261
      %v3398 = vmul.f32 %v3094, %v3261
      %v3399 = vmul.f32 %v3095, %v3266
      %v3400 = vmul.f32 %v3096, %v3266
      %v3401 = vmul.f32 %v3097, %v3271
      %v3402 = vmul.f32 %v3098, %v3271
      %v3403 = vmul.f32 %v3099, %v3276
      %v3404 = vmul.f32 %v3100, %v3276
      %v3405 = vmul.f32 %v3101, %v3281
      %v3406 = vmul.f32 %v3102, %v3281
      %v3407 = vmul.f32 %v3103, %v3286
      %v3408 = vmul.f32 %v3104, %v3286
      %v3409 = vmul.f32 %v3105, %v3291
      %v3410 = vmul.f32 %v3106, %v3291
      %v3411 = vmul.f32 %v3107, %v3296
      %v3412 = vmul.f32 %v3108, %v3296
      %v3413 = vmul.f32 %v3109, %v3301
      %v3414 = vmul.f32 %v3110, %v3301
      %v3415 = vmul.f32 %v3111, %v3306
      %v3416 = vmul.f32 %v3112, %v3306
      %v3417 = vmul.f32 %v3113, %v3311
      %v3418 = vmul.f32 %v3114, %v3311
      %v3419 = vmul.f32 %v3115, %v3316
      %v3420 = vmul.f32 %v3116, %v3316
      %v3421 = vmul.f32 %v3117, %v3321
      %v3422 = vmul.f32 %v3118, %v3321
      %v3423 = vmul.f32 %v3119, %v3326
      %v3424 = vmul.f32 %v3120, %v3326
      %v3425 = vmul.f32 %v3121, %v3331
      %v3426 = vmul.f32 %v3122, %v3331
      %v3427 = vmul.f32 %v3123, %v3336
      %v3428 = vmul.f32 %v3124, %v3336
      %v3429 = vmul.f32 %v3125, %v3341
      %v3430 = vmul.f32 %v3126, %v3341
      %v3431 = vmul.f32 %v3127, %v3346
      %v3432 = vmul.f32 %v3128, %v3346
      %v3433 = vmul.f32 %v3129, %v3351
      %v3434 = vmul.f32 %v3130, %v3351
      %v3435 = vmul.f32 %v3131, %v3356
      %v3436 = vmul.f32 %v3132, %v3356
      %v3437 = vmul.f32 %v3133, %v3361
      %v3438 = vmul.f32 %v3134, %v3361
      %v3439 = vadd.f32 %v3363, %v3365
      %v3440 = vadd.f32 %v3439, %v3367
      %v3441 = vadd.f32 %v3440, %v3369
      %v3442 = vadd.f32 %v3441, %v3371
      %v3443 = vadd.f32 %v3442, %v3373
      %v3444 = vadd.f32 %v3443, %v3375
      %v3445 = vadd.f32 %v3444, %v3377
      %v3446 = vadd.f32 %v3445, %v3379
      %v3447 = vadd.f32 %v3446, %v3381
      %v3448 = vadd.f32 %v3447, %v3383
      %v3449 = vadd.f32 %v3448, %v3385
      %v3450 = vadd.f32 %v3449, %v3387
      %v3451 = vadd.f32 %v3450, %v3389
      %v3452 = vadd.f32 %v3451, %v3391
      %v3453 = vadd.f32 %v3452, %v3393
      %v3454 = vadd.f32 %v3453, %v3395
      %v3455 = vadd.f32 %v3454, %v3397
      %v3456 = vadd.f32 %v3455, %v3399
      %v3457 = vadd.f32 %v3456, %v3401
      %v3458 = vadd.f32 %v3457, %v3403
      %v3459 = vadd.f32 %v3458, %v3405
      %v3460 = vadd.f32 %v3459, %v3407
      %v3461 = vadd.f32 %v3460, %v3409
      %v3462 = vadd.f32 %v3461, %v3411
      %v3463 = vadd.f32 %v3462, %v3413
      %v3464 = vadd.f32 %v3463, %v3415
      %v3465 = vadd.f32 %v3464, %v3417
      %v3466 = vadd.f32 %v3465, %v3419
      %v3467 = vadd.f32 %v3466, %v3421
      %v3468 = vadd.f32 %v3467, %v3423
      %v3469 = vadd.f32 %v3468, %v3425
      %v3470 = vadd.f32 %v3469, %v3427
      %v3471 = vadd.f32 %v3470, %v3429
      %v3472 = vadd.f32 %v3471, %v3431
      %v3473 = vadd.f32 %v3472, %v3433
      %v3474 = vadd.f32 %v3473, %v3435
      %v3475 = vadd.f32 %v3474, %v3437
      %v3476 = vrot.slane %v3475, 4
      %v3477 = vadd.f32 %v3475, %v3476
      %v3478 = vrot.slane %v3477, 2
      %v3479 = vadd.f32 %v3477, %v3478
      %v3480 = vrot.slane %v3479, 1
      %v3481 = vadd.f32 %v3479, %v3480
      %v3482 = vadd.f32 %v3364, %v3366
      %v3483 = vadd.f32 %v3482, %v3368
      %v3484 = vadd.f32 %v3483, %v3370
      %v3485 = vadd.f32 %v3484, %v3372
      %v3486 = vadd.f32 %v3485, %v3374
      %v3487 = vadd.f32 %v3486, %v3376
      %v3488 = vadd.f32 %v3487, %v3378
      %v3489 = vadd.f32 %v3488, %v3380
      %v3490 = vadd.f32 %v3489, %v3382
      %v3491 = vadd.f32 %v3490, %v3384
      %v3492 = vadd.f32 %v3491, %v3386
      %v3493 = vadd.f32 %v3492, %v3388
      %v3494 = vadd.f32 %v3493, %v3390
      %v3495 = vadd.f32 %v3494, %v3392
      %v3496 = vadd.f32 %v3495, %v3394
      %v3497 = vadd.f32 %v3496, %v3396
      %v3498 = vadd.f32 %v3497, %v3398
      %v3499 = vadd.f32 %v3498, %v3400
      %v3500 = vadd.f32 %v3499, %v3402
      %v3501 = vadd.f32 %v3500, %v3404
      %v3502 = vadd.f32 %v3501, %v3406
      %v3503 = vadd.f32 %v3502, %v3408
      %v3504 = vadd.f32 %v3503, %v3410
      %v3505 = vadd.f32 %v3504, %v3412
      %v3506 = vadd.f32 %v3505, %v3414
      %v3507 = vadd.f32 %v3506, %v3416
      %v3508 = vadd.f32 %v3507, %v3418
      %v3509 = vadd.f32 %v3508, %v3420
      %v3510 = vadd.f32 %v3509, %v3422
      %v3511 = vadd.f32 %v3510, %v3424
      %v3512 = vadd.f32 %v3511, %v3426
      %v3513 = vadd.f32 %v3512, %v3428
      %v3514 = vadd.f32 %v3513, %v3430
      %v3515 = vadd.f32 %v3514, %v3432
      %v3516 = vadd.f32 %v3515, %v3434
      %v3517 = vadd.f32 %v3516, %v3436
      %v3518 = vadd.f32 %v3517, %v3438
      %v3519 = vrot.slane %v3518, 4
      %v3520 = vadd.f32 %v3518, %v3519
      %v3521 = vrot.slane %v3520, 2
      %v3522 = vadd.f32 %v3520, %v3521
      %v3523 = vrot.slane %v3522, 1
      %v3524 = vadd.f32 %v3522, %v3523
      %s3525 = sld [smem:[#allocation2]]
      %v3526 = vstv %s3525
      %v3527 = vadd.f32 %v3481, %v3526
      %v3528 = vadd.f32 %v3524, %v3526
      %v3529 = vmul.f32 %v3527, 0.5
      %v3530 = vmul.f32 %v3528, 0.5
      %v3531 = vtanh.pop %v3529
      %v3532 = vtanh.pop %v3530
      %v3533 = vmul.f32 %v3531, 0.5
      %v3534 = vmul.f32 %v3532, 0.5
      %v3535 = vadd.f32 %v3533, 0.5
      %v3536 = vadd.f32 %v3534, 0.5
      %v3539 = vcombine.low %v3535, %v3536
      %v3541 = vunpack.c.l.s4 1966171168
      %v3542 = vunpack.c.0.s8 %v3541
      %v3543 = vlaneseq
      %v3544 = vshrl.u32 %v3543, 7
      %v3545 = vsub.s32 %v3542, %v3544
      %v3546 = vrot.slane %v3539, %v3545
      %v3548 = vunpack.c.l.s4 1966171168
      %v3549 = vunpack.c.0.s8 %v3548
      %v3550 = vlaneseq
      %v3551 = vshrl.u32 %v3550, 7
      %v3552 = vsub.s32 %v3549, %v3551
      %v3553 = vrot.slane %v3546, %v3552
      %v3555 = vlaneseq
      %vm3556 = vcmp.ge.s32.totalorder %v3555, 0
      %vm3557 = vcmp.lt.s32.totalorder %v3555, 256
      %vm3558 = vmand %vm3556, %vm3557
      %3559 = vst.msk [vmem:[%s279] sm:$0x3] %vm3558, %v3553
      %s3560 = smul.u32 2, %s19
      %p3561 = scmp.lt.s32.totalorder %s3560, 3
      %s3562 = scalar_select %p3561, %s3560, 3
      %s3563 = scalar_lea.vmem %s7, %s3562
      // Predicated region
      $region49: #{mlp_forward.1} parent=47 // pred_check
        %p3564 = pneg %p189
      $region50: #{mlp_forward.1} parent=47 // pred_check_branch
        %3566 = sbr.rel (%p3564) target = $region52
      $region51: #{mlp_forward.1} parent=47 // pred_region
        %s3567 = smul.u32 2, %s19
      $region52: #{mlp_forward.1} parent=47 // pred_fallthru
        _
    $region48: #{mlp_forward.1} parent=5 // pred_fallthru
      _
    %p3568 = scmp.le.s32.totalorder 2, %s14
    // Predicated region
    $region53: #{mlp_forward.1} parent=5 // pred_check
      %p3569 = pneg %p3568
    $region54: #{mlp_forward.1} parent=5 // pred_check_branch
      %3571 = sbr.rel (%p3569) target = $region56
    $region55: #{mlp_forward.1} parent=5 // pred_region
      %s3572 = ssub.s32 %s14, 2
      // Predicated region
      $region57: #{mlp_forward.1} parent=55 // pred_check
        %p3573 = pneg %p195
      $region58: #{mlp_forward.1} parent=55 // pred_check_branch
        %3575 = sbr.rel (%p3573) target = $region60
      $region59: #{mlp_forward.1} parent=55 // pred_region
        %s3576 = smul.u32 2, %s20
        %p3577 = scmp.lt.s32.totalorder %s3576, 3
        %s3578 = scalar_select %p3577, %s3576, 3
        %s3579 = scalar_lea.vmem %s7, %s3578
      $region60: #{mlp_forward.1} parent=55 // pred_fallthru
        _
    $region56: #{mlp_forward.1} parent=5 // pred_fallthru
      _
  $region6: #{mlp_forward.1} parent=0 // loop_footer
    %s18 = sadd.s32 1, %s14
  $region7: #{mlp_forward.1} parent=0 // loop_footer_branch
    %13 = sbr.rel target = $region3
  $region8: #{mlp_forward.1} parent=0 // loop_exit
    _

</llo_original>
